<compile_context>
chip_gen: v5e
topology: v5e:2x2
jax: 0.10.0
libtpu: 0.0.40
codegen_flags: <defaults>
</compile_context>

<pallas_src>
import functools
import numpy as np
import jax
import jax.numpy as jnp
from jax.experimental import pallas as pl
from jax.experimental.pallas import tpu as pltpu


def _round_up(x, m):
    return ((x + m - 1) // m) * m


def _choose_row_tiling(n):
    """Row-tile size and padded row count (tile always divides n_pad)."""
    if n <= 256:
        tm = _round_up(n, 8)
        return tm, tm
    tm = 256
    return tm, _round_up(n, tm)


# ---------------------------------------------------------------------------
# Fused ResNet-18 feature extractor (single pallas_call)
# ---------------------------------------------------------------------------

def _fused_fe_kernel(*refs, plan, n_params):
    """refs = (x_ref, param_ref_0 ... param_ref_{n_params-1}, out_ref).

    `plan` is a static tuple describing the layer sequence with indices into
    the param refs; the Python loop unrolls at trace time into 21 chained
    matmuls, all resident in VMEM/vregs.
    """
    x_ref = refs[0]
    prm = refs[1:1 + n_params]
    out_ref = refs[1 + n_params]

    def lin(h, wi, bi, relu):
        y = jnp.dot(h, prm[wi][...], preferred_element_type=jnp.float32)
        y = y + prm[bi][...]
        return jnp.maximum(y, 0.0) if relu else y

    h = x_ref[...]
    for op in plan:
        kind = op[0]
        if kind == 'lin':
            h = lin(h, op[1], op[2], op[3])
        elif kind == 'block':                       # identity shortcut
            y = lin(h, op[1], op[2], True)
            y = lin(y, op[3], op[4], False)
            h = jnp.maximum(y + h, 0.0)
        else:                                       # 'block_down'
            y = lin(h, op[1], op[2], True)
            y = lin(y, op[3], op[4], False)
            sc = lin(h, op[5], op[6], False)
            h = jnp.maximum(y + sc, 0.0)
    out_ref[...] = h


def fused_feature_extractor(x_pad, flat_params, plan, embed_pad, tm):
    n_pad, f_pad = x_pad.shape
    assert n_pad % tm == 0
    grid = (n_pad // tm,)

    in_specs = [pl.BlockSpec((tm, f_pad), lambda i: (i, 0))]
    for p in flat_params:
        # Full-block, constant index: weights stay resident across row tiles.
        in_specs.append(pl.BlockSpec(p.shape, lambda i: (0, 0)))

    kernel = functools.partial(_fused_fe_kernel, plan=plan,
                               n_params=len(flat_params))
    return pl.pallas_call(
        kernel,
        out_shape=jax.ShapeDtypeStruct((n_pad, embed_pad), jnp.float32),
        grid_spec=pltpu.PrefetchScalarGridSpec(
            num_scalar_prefetch=0,
            grid=grid,
            in_specs=in_specs,
            out_specs=pl.BlockSpec((tm, embed_pad), lambda i: (i, 0)),
        ),
        compiler_params=pltpu.CompilerParams(
            dimension_semantics=("parallel",),          # v7x megacore rows
            vmem_limit_bytes=48 * 1024 * 1024),         # weights stay resident
    )(x_pad, *flat_params)


# ---------------------------------------------------------------------------
# Message passing kernel (per-level dense adj matmul, resident accumulator)
# ---------------------------------------------------------------------------

def _mp_kernel(src0_ref, hinit_ref, adj_ref, dstm_ref, h_ref):
    # h_ref is the VMEM-resident accumulator across the level grid axis.
    @pl.when(pl.program_id(0) == 0)
    def _():
        # h = 0 ; h[src_node_mask] = h_init[src_node_mask]
        h_ref[...] = hinit_ref[...] * src0_ref[...]          # (N,D)*(N,1)

    # msg[src_mask] = h[src_mask]; the src mask is redundant here because the
    # adjacency columns are nonzero only at src nodes, so adj @ msg == adj @ h.
    # adj stored bf16 in HBM (0/1 exact), upcast in VMEM, f32 accumulate.
    agg = jnp.dot(adj_ref[...].astype(jnp.float32), h_ref[...],
                  preferred_element_type=jnp.float32)
    # h[dst_mask] = h_init[dst_mask] + agg[dst_mask]
    h_ref[...] = jnp.where(dstm_ref[...] > 0.5, hinit_ref[...] + agg, h_ref[...])


def message_passing(h_init_pad, src0, adjs, dsts):
    num_levels, n_pad, _ = adjs.shape
    d_pad = h_init_pad.shape[1]
    return pl.pallas_call(
        _mp_kernel,
        out_shape=jax.ShapeDtypeStruct((n_pad, d_pad), jnp.float32),
        grid_spec=pltpu.PrefetchScalarGridSpec(
            num_scalar_prefetch=0,
            grid=(num_levels,),
            in_specs=[
                pl.BlockSpec((n_pad, 1), lambda l: (0, 0)),               # src0
                pl.BlockSpec((n_pad, d_pad), lambda l: (0, 0)),           # h_init
                pl.BlockSpec((None, n_pad, n_pad), lambda l: (l, 0, 0)),  # adj
                pl.BlockSpec((None, n_pad, 1), lambda l: (l, 0, 0)),      # dst
            ],
            out_specs=pl.BlockSpec((n_pad, d_pad), lambda l: (0, 0)),
        ),
        compiler_params=pltpu.CompilerParams(
            dimension_semantics=("arbitrary",),
            vmem_limit_bytes=32 * 1024 * 1024),
    )(src0, h_init_pad, adjs, dsts)
    # TODO(synk): for very large graphs on v7x, row-tile the adj matmul and
    # keep h in a full-size VMEM scratch (needs a per-level msg snapshot).


# ---------------------------------------------------------------------------
# Parameter padding / layer plan for the fused kernel
# ---------------------------------------------------------------------------

def _pad_wb(w, b):
    ci, co = w.shape
    ci_p, co_p = _round_up(ci, 128), _round_up(co, 128)
    w_p = jnp.zeros((ci_p, co_p), jnp.float32).at[:ci, :co].set(w)
    b_p = jnp.zeros((1, co_p), jnp.float32).at[:, :co].set(b)
    return w_p, b_p


def pad_fe_params(params):
    """Flatten ResNet params into lane-padded (128-multiple) arrays plus a
    static layer plan (indices into the flat list). Zero-padding is exact."""
    flat, plan = [], []

    def add(wb):
        w_p, b_p = _pad_wb(*wb)
        wi = len(flat); flat.append(w_p)
        bi = len(flat); flat.append(b_p)
        return wi, bi

    wi, bi = add(params['stem'])
    plan.append(('lin', wi, bi, True))
    for blk in params['blocks']:
        w1i, b1i = add(blk['l1'])
        w2i, b2i = add(blk['l2'])
        if 'down' in blk:
            wdi, bdi = add(blk['down'])
            plan.append(('block_down', w1i, b1i, w2i, b2i, wdi, bdi))
        else:
            plan.append(('block', w1i, b1i, w2i, b2i))
    wfi, bfi = add(params['fc'])
    plan.append(('lin', wfi, bfi, False))
    return flat, tuple(plan)


# ---------------------------------------------------------------------------
# Top-level forward
# ---------------------------------------------------------------------------

def node_encoder_forward(x, edge_index, edge_masks, params, embed_dim,
                         reverse_flow=True):
    n, f = x.shape
    tm, n_pad = _choose_row_tiling(n)
    f_pad = _round_up(f, 128)
    e_pad = _round_up(embed_dim, 128)

    flat_params, plan = pad_fe_params(params)
    x_pad = jnp.zeros((n_pad, f_pad), jnp.float32).at[:n, :f].set(x)

    h_init_pad = fused_feature_extractor(x_pad, flat_params, plan, e_pad, tm)

    if edge_masks.shape[0] == 0:                     # _forward_no_mp path
        return h_init_pad[:n, :embed_dim]

    src0, adjs, dsts = build_mp_inputs(edge_index, edge_masks,
                                       n, n_pad, reverse_flow)
    h_pad = message_passing(h_init_pad, src0, adjs, dsts)
    return h_pad[:n, :embed_dim]


# ---------------------------------------------------------------------------
# Host-side graph preprocessing (small (N,1) masks, bf16 adjacency)
# ---------------------------------------------------------------------------

def build_mp_inputs(edge_index, edge_masks, num_nodes, n_pad, reverse_flow=True):
    j, i = (1, 0) if reverse_flow else (0, 1)

    src0 = np.zeros((n_pad, 1), np.float32)
    src0[:num_nodes, 0] = 1.0
    src0[edge_index[i], 0] = 0.0                     # ~index_to_mask(edge_index[i])

    order = edge_masks[::-1] if reverse_flow else edge_masks
    adjs, dsts = [], []
    for mask in order:
        ei = edge_index[:, mask.astype(bool)]
        A = np.zeros((n_pad, n_pad), np.float32)
        A[ei[0], ei[1]] = 1.0                        # make_adj: row=ei[0], col=ei[1]
        if not reverse_flow:
            A = A.T                                  # adj.t() branch
        dst = np.zeros((n_pad, 1), np.float32); dst[ei[i], 0] = 1.0
        adjs.append(A); dsts.append(dst)

    return (jnp.asarray(src0),
            jnp.asarray(np.stack(adjs)).astype(jnp.bfloat16),   # 0/1 exact
            jnp.asarray(np.stack(dsts)))


# ---------------------------------------------------------------------------
# Synthetic parameter init (BN folded, conv centre taps; exact for 1x1 input)
# TODO(synk): pretrained ImageNet resnet18 weights are not reproducible
# in-script; synthetic BN-folded params keep the exact layer algebra instead.
# ---------------------------------------------------------------------------

def init_params(key, num_node_features, embed_dim):
    eps = 1e-5
    keys = iter(jax.random.split(key, 256))

    def conv(out_c, in_c, k):
        std = 1.0 / np.sqrt(in_c)
        return std * jax.random.normal(next(keys), (out_c, in_c, k, k), jnp.float32)

    def bn(c):
        gamma = 1.0 + 0.1 * jax.random.normal(next(keys), (c,), jnp.float32)
        beta = 0.1 * jax.random.normal(next(keys), (c,), jnp.float32)
        mean = 0.1 * jax.random.normal(next(keys), (c,), jnp.float32)
        var = 0.5 + jax.random.uniform(next(keys), (c,), jnp.float32)
        return gamma, beta, mean, var

    def fold(w_center, bn_p):
        gamma, beta, mean, var = bn_p
        scale = gamma / jnp.sqrt(var + eps)
        w = scale[:, None] * w_center                # (out, in)
        b = beta - scale * mean
        return w.T, b[None, :]                       # (in, out), (1, out)

    params = {}
    # conv1: 7x7 stride 2 pad 3 on a 1x1 input -> centre tap [3, 3] only
    params['stem'] = fold(conv(64, num_node_features, 7)[:, :, 3, 3], bn(64))

    blocks = []
    in_c = 64
    for stage, out_c in enumerate([64, 128, 256, 512]):
        for b_idx in range(2):
            c_in = in_c if b_idx == 0 else out_c
            blk = {
                'l1': fold(conv(out_c, c_in, 3)[:, :, 1, 1], bn(out_c)),
                'l2': fold(conv(out_c, out_c, 3)[:, :, 1, 1], bn(out_c)),
            }
            if b_idx == 0 and stage > 0:             # downsample branch
                blk['down'] = fold(conv(out_c, c_in, 1)[:, :, 0, 0], bn(out_c))
            blocks.append(blk)
        in_c = out_c
    params['blocks'] = blocks

    fc_w = (1.0 / np.sqrt(512)) * jax.random.normal(
        next(keys), (embed_dim, 512), jnp.float32)
    fc_b = 0.1 * jax.random.normal(next(keys), (embed_dim,), jnp.float32)
    params['fc'] = (fc_w.T, fc_b[None, :])
    return params


# ---------------------------------------------------------------------------
# Pure-JAX / numpy reference (unpadded, full-fidelity incl. src masks)
# ---------------------------------------------------------------------------

def _ref_feature_extractor(x, params):
    def lin(h, wb, relu):
        w, b = wb
        y = h @ w + b
        return jnp.maximum(y, 0.0) if relu else y
    h = lin(x, params['stem'], True)
    for blk in params['blocks']:
        idn = lin(h, blk['down'], False) if 'down' in blk else h
        y = lin(h, blk['l1'], True)
        y = lin(y, blk['l2'], False)
        h = jnp.maximum(y + idn, 0.0)
    return lin(h, params['fc'], False)


def _ref_node_encoder(x, edge_index, edge_masks, params, reverse_flow=True):
    h_init = np.asarray(_ref_feature_extractor(x, params))
    if edge_masks.shape[0] == 0:
        return h_init
    n = x.shape[0]
    j, i = (1, 0) if reverse_flow else (0, 1)

    h = np.zeros_like(h_init)
    src_node_mask = np.ones(n, bool)
    src_node_mask[edge_index[i]] = False
    h[src_node_mask] = h_init[src_node_mask]

    order = edge_masks[::-1] if reverse_flow else edge_masks
    for mask in order:
        ei = edge_index[:, mask.astype(bool)]
        A = np.zeros((n, n), np.float32)
        A[ei[0], ei[1]] = 1.0
        if not reverse_flow:
            A = A.T
        src = np.zeros(n, bool); src[ei[j]] = True
        dst = np.zeros(n, bool); dst[ei[i]] = True
        msg = np.where(src[:, None], h, 0.0)
        agg = A @ msg
        h[dst] = h_init[dst] + agg[dst]
    return h


# ---------------------------------------------------------------------------

if __name__ == "__main__":
    num_node_features, embed_dim, num_nodes = 4, 32, 8

    key = jax.random.PRNGKey(0)
    k_param, k_x = jax.random.split(key)
    params = init_params(k_param, num_node_features, embed_dim)
    x = jax.random.normal(k_x, (num_nodes, num_node_features), jnp.float32)

    # Small DAG: 0->2, 1->2, 2->3, 3->4, 5->6, 6->7
    edge_index = np.array([[0, 1, 2, 3, 5, 6],
                           [2, 2, 3, 4, 6, 7]], dtype=np.int32)
    # One boolean edge mask per message-passing level (depth in the DAG).
    edge_masks = np.array([
        [1, 1, 0, 0, 1, 0],   # depth-0 edges
        [0, 0, 1, 0, 0, 1],   # depth-1 edges
        [0, 0, 0, 1, 0, 0],   # depth-2 edges
    ], dtype=bool)

    h = node_encoder_forward(x, edge_index, edge_masks, params, embed_dim,
                             reverse_flow=True)
    h = jax.block_until_ready(h)

    # Independent unpadded reference of the full forward pass.
    h_ref = _ref_node_encoder(x, edge_index, edge_masks, params,
                              reverse_flow=True)
    err = float(np.max(np.abs(np.asarray(h) - h_ref)))
    assert np.allclose(np.asarray(h), h_ref, rtol=1e-2, atol=1e-2), err

    print("KERNEL_OK")
</pallas_src>

<mosaic_0001>
module attributes {stable_mosaic.version = 11 : i64} {
  func.func @_fused_fe_kernel(%arg0: i32, %arg1: memref<8x128xf32, #tpu.memory_space<vmem>>, %arg2: memref<128x128xf32, #tpu.memory_space<vmem>>, %arg3: memref<1x128xf32, #tpu.memory_space<vmem>>, %arg4: memref<128x128xf32, #tpu.memory_space<vmem>>, %arg5: memref<1x128xf32, #tpu.memory_space<vmem>>, %arg6: memref<128x128xf32, #tpu.memory_space<vmem>>, %arg7: memref<1x128xf32, #tpu.memory_space<vmem>>, %arg8: memref<128x128xf32, #tpu.memory_space<vmem>>, %arg9: memref<1x128xf32, #tpu.memory_space<vmem>>, %arg10: memref<128x128xf32, #tpu.memory_space<vmem>>, %arg11: memref<1x128xf32, #tpu.memory_space<vmem>>, %arg12: memref<128x128xf32, #tpu.memory_space<vmem>>, %arg13: memref<1x128xf32, #tpu.memory_space<vmem>>, %arg14: memref<128x128xf32, #tpu.memory_space<vmem>>, %arg15: memref<1x128xf32, #tpu.memory_space<vmem>>, %arg16: memref<128x128xf32, #tpu.memory_space<vmem>>, %arg17: memref<1x128xf32, #tpu.memory_space<vmem>>, %arg18: memref<128x128xf32, #tpu.memory_space<vmem>>, %arg19: memref<1x128xf32, #tpu.memory_space<vmem>>, %arg20: memref<128x128xf32, #tpu.memory_space<vmem>>, %arg21: memref<1x128xf32, #tpu.memory_space<vmem>>, %arg22: memref<128x256xf32, #tpu.memory_space<vmem>>, %arg23: memref<1x256xf32, #tpu.memory_space<vmem>>, %arg24: memref<256x256xf32, #tpu.memory_space<vmem>>, %arg25: memref<1x256xf32, #tpu.memory_space<vmem>>, %arg26: memref<128x256xf32, #tpu.memory_space<vmem>>, %arg27: memref<1x256xf32, #tpu.memory_space<vmem>>, %arg28: memref<256x256xf32, #tpu.memory_space<vmem>>, %arg29: memref<1x256xf32, #tpu.memory_space<vmem>>, %arg30: memref<256x256xf32, #tpu.memory_space<vmem>>, %arg31: memref<1x256xf32, #tpu.memory_space<vmem>>, %arg32: memref<256x512xf32, #tpu.memory_space<vmem>>, %arg33: memref<1x512xf32, #tpu.memory_space<vmem>>, %arg34: memref<512x512xf32, #tpu.memory_space<vmem>>, %arg35: memref<1x512xf32, #tpu.memory_space<vmem>>, %arg36: memref<256x512xf32, #tpu.memory_space<vmem>>, %arg37: memref<1x512xf32, #tpu.memory_space<vmem>>, %arg38: memref<512x512xf32, #tpu.memory_space<vmem>>, %arg39: memref<1x512xf32, #tpu.memory_space<vmem>>, %arg40: memref<512x512xf32, #tpu.memory_space<vmem>>, %arg41: memref<1x512xf32, #tpu.memory_space<vmem>>, %arg42: memref<512x128xf32, #tpu.memory_space<vmem>>, %arg43: memref<1x128xf32, #tpu.memory_space<vmem>>, %arg44: memref<8x128xf32, #tpu.memory_space<vmem>>) attributes {dimension_semantics = [#tpu.dimension_semantics<parallel>], iteration_bounds = array<i64: 1>, scalar_prefetch = 0 : i64, scratch_operands = 0 : i64, tpu.core_type = #tpu.core_type<tc>, window_params = [{transform_indices = @transform_0, window_bounds = array<i64: 8, 128>}, {pipeline_mode = #tpu.pipeline_mode<synchronous>, transform_indices = @transform_1, window_bounds = array<i64: 128, 128>}, {pipeline_mode = #tpu.pipeline_mode<synchronous>, transform_indices = @transform_2, window_bounds = array<i64: 1, 128>}, {pipeline_mode = #tpu.pipeline_mode<synchronous>, transform_indices = @transform_3, window_bounds = array<i64: 128, 128>}, {pipeline_mode = #tpu.pipeline_mode<synchronous>, transform_indices = @transform_4, window_bounds = array<i64: 1, 128>}, {pipeline_mode = #tpu.pipeline_mode<synchronous>, transform_indices = @transform_5, window_bounds = array<i64: 128, 128>}, {pipeline_mode = #tpu.pipeline_mode<synchronous>, transform_indices = @transform_6, window_bounds = array<i64: 1, 128>}, {pipeline_mode = #tpu.pipeline_mode<synchronous>, transform_indices = @transform_7, window_bounds = array<i64: 128, 128>}, {pipeline_mode = #tpu.pipeline_mode<synchronous>, transform_indices = @transform_8, window_bounds = array<i64: 1, 128>}, {pipeline_mode = #tpu.pipeline_mode<synchronous>, transform_indices = @transform_9, window_bounds = array<i64: 128, 128>}, {pipeline_mode = #tpu.pipeline_mode<synchronous>, transform_indices = @transform_10, window_bounds = array<i64: 1, 128>}, {pipeline_mode = #tpu.pipeline_mode<synchronous>, transform_indices = @transform_11, window_bounds = array<i64: 128, 128>}, {pipeline_mode = #tpu.pipeline_mode<synchronous>, transform_indices = @transform_12, window_bounds = array<i64: 1, 128>}, {pipeline_mode = #tpu.pipeline_mode<synchronous>, transform_indices = @transform_13, window_bounds = array<i64: 128, 128>}, {pipeline_mode = #tpu.pipeline_mode<synchronous>, transform_indices = @transform_14, window_bounds = array<i64: 1, 128>}, {pipeline_mode = #tpu.pipeline_mode<synchronous>, transform_indices = @transform_15, window_bounds = array<i64: 128, 128>}, {pipeline_mode = #tpu.pipeline_mode<synchronous>, transform_indices = @transform_16, window_bounds = array<i64: 1, 128>}, {pipeline_mode = #tpu.pipeline_mode<synchronous>, transform_indices = @transform_17, window_bounds = array<i64: 128, 128>}, {pipeline_mode = #tpu.pipeline_mode<synchronous>, transform_indices = @transform_18, window_bounds = array<i64: 1, 128>}, {pipeline_mode = #tpu.pipeline_mode<synchronous>, transform_indices = @transform_19, window_bounds = array<i64: 128, 128>}, {pipeline_mode = #tpu.pipeline_mode<synchronous>, transform_indices = @transform_20, window_bounds = array<i64: 1, 128>}, {pipeline_mode = #tpu.pipeline_mode<synchronous>, transform_indices = @transform_21, window_bounds = array<i64: 128, 256>}, {pipeline_mode = #tpu.pipeline_mode<synchronous>, transform_indices = @transform_22, window_bounds = array<i64: 1, 256>}, {pipeline_mode = #tpu.pipeline_mode<synchronous>, transform_indices = @transform_23, window_bounds = array<i64: 256, 256>}, {pipeline_mode = #tpu.pipeline_mode<synchronous>, transform_indices = @transform_24, window_bounds = array<i64: 1, 256>}, {pipeline_mode = #tpu.pipeline_mode<synchronous>, transform_indices = @transform_25, window_bounds = array<i64: 128, 256>}, {pipeline_mode = #tpu.pipeline_mode<synchronous>, transform_indices = @transform_26, window_bounds = array<i64: 1, 256>}, {pipeline_mode = #tpu.pipeline_mode<synchronous>, transform_indices = @transform_27, window_bounds = array<i64: 256, 256>}, {pipeline_mode = #tpu.pipeline_mode<synchronous>, transform_indices = @transform_28, window_bounds = array<i64: 1, 256>}, {pipeline_mode = #tpu.pipeline_mode<synchronous>, transform_indices = @transform_29, window_bounds = array<i64: 256, 256>}, {pipeline_mode = #tpu.pipeline_mode<synchronous>, transform_indices = @transform_30, window_bounds = array<i64: 1, 256>}, {pipeline_mode = #tpu.pipeline_mode<synchronous>, transform_indices = @transform_31, window_bounds = array<i64: 256, 512>}, {pipeline_mode = #tpu.pipeline_mode<synchronous>, transform_indices = @transform_32, window_bounds = array<i64: 1, 512>}, {pipeline_mode = #tpu.pipeline_mode<synchronous>, transform_indices = @transform_33, window_bounds = array<i64: 512, 512>}, {pipeline_mode = #tpu.pipeline_mode<synchronous>, transform_indices = @transform_34, window_bounds = array<i64: 1, 512>}, {pipeline_mode = #tpu.pipeline_mode<synchronous>, transform_indices = @transform_35, window_bounds = array<i64: 256, 512>}, {pipeline_mode = #tpu.pipeline_mode<synchronous>, transform_indices = @transform_36, window_bounds = array<i64: 1, 512>}, {pipeline_mode = #tpu.pipeline_mode<synchronous>, transform_indices = @transform_37, window_bounds = array<i64: 512, 512>}, {pipeline_mode = #tpu.pipeline_mode<synchronous>, transform_indices = @transform_38, window_bounds = array<i64: 1, 512>}, {pipeline_mode = #tpu.pipeline_mode<synchronous>, transform_indices = @transform_39, window_bounds = array<i64: 512, 512>}, {pipeline_mode = #tpu.pipeline_mode<synchronous>, transform_indices = @transform_40, window_bounds = array<i64: 1, 512>}, {pipeline_mode = #tpu.pipeline_mode<synchronous>, transform_indices = @transform_41, window_bounds = array<i64: 512, 128>}, {pipeline_mode = #tpu.pipeline_mode<synchronous>, transform_indices = @transform_42, window_bounds = array<i64: 1, 128>}, {transform_indices = @transform_43, window_bounds = array<i64: 8, 128>}]} {
    %c0 = arith.constant 0 : index
    %c0_0 = arith.constant 0 : index
    %0 = vector.load %arg1[%c0, %c0_0] : memref<8x128xf32, #tpu.memory_space<vmem>>, vector<8x128xf32>
    %c0_1 = arith.constant 0 : index
    %c0_2 = arith.constant 0 : index
    %1 = vector.load %arg2[%c0_1, %c0_2] : memref<128x128xf32, #tpu.memory_space<vmem>>, vector<128x128xf32>
    %cst = arith.constant dense<0.000000e+00> : vector<8x128xf32>
    %2 = tpu.matmul %0, %1, %cst {dimension_numbers = #tpu.dot_dimension_numbers<[1], [0], [0], [1], [0, 0, 1, 1], [], []>} : vector<8x128xf32>, vector<128x128xf32>, vector<8x128xf32> -> vector<8x128xf32>
    %c0_3 = arith.constant 0 : index
    %c0_4 = arith.constant 0 : index
    %3 = vector.load %arg3[%c0_3, %c0_4] : memref<1x128xf32, #tpu.memory_space<vmem>>, vector<1x128xf32>
    %4 = vector.broadcast %3 : vector<1x128xf32> to vector<8x128xf32>
    %5 = arith.addf %2, %4 : vector<8x128xf32>
    %cst_5 = arith.constant 0.000000e+00 : f32
    %6 = vector.broadcast %cst_5 : f32 to vector<8x128xf32>
    %7 = arith.maximumf %5, %6 : vector<8x128xf32>
    %c0_6 = arith.constant 0 : index
    %c0_7 = arith.constant 0 : index
    %8 = vector.load %arg4[%c0_6, %c0_7] : memref<128x128xf32, #tpu.memory_space<vmem>>, vector<128x128xf32>
    %cst_8 = arith.constant dense<0.000000e+00> : vector<8x128xf32>
    %9 = tpu.matmul %7, %8, %cst_8 {dimension_numbers = #tpu.dot_dimension_numbers<[1], [0], [0], [1], [0, 0, 1, 1], [], []>} : vector<8x128xf32>, vector<128x128xf32>, vector<8x128xf32> -> vector<8x128xf32>
    %c0_9 = arith.constant 0 : index
    %c0_10 = arith.constant 0 : index
    %10 = vector.load %arg5[%c0_9, %c0_10] : memref<1x128xf32, #tpu.memory_space<vmem>>, vector<1x128xf32>
    %11 = vector.broadcast %10 : vector<1x128xf32> to vector<8x128xf32>
    %12 = arith.addf %9, %11 : vector<8x128xf32>
    %cst_11 = arith.constant 0.000000e+00 : f32
    %13 = vector.broadcast %cst_11 : f32 to vector<8x128xf32>
    %14 = arith.maximumf %12, %13 : vector<8x128xf32>
    %c0_12 = arith.constant 0 : index
    %c0_13 = arith.constant 0 : index
    %15 = vector.load %arg6[%c0_12, %c0_13] : memref<128x128xf32, #tpu.memory_space<vmem>>, vector<128x128xf32>
    %cst_14 = arith.constant dense<0.000000e+00> : vector<8x128xf32>
    %16 = tpu.matmul %14, %15, %cst_14 {dimension_numbers = #tpu.dot_dimension_numbers<[1], [0], [0], [1], [0, 0, 1, 1], [], []>} : vector<8x128xf32>, vector<128x128xf32>, vector<8x128xf32> -> vector<8x128xf32>
    %c0_15 = arith.constant 0 : index
    %c0_16 = arith.constant 0 : index
    %17 = vector.load %arg7[%c0_15, %c0_16] : memref<1x128xf32, #tpu.memory_space<vmem>>, vector<1x128xf32>
    %18 = vector.broadcast %17 : vector<1x128xf32> to vector<8x128xf32>
    %19 = arith.addf %16, %18 : vector<8x128xf32>
    %20 = arith.addf %19, %7 : vector<8x128xf32>
    %cst_17 = arith.constant 0.000000e+00 : f32
    %21 = vector.broadcast %cst_17 : f32 to vector<8x128xf32>
    %22 = arith.maximumf %20, %21 : vector<8x128xf32>
    %c0_18 = arith.constant 0 : index
    %c0_19 = arith.constant 0 : index
    %23 = vector.load %arg8[%c0_18, %c0_19] : memref<128x128xf32, #tpu.memory_space<vmem>>, vector<128x128xf32>
    %cst_20 = arith.constant dense<0.000000e+00> : vector<8x128xf32>
    %24 = tpu.matmul %22, %23, %cst_20 {dimension_numbers = #tpu.dot_dimension_numbers<[1], [0], [0], [1], [0, 0, 1, 1], [], []>} : vector<8x128xf32>, vector<128x128xf32>, vector<8x128xf32> -> vector<8x128xf32>
    %c0_21 = arith.constant 0 : index
    %c0_22 = arith.constant 0 : index
    %25 = vector.load %arg9[%c0_21, %c0_22] : memref<1x128xf32, #tpu.memory_space<vmem>>, vector<1x128xf32>
    %26 = vector.broadcast %25 : vector<1x128xf32> to vector<8x128xf32>
    %27 = arith.addf %24, %26 : vector<8x128xf32>
    %cst_23 = arith.constant 0.000000e+00 : f32
    %28 = vector.broadcast %cst_23 : f32 to vector<8x128xf32>
    %29 = arith.maximumf %27, %28 : vector<8x128xf32>
    %c0_24 = arith.constant 0 : index
    %c0_25 = arith.constant 0 : index
    %30 = vector.load %arg10[%c0_24, %c0_25] : memref<128x128xf32, #tpu.memory_space<vmem>>, vector<128x128xf32>
    %cst_26 = arith.constant dense<0.000000e+00> : vector<8x128xf32>
    %31 = tpu.matmul %29, %30, %cst_26 {dimension_numbers = #tpu.dot_dimension_numbers<[1], [0], [0], [1], [0, 0, 1, 1], [], []>} : vector<8x128xf32>, vector<128x128xf32>, vector<8x128xf32> -> vector<8x128xf32>
    %c0_27 = arith.constant 0 : index
    %c0_28 = arith.constant 0 : index
    %32 = vector.load %arg11[%c0_27, %c0_28] : memref<1x128xf32, #tpu.memory_space<vmem>>, vector<1x128xf32>
    %33 = vector.broadcast %32 : vector<1x128xf32> to vector<8x128xf32>
    %34 = arith.addf %31, %33 : vector<8x128xf32>
    %35 = arith.addf %34, %22 : vector<8x128xf32>
    %cst_29 = arith.constant 0.000000e+00 : f32
    %36 = vector.broadcast %cst_29 : f32 to vector<8x128xf32>
    %37 = arith.maximumf %35, %36 : vector<8x128xf32>
    %c0_30 = arith.constant 0 : index
    %c0_31 = arith.constant 0 : index
    %38 = vector.load %arg12[%c0_30, %c0_31] : memref<128x128xf32, #tpu.memory_space<vmem>>, vector<128x128xf32>
    %cst_32 = arith.constant dense<0.000000e+00> : vector<8x128xf32>
    %39 = tpu.matmul %37, %38, %cst_32 {dimension_numbers = #tpu.dot_dimension_numbers<[1], [0], [0], [1], [0, 0, 1, 1], [], []>} : vector<8x128xf32>, vector<128x128xf32>, vector<8x128xf32> -> vector<8x128xf32>
    %c0_33 = arith.constant 0 : index
    %c0_34 = arith.constant 0 : index
    %40 = vector.load %arg13[%c0_33, %c0_34] : memref<1x128xf32, #tpu.memory_space<vmem>>, vector<1x128xf32>
    %41 = vector.broadcast %40 : vector<1x128xf32> to vector<8x128xf32>
    %42 = arith.addf %39, %41 : vector<8x128xf32>
    %cst_35 = arith.constant 0.000000e+00 : f32
    %43 = vector.broadcast %cst_35 : f32 to vector<8x128xf32>
    %44 = arith.maximumf %42, %43 : vector<8x128xf32>
    %c0_36 = arith.constant 0 : index
    %c0_37 = arith.constant 0 : index
    %45 = vector.load %arg14[%c0_36, %c0_37] : memref<128x128xf32, #tpu.memory_space<vmem>>, vector<128x128xf32>
    %cst_38 = arith.constant dense<0.000000e+00> : vector<8x128xf32>
    %46 = tpu.matmul %44, %45, %cst_38 {dimension_numbers = #tpu.dot_dimension_numbers<[1], [0], [0], [1], [0, 0, 1, 1], [], []>} : vector<8x128xf32>, vector<128x128xf32>, vector<8x128xf32> -> vector<8x128xf32>
    %c0_39 = arith.constant 0 : index
    %c0_40 = arith.constant 0 : index
    %47 = vector.load %arg15[%c0_39, %c0_40] : memref<1x128xf32, #tpu.memory_space<vmem>>, vector<1x128xf32>
    %48 = vector.broadcast %47 : vector<1x128xf32> to vector<8x128xf32>
    %49 = arith.addf %46, %48 : vector<8x128xf32>
    %c0_41 = arith.constant 0 : index
    %c0_42 = arith.constant 0 : index
    %50 = vector.load %arg16[%c0_41, %c0_42] : memref<128x128xf32, #tpu.memory_space<vmem>>, vector<128x128xf32>
    %cst_43 = arith.constant dense<0.000000e+00> : vector<8x128xf32>
    %51 = tpu.matmul %37, %50, %cst_43 {dimension_numbers = #tpu.dot_dimension_numbers<[1], [0], [0], [1], [0, 0, 1, 1], [], []>} : vector<8x128xf32>, vector<128x128xf32>, vector<8x128xf32> -> vector<8x128xf32>
    %c0_44 = arith.constant 0 : index
    %c0_45 = arith.constant 0 : index
    %52 = vector.load %arg17[%c0_44, %c0_45] : memref<1x128xf32, #tpu.memory_space<vmem>>, vector<1x128xf32>
    %53 = vector.broadcast %52 : vector<1x128xf32> to vector<8x128xf32>
    %54 = arith.addf %51, %53 : vector<8x128xf32>
    %55 = arith.addf %49, %54 : vector<8x128xf32>
    %cst_46 = arith.constant 0.000000e+00 : f32
    %56 = vector.broadcast %cst_46 : f32 to vector<8x128xf32>
    %57 = arith.maximumf %55, %56 : vector<8x128xf32>
    %c0_47 = arith.constant 0 : index
    %c0_48 = arith.constant 0 : index
    %58 = vector.load %arg18[%c0_47, %c0_48] : memref<128x128xf32, #tpu.memory_space<vmem>>, vector<128x128xf32>
    %cst_49 = arith.constant dense<0.000000e+00> : vector<8x128xf32>
    %59 = tpu.matmul %57, %58, %cst_49 {dimension_numbers = #tpu.dot_dimension_numbers<[1], [0], [0], [1], [0, 0, 1, 1], [], []>} : vector<8x128xf32>, vector<128x128xf32>, vector<8x128xf32> -> vector<8x128xf32>
    %c0_50 = arith.constant 0 : index
    %c0_51 = arith.constant 0 : index
    %60 = vector.load %arg19[%c0_50, %c0_51] : memref<1x128xf32, #tpu.memory_space<vmem>>, vector<1x128xf32>
    %61 = vector.broadcast %60 : vector<1x128xf32> to vector<8x128xf32>
    %62 = arith.addf %59, %61 : vector<8x128xf32>
    %cst_52 = arith.constant 0.000000e+00 : f32
    %63 = vector.broadcast %cst_52 : f32 to vector<8x128xf32>
    %64 = arith.maximumf %62, %63 : vector<8x128xf32>
    %c0_53 = arith.constant 0 : index
    %c0_54 = arith.constant 0 : index
    %65 = vector.load %arg20[%c0_53, %c0_54] : memref<128x128xf32, #tpu.memory_space<vmem>>, vector<128x128xf32>
    %cst_55 = arith.constant dense<0.000000e+00> : vector<8x128xf32>
    %66 = tpu.matmul %64, %65, %cst_55 {dimension_numbers = #tpu.dot_dimension_numbers<[1], [0], [0], [1], [0, 0, 1, 1], [], []>} : vector<8x128xf32>, vector<128x128xf32>, vector<8x128xf32> -> vector<8x128xf32>
    %c0_56 = arith.constant 0 : index
    %c0_57 = arith.constant 0 : index
    %67 = vector.load %arg21[%c0_56, %c0_57] : memref<1x128xf32, #tpu.memory_space<vmem>>, vector<1x128xf32>
    %68 = vector.broadcast %67 : vector<1x128xf32> to vector<8x128xf32>
    %69 = arith.addf %66, %68 : vector<8x128xf32>
    %70 = arith.addf %69, %57 : vector<8x128xf32>
    %cst_58 = arith.constant 0.000000e+00 : f32
    %71 = vector.broadcast %cst_58 : f32 to vector<8x128xf32>
    %72 = arith.maximumf %70, %71 : vector<8x128xf32>
    %c0_59 = arith.constant 0 : index
    %c0_60 = arith.constant 0 : index
    %73 = vector.load %arg22[%c0_59, %c0_60] : memref<128x256xf32, #tpu.memory_space<vmem>>, vector<128x256xf32>
    %cst_61 = arith.constant dense<0.000000e+00> : vector<8x256xf32>
    %74 = tpu.matmul %72, %73, %cst_61 {dimension_numbers = #tpu.dot_dimension_numbers<[1], [0], [0], [1], [0, 0, 1, 1], [], []>} : vector<8x128xf32>, vector<128x256xf32>, vector<8x256xf32> -> vector<8x256xf32>
    %c0_62 = arith.constant 0 : index
    %c0_63 = arith.constant 0 : index
    %75 = vector.load %arg23[%c0_62, %c0_63] : memref<1x256xf32, #tpu.memory_space<vmem>>, vector<1x256xf32>
    %76 = vector.broadcast %75 : vector<1x256xf32> to vector<8x256xf32>
    %77 = arith.addf %74, %76 : vector<8x256xf32>
    %cst_64 = arith.constant 0.000000e+00 : f32
    %78 = vector.broadcast %cst_64 : f32 to vector<8x256xf32>
    %79 = arith.maximumf %77, %78 : vector<8x256xf32>
    %c0_65 = arith.constant 0 : index
    %c0_66 = arith.constant 0 : index
    %80 = vector.load %arg24[%c0_65, %c0_66] : memref<256x256xf32, #tpu.memory_space<vmem>>, vector<256x256xf32>
    %cst_67 = arith.constant dense<0.000000e+00> : vector<8x256xf32>
    %81 = tpu.matmul %79, %80, %cst_67 {dimension_numbers = #tpu.dot_dimension_numbers<[1], [0], [0], [1], [0, 0, 1, 1], [], []>} : vector<8x256xf32>, vector<256x256xf32>, vector<8x256xf32> -> vector<8x256xf32>
    %c0_68 = arith.constant 0 : index
    %c0_69 = arith.constant 0 : index
    %82 = vector.load %arg25[%c0_68, %c0_69] : memref<1x256xf32, #tpu.memory_space<vmem>>, vector<1x256xf32>
    %83 = vector.broadcast %82 : vector<1x256xf32> to vector<8x256xf32>
    %84 = arith.addf %81, %83 : vector<8x256xf32>
    %c0_70 = arith.constant 0 : index
    %c0_71 = arith.constant 0 : index
    %85 = vector.load %arg26[%c0_70, %c0_71] : memref<128x256xf32, #tpu.memory_space<vmem>>, vector<128x256xf32>
    %cst_72 = arith.constant dense<0.000000e+00> : vector<8x256xf32>
    %86 = tpu.matmul %72, %85, %cst_72 {dimension_numbers = #tpu.dot_dimension_numbers<[1], [0], [0], [1], [0, 0, 1, 1], [], []>} : vector<8x128xf32>, vector<128x256xf32>, vector<8x256xf32> -> vector<8x256xf32>
    %c0_73 = arith.constant 0 : index
    %c0_74 = arith.constant 0 : index
    %87 = vector.load %arg27[%c0_73, %c0_74] : memref<1x256xf32, #tpu.memory_space<vmem>>, vector<1x256xf32>
    %88 = vector.broadcast %87 : vector<1x256xf32> to vector<8x256xf32>
    %89 = arith.addf %86, %88 : vector<8x256xf32>
    %90 = arith.addf %84, %89 : vector<8x256xf32>
    %cst_75 = arith.constant 0.000000e+00 : f32
    %91 = vector.broadcast %cst_75 : f32 to vector<8x256xf32>
    %92 = arith.maximumf %90, %91 : vector<8x256xf32>
    %c0_76 = arith.constant 0 : index
    %c0_77 = arith.constant 0 : index
    %93 = vector.load %arg28[%c0_76, %c0_77] : memref<256x256xf32, #tpu.memory_space<vmem>>, vector<256x256xf32>
    %cst_78 = arith.constant dense<0.000000e+00> : vector<8x256xf32>
    %94 = tpu.matmul %92, %93, %cst_78 {dimension_numbers = #tpu.dot_dimension_numbers<[1], [0], [0], [1], [0, 0, 1, 1], [], []>} : vector<8x256xf32>, vector<256x256xf32>, vector<8x256xf32> -> vector<8x256xf32>
    %c0_79 = arith.constant 0 : index
    %c0_80 = arith.constant 0 : index
    %95 = vector.load %arg29[%c0_79, %c0_80] : memref<1x256xf32, #tpu.memory_space<vmem>>, vector<1x256xf32>
    %96 = vector.broadcast %95 : vector<1x256xf32> to vector<8x256xf32>
    %97 = arith.addf %94, %96 : vector<8x256xf32>
    %cst_81 = arith.constant 0.000000e+00 : f32
    %98 = vector.broadcast %cst_81 : f32 to vector<8x256xf32>
    %99 = arith.maximumf %97, %98 : vector<8x256xf32>
    %c0_82 = arith.constant 0 : index
    %c0_83 = arith.constant 0 : index
    %100 = vector.load %arg30[%c0_82, %c0_83] : memref<256x256xf32, #tpu.memory_space<vmem>>, vector<256x256xf32>
    %cst_84 = arith.constant dense<0.000000e+00> : vector<8x256xf32>
    %101 = tpu.matmul %99, %100, %cst_84 {dimension_numbers = #tpu.dot_dimension_numbers<[1], [0], [0], [1], [0, 0, 1, 1], [], []>} : vector<8x256xf32>, vector<256x256xf32>, vector<8x256xf32> -> vector<8x256xf32>
    %c0_85 = arith.constant 0 : index
    %c0_86 = arith.constant 0 : index
    %102 = vector.load %arg31[%c0_85, %c0_86] : memref<1x256xf32, #tpu.memory_space<vmem>>, vector<1x256xf32>
    %103 = vector.broadcast %102 : vector<1x256xf32> to vector<8x256xf32>
    %104 = arith.addf %101, %103 : vector<8x256xf32>
    %105 = arith.addf %104, %92 : vector<8x256xf32>
    %cst_87 = arith.constant 0.000000e+00 : f32
    %106 = vector.broadcast %cst_87 : f32 to vector<8x256xf32>
    %107 = arith.maximumf %105, %106 : vector<8x256xf32>
    %c0_88 = arith.constant 0 : index
    %c0_89 = arith.constant 0 : index
    %108 = vector.load %arg32[%c0_88, %c0_89] : memref<256x512xf32, #tpu.memory_space<vmem>>, vector<256x512xf32>
    %cst_90 = arith.constant dense<0.000000e+00> : vector<8x512xf32>
    %109 = tpu.matmul %107, %108, %cst_90 {dimension_numbers = #tpu.dot_dimension_numbers<[1], [0], [0], [1], [0, 0, 1, 1], [], []>} : vector<8x256xf32>, vector<256x512xf32>, vector<8x512xf32> -> vector<8x512xf32>
    %c0_91 = arith.constant 0 : index
    %c0_92 = arith.constant 0 : index
    %110 = vector.load %arg33[%c0_91, %c0_92] : memref<1x512xf32, #tpu.memory_space<vmem>>, vector<1x512xf32>
    %111 = vector.broadcast %110 : vector<1x512xf32> to vector<8x512xf32>
    %112 = arith.addf %109, %111 : vector<8x512xf32>
    %cst_93 = arith.constant 0.000000e+00 : f32
    %113 = vector.broadcast %cst_93 : f32 to vector<8x512xf32>
    %114 = arith.maximumf %112, %113 : vector<8x512xf32>
    %c0_94 = arith.constant 0 : index
    %c0_95 = arith.constant 0 : index
    %115 = vector.load %arg34[%c0_94, %c0_95] : memref<512x512xf32, #tpu.memory_space<vmem>>, vector<512x512xf32>
    %cst_96 = arith.constant dense<0.000000e+00> : vector<8x512xf32>
    %116 = tpu.matmul %114, %115, %cst_96 {dimension_numbers = #tpu.dot_dimension_numbers<[1], [0], [0], [1], [0, 0, 1, 1], [], []>} : vector<8x512xf32>, vector<512x512xf32>, vector<8x512xf32> -> vector<8x512xf32>
    %c0_97 = arith.constant 0 : index
    %c0_98 = arith.constant 0 : index
    %117 = vector.load %arg35[%c0_97, %c0_98] : memref<1x512xf32, #tpu.memory_space<vmem>>, vector<1x512xf32>
    %118 = vector.broadcast %117 : vector<1x512xf32> to vector<8x512xf32>
    %119 = arith.addf %116, %118 : vector<8x512xf32>
    %c0_99 = arith.constant 0 : index
    %c0_100 = arith.constant 0 : index
    %120 = vector.load %arg36[%c0_99, %c0_100] : memref<256x512xf32, #tpu.memory_space<vmem>>, vector<256x512xf32>
    %cst_101 = arith.constant dense<0.000000e+00> : vector<8x512xf32>
    %121 = tpu.matmul %107, %120, %cst_101 {dimension_numbers = #tpu.dot_dimension_numbers<[1], [0], [0], [1], [0, 0, 1, 1], [], []>} : vector<8x256xf32>, vector<256x512xf32>, vector<8x512xf32> -> vector<8x512xf32>
    %c0_102 = arith.constant 0 : index
    %c0_103 = arith.constant 0 : index
    %122 = vector.load %arg37[%c0_102, %c0_103] : memref<1x512xf32, #tpu.memory_space<vmem>>, vector<1x512xf32>
    %123 = vector.broadcast %122 : vector<1x512xf32> to vector<8x512xf32>
    %124 = arith.addf %121, %123 : vector<8x512xf32>
    %125 = arith.addf %119, %124 : vector<8x512xf32>
    %cst_104 = arith.constant 0.000000e+00 : f32
    %126 = vector.broadcast %cst_104 : f32 to vector<8x512xf32>
    %127 = arith.maximumf %125, %126 : vector<8x512xf32>
    %c0_105 = arith.constant 0 : index
    %c0_106 = arith.constant 0 : index
    %128 = vector.load %arg38[%c0_105, %c0_106] : memref<512x512xf32, #tpu.memory_space<vmem>>, vector<512x512xf32>
    %cst_107 = arith.constant dense<0.000000e+00> : vector<8x512xf32>
    %129 = tpu.matmul %127, %128, %cst_107 {dimension_numbers = #tpu.dot_dimension_numbers<[1], [0], [0], [1], [0, 0, 1, 1], [], []>} : vector<8x512xf32>, vector<512x512xf32>, vector<8x512xf32> -> vector<8x512xf32>
    %c0_108 = arith.constant 0 : index
    %c0_109 = arith.constant 0 : index
    %130 = vector.load %arg39[%c0_108, %c0_109] : memref<1x512xf32, #tpu.memory_space<vmem>>, vector<1x512xf32>
    %131 = vector.broadcast %130 : vector<1x512xf32> to vector<8x512xf32>
    %132 = arith.addf %129, %131 : vector<8x512xf32>
    %cst_110 = arith.constant 0.000000e+00 : f32
    %133 = vector.broadcast %cst_110 : f32 to vector<8x512xf32>
    %134 = arith.maximumf %132, %133 : vector<8x512xf32>
    %c0_111 = arith.constant 0 : index
    %c0_112 = arith.constant 0 : index
    %135 = vector.load %arg40[%c0_111, %c0_112] : memref<512x512xf32, #tpu.memory_space<vmem>>, vector<512x512xf32>
    %cst_113 = arith.constant dense<0.000000e+00> : vector<8x512xf32>
    %136 = tpu.matmul %134, %135, %cst_113 {dimension_numbers = #tpu.dot_dimension_numbers<[1], [0], [0], [1], [0, 0, 1, 1], [], []>} : vector<8x512xf32>, vector<512x512xf32>, vector<8x512xf32> -> vector<8x512xf32>
    %c0_114 = arith.constant 0 : index
    %c0_115 = arith.constant 0 : index
    %137 = vector.load %arg41[%c0_114, %c0_115] : memref<1x512xf32, #tpu.memory_space<vmem>>, vector<1x512xf32>
    %138 = vector.broadcast %137 : vector<1x512xf32> to vector<8x512xf32>
    %139 = arith.addf %136, %138 : vector<8x512xf32>
    %140 = arith.addf %139, %127 : vector<8x512xf32>
    %cst_116 = arith.constant 0.000000e+00 : f32
    %141 = vector.broadcast %cst_116 : f32 to vector<8x512xf32>
    %142 = arith.maximumf %140, %141 : vector<8x512xf32>
    %c0_117 = arith.constant 0 : index
    %c0_118 = arith.constant 0 : index
    %143 = vector.load %arg42[%c0_117, %c0_118] : memref<512x128xf32, #tpu.memory_space<vmem>>, vector<512x128xf32>
    %cst_119 = arith.constant dense<0.000000e+00> : vector<8x128xf32>
    %144 = tpu.matmul %142, %143, %cst_119 {dimension_numbers = #tpu.dot_dimension_numbers<[1], [0], [0], [1], [0, 0, 1, 1], [], []>} : vector<8x512xf32>, vector<512x128xf32>, vector<8x128xf32> -> vector<8x128xf32>
    %c0_120 = arith.constant 0 : index
    %c0_121 = arith.constant 0 : index
    %145 = vector.load %arg43[%c0_120, %c0_121] : memref<1x128xf32, #tpu.memory_space<vmem>>, vector<1x128xf32>
    %146 = vector.broadcast %145 : vector<1x128xf32> to vector<8x128xf32>
    %147 = arith.addf %144, %146 : vector<8x128xf32>
    %c0_122 = arith.constant 0 : index
    %c0_123 = arith.constant 0 : index
    %148 = vector.load %arg44[%c0_122, %c0_123] : memref<8x128xf32, #tpu.memory_space<vmem>>, vector<8x128xf32>
    tpu.vector_store %arg44[%c0_122, %c0_123], %147 {strides = array<i32>} : memref<8x128xf32, #tpu.memory_space<vmem>>, vector<8x128xf32>,
    return
  }
  func.func @transform_0(%arg0: i32) -> (i32, i32) {
    %c0_i32 = arith.constant 0 : i32
    %c0_i32_0 = arith.constant 0 : i32
    return %arg0, %c0_i32 : i32, i32
  }
  func.func @transform_1(%arg0: i32) -> (i32, i32) {
    %c0_i32 = arith.constant 0 : i32
    %c0_i32_0 = arith.constant 0 : i32
    %c0_i32_1 = arith.constant 0 : i32
    return %c0_i32, %c0_i32_0 : i32, i32
  }
  func.func @transform_2(%arg0: i32) -> (i32, i32) {
    %c0_i32 = arith.constant 0 : i32
    %c0_i32_0 = arith.constant 0 : i32
    %c0_i32_1 = arith.constant 0 : i32
    return %c0_i32, %c0_i32_0 : i32, i32
  }
  func.func @transform_3(%arg0: i32) -> (i32, i32) {
    %c0_i32 = arith.constant 0 : i32
    %c0_i32_0 = arith.constant 0 : i32
    %c0_i32_1 = arith.constant 0 : i32
    return %c0_i32, %c0_i32_0 : i32, i32
  }
  func.func @transform_4(%arg0: i32) -> (i32, i32) {
    %c0_i32 = arith.constant 0 : i32
    %c0_i32_0 = arith.constant 0 : i32
    %c0_i32_1 = arith.constant 0 : i32
    return %c0_i32, %c0_i32_0 : i32, i32
  }
  func.func @transform_5(%arg0: i32) -> (i32, i32) {
    %c0_i32 = arith.constant 0 : i32
    %c0_i32_0 = arith.constant 0 : i32
    %c0_i32_1 = arith.constant 0 : i32
    return %c0_i32, %c0_i32_0 : i32, i32
  }
  func.func @transform_6(%arg0: i32) -> (i32, i32) {
    %c0_i32 = arith.constant 0 : i32
    %c0_i32_0 = arith.constant 0 : i32
    %c0_i32_1 = arith.constant 0 : i32
    return %c0_i32, %c0_i32_0 : i32, i32
  }
  func.func @transform_7(%arg0: i32) -> (i32, i32) {
    %c0_i32 = arith.constant 0 : i32
    %c0_i32_0 = arith.constant 0 : i32
    %c0_i32_1 = arith.constant 0 : i32
    return %c0_i32, %c0_i32_0 : i32, i32
  }
  func.func @transform_8(%arg0: i32) -> (i32, i32) {
    %c0_i32 = arith.constant 0 : i32
    %c0_i32_0 = arith.constant 0 : i32
    %c0_i32_1 = arith.constant 0 : i32
    return %c0_i32, %c0_i32_0 : i32, i32
  }
  func.func @transform_9(%arg0: i32) -> (i32, i32) {
    %c0_i32 = arith.constant 0 : i32
    %c0_i32_0 = arith.constant 0 : i32
    %c0_i32_1 = arith.constant 0 : i32
    return %c0_i32, %c0_i32_0 : i32, i32
  }
  func.func @transform_10(%arg0: i32) -> (i32, i32) {
    %c0_i32 = arith.constant 0 : i32
    %c0_i32_0 = arith.constant 0 : i32
    %c0_i32_1 = arith.constant 0 : i32
    return %c0_i32, %c0_i32_0 : i32, i32
  }
  func.func @transform_11(%arg0: i32) -> (i32, i32) {
    %c0_i32 = arith.constant 0 : i32
    %c0_i32_0 = arith.constant 0 : i32
    %c0_i32_1 = arith.constant 0 : i32
    return %c0_i32, %c0_i32_0 : i32, i32
  }
  func.func @transform_12(%arg0: i32) -> (i32, i32) {
    %c0_i32 = arith.constant 0 : i32
    %c0_i32_0 = arith.constant 0 : i32
    %c0_i32_1 = arith.constant 0 : i32
    return %c0_i32, %c0_i32_0 : i32, i32
  }
  func.func @transform_13(%arg0: i32) -> (i32, i32) {
    %c0_i32 = arith.constant 0 : i32
    %c0_i32_0 = arith.constant 0 : i32
    %c0_i32_1 = arith.constant 0 : i32
    return %c0_i32, %c0_i32_0 : i32, i32
  }
  func.func @transform_14(%arg0: i32) -> (i32, i32) {
    %c0_i32 = arith.constant 0 : i32
    %c0_i32_0 = arith.constant 0 : i32
    %c0_i32_1 = arith.constant 0 : i32
    return %c0_i32, %c0_i32_0 : i32, i32
  }
  func.func @transform_15(%arg0: i32) -> (i32, i32) {
    %c0_i32 = arith.constant 0 : i32
    %c0_i32_0 = arith.constant 0 : i32
    %c0_i32_1 = arith.constant 0 : i32
    return %c0_i32, %c0_i32_0 : i32, i32
  }
  func.func @transform_16(%arg0: i32) -> (i32, i32) {
    %c0_i32 = arith.constant 0 : i32
    %c0_i32_0 = arith.constant 0 : i32
    %c0_i32_1 = arith.constant 0 : i32
    return %c0_i32, %c0_i32_0 : i32, i32
  }
  func.func @transform_17(%arg0: i32) -> (i32, i32) {
    %c0_i32 = arith.constant 0 : i32
    %c0_i32_0 = arith.constant 0 : i32
    %c0_i32_1 = arith.constant 0 : i32
    return %c0_i32, %c0_i32_0 : i32, i32
  }
  func.func @transform_18(%arg0: i32) -> (i32, i32) {
    %c0_i32 = arith.constant 0 : i32
    %c0_i32_0 = arith.constant 0 : i32
    %c0_i32_1 = arith.constant 0 : i32
    return %c0_i32, %c0_i32_0 : i32, i32
  }
  func.func @transform_19(%arg0: i32) -> (i32, i32) {
    %c0_i32 = arith.constant 0 : i32
    %c0_i32_0 = arith.constant 0 : i32
    %c0_i32_1 = arith.constant 0 : i32
    return %c0_i32, %c0_i32_0 : i32, i32
  }
  func.func @transform_20(%arg0: i32) -> (i32, i32) {
    %c0_i32 = arith.constant 0 : i32
    %c0_i32_0 = arith.constant 0 : i32
    %c0_i32_1 = arith.constant 0 : i32
    return %c0_i32, %c0_i32_0 : i32, i32
  }
  func.func @transform_21(%arg0: i32) -> (i32, i32) {
    %c0_i32 = arith.constant 0 : i32
    %c0_i32_0 = arith.constant 0 : i32
    %c0_i32_1 = arith.constant 0 : i32
    return %c0_i32, %c0_i32_0 : i32, i32
  }
  func.func @transform_22(%arg0: i32) -> (i32, i32) {
    %c0_i32 = arith.constant 0 : i32
    %c0_i32_0 = arith.constant 0 : i32
    %c0_i32_1 = arith.constant 0 : i32
    return %c0_i32, %c0_i32_0 : i32, i32
  }
  func.func @transform_23(%arg0: i32) -> (i32, i32) {
    %c0_i32 = arith.constant 0 : i32
    %c0_i32_0 = arith.constant 0 : i32
    %c0_i32_1 = arith.constant 0 : i32
    return %c0_i32, %c0_i32_0 : i32, i32
  }
  func.func @transform_24(%arg0: i32) -> (i32, i32) {
    %c0_i32 = arith.constant 0 : i32
    %c0_i32_0 = arith.constant 0 : i32
    %c0_i32_1 = arith.constant 0 : i32
    return %c0_i32, %c0_i32_0 : i32, i32
  }
  func.func @transform_25(%arg0: i32) -> (i32, i32) {
    %c0_i32 = arith.constant 0 : i32
    %c0_i32_0 = arith.constant 0 : i32
    %c0_i32_1 = arith.constant 0 : i32
    return %c0_i32, %c0_i32_0 : i32, i32
  }
  func.func @transform_26(%arg0: i32) -> (i32, i32) {
    %c0_i32 = arith.constant 0 : i32
    %c0_i32_0 = arith.constant 0 : i32
    %c0_i32_1 = arith.constant 0 : i32
    return %c0_i32, %c0_i32_0 : i32, i32
  }
  func.func @transform_27(%arg0: i32) -> (i32, i32) {
    %c0_i32 = arith.constant 0 : i32
    %c0_i32_0 = arith.constant 0 : i32
    %c0_i32_1 = arith.constant 0 : i32
    return %c0_i32, %c0_i32_0 : i32, i32
  }
  func.func @transform_28(%arg0: i32) -> (i32, i32) {
    %c0_i32 = arith.constant 0 : i32
    %c0_i32_0 = arith.constant 0 : i32
    %c0_i32_1 = arith.constant 0 : i32
    return %c0_i32, %c0_i32_0 : i32, i32
  }
  func.func @transform_29(%arg0: i32) -> (i32, i32) {
    %c0_i32 = arith.constant 0 : i32
    %c0_i32_0 = arith.constant 0 : i32
    %c0_i32_1 = arith.constant 0 : i32
    return %c0_i32, %c0_i32_0 : i32, i32
  }
  func.func @transform_30(%arg0: i32) -> (i32, i32) {
    %c0_i32 = arith.constant 0 : i32
    %c0_i32_0 = arith.constant 0 : i32
    %c0_i32_1 = arith.constant 0 : i32
    return %c0_i32, %c0_i32_0 : i32, i32
  }
  func.func @transform_31(%arg0: i32) -> (i32, i32) {
    %c0_i32 = arith.constant 0 : i32
    %c0_i32_0 = arith.constant 0 : i32
    %c0_i32_1 = arith.constant 0 : i32
    return %c0_i32, %c0_i32_0 : i32, i32
  }
  func.func @transform_32(%arg0: i32) -> (i32, i32) {
    %c0_i32 = arith.constant 0 : i32
    %c0_i32_0 = arith.constant 0 : i32
    %c0_i32_1 = arith.constant 0 : i32
    return %c0_i32, %c0_i32_0 : i32, i32
  }
  func.func @transform_33(%arg0: i32) -> (i32, i32) {
    %c0_i32 = arith.constant 0 : i32
    %c0_i32_0 = arith.constant 0 : i32
    %c0_i32_1 = arith.constant 0 : i32
    return %c0_i32, %c0_i32_0 : i32, i32
  }
  func.func @transform_34(%arg0: i32) -> (i32, i32) {
    %c0_i32 = arith.constant 0 : i32
    %c0_i32_0 = arith.constant 0 : i32
    %c0_i32_1 = arith.constant 0 : i32
    return %c0_i32, %c0_i32_0 : i32, i32
  }
  func.func @transform_35(%arg0: i32) -> (i32, i32) {
    %c0_i32 = arith.constant 0 : i32
    %c0_i32_0 = arith.constant 0 : i32
    %c0_i32_1 = arith.constant 0 : i32
    return %c0_i32, %c0_i32_0 : i32, i32
  }
  func.func @transform_36(%arg0: i32) -> (i32, i32) {
    %c0_i32 = arith.constant 0 : i32
    %c0_i32_0 = arith.constant 0 : i32
    %c0_i32_1 = arith.constant 0 : i32
    return %c0_i32, %c0_i32_0 : i32, i32
  }
  func.func @transform_37(%arg0: i32) -> (i32, i32) {
    %c0_i32 = arith.constant 0 : i32
    %c0_i32_0 = arith.constant 0 : i32
    %c0_i32_1 = arith.constant 0 : i32
    return %c0_i32, %c0_i32_0 : i32, i32
  }
  func.func @transform_38(%arg0: i32) -> (i32, i32) {
    %c0_i32 = arith.constant 0 : i32
    %c0_i32_0 = arith.constant 0 : i32
    %c0_i32_1 = arith.constant 0 : i32
    return %c0_i32, %c0_i32_0 : i32, i32
  }
  func.func @transform_39(%arg0: i32) -> (i32, i32) {
    %c0_i32 = arith.constant 0 : i32
    %c0_i32_0 = arith.constant 0 : i32
    %c0_i32_1 = arith.constant 0 : i32
    return %c0_i32, %c0_i32_0 : i32, i32
  }
  func.func @transform_40(%arg0: i32) -> (i32, i32) {
    %c0_i32 = arith.constant 0 : i32
    %c0_i32_0 = arith.constant 0 : i32
    %c0_i32_1 = arith.constant 0 : i32
    return %c0_i32, %c0_i32_0 : i32, i32
  }
  func.func @transform_41(%arg0: i32) -> (i32, i32) {
    %c0_i32 = arith.constant 0 : i32
    %c0_i32_0 = arith.constant 0 : i32
    %c0_i32_1 = arith.constant 0 : i32
    return %c0_i32, %c0_i32_0 : i32, i32
  }
  func.func @transform_42(%arg0: i32) -> (i32, i32) {
    %c0_i32 = arith.constant 0 : i32
    %c0_i32_0 = arith.constant 0 : i32
    %c0_i32_1 = arith.constant 0 : i32
    return %c0_i32, %c0_i32_0 : i32, i32
  }
  func.func @transform_43(%arg0: i32) -> (i32, i32) {
    %c0_i32 = arith.constant 0 : i32
    %c0_i32_0 = arith.constant 0 : i32
    return %arg0, %c0_i32 : i32, i32
  }
}

</mosaic_0001>

<llo_original>
// kernel: tpu_custom_call.1
$region0: #{tpu_custom_call.1}
  #allocation0 [shape = 'u32[]', space=smem, size = 0x4, offset = 0x4, fixed_abs, tag = 'smem constant byte address 0x4 - core index']
  #allocation1 [shape = 'u32[72,128]{1,0:T(1,128)}', space=vmem, size = 0x9000, scoped, tag = 'internal scratch']
  %s0 = inlined_call_operand.smem [shape: u32[44], index: -1, kind: input, shape index: {}]
  %s1 = sld [smem:[%s0]]
  %s2 = scalar_lea.smem %s0, 1
  %s3 = sld [smem:[%s2]]
  %s4 = scalar_lea.smem %s0, 2
  %s5 = sld [smem:[%s4]]
  %s6 = scalar_lea.smem %s0, 3
  %s7 = sld [smem:[%s6]]
  %s8 = scalar_lea.smem %s0, 4
  %s9 = sld [smem:[%s8]]
  %s10 = scalar_lea.smem %s0, 5
  %s11 = sld [smem:[%s10]]
  %s12 = scalar_lea.smem %s0, 6
  %s13 = sld [smem:[%s12]]
  %s14 = scalar_lea.smem %s0, 7
  %s15 = sld [smem:[%s14]]
  %s16 = scalar_lea.smem %s0, 8
  %s17 = sld [smem:[%s16]]
  %s18 = scalar_lea.smem %s0, 9
  %s19 = sld [smem:[%s18]]
  %s20 = scalar_lea.smem %s0, 10
  %s21 = sld [smem:[%s20]]
  %s22 = scalar_lea.smem %s0, 11
  %s23 = sld [smem:[%s22]]
  %s24 = scalar_lea.smem %s0, 12
  %s25 = sld [smem:[%s24]]
  %s26 = scalar_lea.smem %s0, 13
  %s27 = sld [smem:[%s26]]
  %s28 = scalar_lea.smem %s0, 14
  %s29 = sld [smem:[%s28]]
  %s30 = scalar_lea.smem %s0, 15
  %s31 = sld [smem:[%s30]]
  %s32 = scalar_lea.smem %s0, 16
  %s33 = sld [smem:[%s32]]
  %s34 = scalar_lea.smem %s0, 17
  %s35 = sld [smem:[%s34]]
  %s36 = scalar_lea.smem %s0, 18
  %s37 = sld [smem:[%s36]]
  %s38 = scalar_lea.smem %s0, 19
  %s39 = sld [smem:[%s38]]
  %s40 = scalar_lea.smem %s0, 20
  %s41 = sld [smem:[%s40]]
  %s42 = scalar_lea.smem %s0, 21
  %s43 = sld [smem:[%s42]]
  %s44 = scalar_lea.smem %s0, 22
  %s45 = sld [smem:[%s44]]
  %s46 = scalar_lea.smem %s0, 23
  %s47 = sld [smem:[%s46]]
  %s48 = scalar_lea.smem %s0, 24
  %s49 = sld [smem:[%s48]]
  %s50 = scalar_lea.smem %s0, 25
  %s51 = sld [smem:[%s50]]
  %s52 = scalar_lea.smem %s0, 26
  %s53 = sld [smem:[%s52]]
  %s54 = scalar_lea.smem %s0, 27
  %s55 = sld [smem:[%s54]]
  %s56 = scalar_lea.smem %s0, 28
  %s57 = sld [smem:[%s56]]
  %s58 = scalar_lea.smem %s0, 29
  %s59 = sld [smem:[%s58]]
  %s60 = scalar_lea.smem %s0, 30
  %s61 = sld [smem:[%s60]]
  %s62 = scalar_lea.smem %s0, 31
  %s63 = sld [smem:[%s62]]
  %s64 = scalar_lea.smem %s0, 32
  %s65 = sld [smem:[%s64]]
  %s66 = scalar_lea.smem %s0, 33
  %s67 = sld [smem:[%s66]]
  %s68 = scalar_lea.smem %s0, 34
  %s69 = sld [smem:[%s68]]
  %s70 = scalar_lea.smem %s0, 35
  %s71 = sld [smem:[%s70]]
  %s72 = scalar_lea.smem %s0, 36
  %s73 = sld [smem:[%s72]]
  %s74 = scalar_lea.smem %s0, 37
  %s75 = sld [smem:[%s74]]
  %s76 = scalar_lea.smem %s0, 38
  %s77 = sld [smem:[%s76]]
  %s78 = scalar_lea.smem %s0, 39
  %s79 = sld [smem:[%s78]]
  %s80 = scalar_lea.smem %s0, 40
  %s81 = sld [smem:[%s80]]
  %s82 = scalar_lea.smem %s0, 41
  %s83 = sld [smem:[%s82]]
  %s84 = scalar_lea.smem %s0, 42
  %s85 = sld [smem:[%s84]]
  %s86 = scalar_lea.smem %s0, 43
  %s87 = sld [smem:[%s86]]
  %s88 = sld [smem:[#allocation0]]
  $region314: #{tpu_custom_call.1} parent=0
    _
  %s90 = ssub.s32 1, %s88
  %s91 = scalar_select 0, %s90, %s88
  $region1: #{tpu_custom_call.1} parent=0
    #allocation2 [shape = 'u8[4096]{0}', space=vmem, size = 0x1000, scoped, tag = 'input window, operand 0, single buffered']
    #allocation3 [shape = 's32[1]{0}', space=sflag, size = 0x4, scoped, tag = 'scoped memory for tpu_custom_call.1']
    #allocation4 [shape = 's32[1]{0}', space=sflag, size = 0x4, scoped, tag = 'scoped memory for tpu_custom_call.1']
    #allocation5 [shape = 'u8[65536]{0}', space=vmem, size = 0x10000, scoped, tag = 'input window, operand 1, single buffered']
    #allocation6 [shape = 's32[1]{0}', space=sflag, size = 0x4, scoped, tag = 'scoped memory for tpu_custom_call.1']
    #allocation7 [shape = 'u8[512]{0}', space=vmem, size = 0x400, scoped, tag = 'input window, operand 2, single buffered']
    #allocation8 [shape = 'u8[65536]{0}', space=vmem, size = 0x10000, scoped, tag = 'input window, operand 3, single buffered']
    #allocation9 [shape = 's32[1]{0}', space=sflag, size = 0x4, scoped, tag = 'scoped memory for tpu_custom_call.1']
    #allocation10 [shape = 'u8[512]{0}', space=vmem, size = 0x400, scoped, tag = 'input window, operand 4, single buffered']
    #allocation11 [shape = 'u8[65536]{0}', space=vmem, size = 0x10000, scoped, tag = 'input window, operand 5, single buffered']
    #allocation12 [shape = 's32[1]{0}', space=sflag, size = 0x4, scoped, tag = 'scoped memory for tpu_custom_call.1']
    #allocation13 [shape = 'u8[512]{0}', space=vmem, size = 0x400, scoped, tag = 'input window, operand 6, single buffered']
    #allocation14 [shape = 'u8[65536]{0}', space=vmem, size = 0x10000, scoped, tag = 'input window, operand 7, single buffered']
    #allocation15 [shape = 's32[1]{0}', space=sflag, size = 0x4, scoped, tag = 'scoped memory for tpu_custom_call.1']
    #allocation16 [shape = 'u8[512]{0}', space=vmem, size = 0x400, scoped, tag = 'input window, operand 8, single buffered']
    #allocation17 [shape = 'u8[65536]{0}', space=vmem, size = 0x10000, scoped, tag = 'input window, operand 9, single buffered']
    #allocation18 [shape = 's32[1]{0}', space=sflag, size = 0x4, scoped, tag = 'scoped memory for tpu_custom_call.1']
    #allocation19 [shape = 'u8[512]{0}', space=vmem, size = 0x400, scoped, tag = 'input window, operand 10, single buffered']
    #allocation20 [shape = 'u8[65536]{0}', space=vmem, size = 0x10000, scoped, tag = 'input window, operand 11, single buffered']
    #allocation21 [shape = 's32[1]{0}', space=sflag, size = 0x4, scoped, tag = 'scoped memory for tpu_custom_call.1']
    #allocation22 [shape = 'u8[512]{0}', space=vmem, size = 0x400, scoped, tag = 'input window, operand 12, single buffered']
    #allocation23 [shape = 'u8[65536]{0}', space=vmem, size = 0x10000, scoped, tag = 'input window, operand 13, single buffered']
    #allocation24 [shape = 's32[1]{0}', space=sflag, size = 0x4, scoped, tag = 'scoped memory for tpu_custom_call.1']
    #allocation25 [shape = 'u8[512]{0}', space=vmem, size = 0x400, scoped, tag = 'input window, operand 14, single buffered']
    #allocation26 [shape = 'u8[65536]{0}', space=vmem, size = 0x10000, scoped, tag = 'input window, operand 15, single buffered']
    #allocation27 [shape = 's32[1]{0}', space=sflag, size = 0x4, scoped, tag = 'scoped memory for tpu_custom_call.1']
    #allocation28 [shape = 'u8[512]{0}', space=vmem, size = 0x400, scoped, tag = 'input window, operand 16, single buffered']
    #allocation29 [shape = 'u8[65536]{0}', space=vmem, size = 0x10000, scoped, tag = 'input window, operand 17, single buffered']
    #allocation30 [shape = 's32[1]{0}', space=sflag, size = 0x4, scoped, tag = 'scoped memory for tpu_custom_call.1']
    #allocation31 [shape = 'u8[512]{0}', space=vmem, size = 0x400, scoped, tag = 'input window, operand 18, single buffered']
    #allocation32 [shape = 'u8[65536]{0}', space=vmem, size = 0x10000, scoped, tag = 'input window, operand 19, single buffered']
    #allocation33 [shape = 's32[1]{0}', space=sflag, size = 0x4, scoped, tag = 'scoped memory for tpu_custom_call.1']
    #allocation34 [shape = 'u8[512]{0}', space=vmem, size = 0x400, scoped, tag = 'input window, operand 20, single buffered']
    #allocation35 [shape = 'u8[131072]{0}', space=vmem, size = 0x20000, scoped, tag = 'input window, operand 21, single buffered']
    #allocation36 [shape = 's32[1]{0}', space=sflag, size = 0x4, scoped, tag = 'scoped memory for tpu_custom_call.1']
    #allocation37 [shape = 'u8[1024]{0}', space=vmem, size = 0x400, scoped, tag = 'input window, operand 22, single buffered']
    #allocation38 [shape = 'u8[262144]{0}', space=vmem, size = 0x40000, scoped, tag = 'input window, operand 23, single buffered']
    #allocation39 [shape = 's32[1]{0}', space=sflag, size = 0x4, scoped, tag = 'scoped memory for tpu_custom_call.1']
    #allocation40 [shape = 'u8[131072]{0}', space=vmem, size = 0x20000, scoped, tag = 'input window, operand 25, single buffered']
    #allocation41 [shape = 'u8[262144]{0}', space=vmem, size = 0x40000, scoped, tag = 'input window, operand 27, single buffered']
    #allocation42 [shape = 's32[1]{0}', space=sflag, size = 0x4, scoped, tag = 'scoped memory for tpu_custom_call.1']
    #allocation43 [shape = 'u8[262144]{0}', space=vmem, size = 0x40000, scoped, tag = 'input window, operand 29, single buffered']
    #allocation44 [shape = 'u8[524288]{0}', space=vmem, size = 0x80000, scoped, tag = 'input window, operand 31, single buffered']
    #allocation45 [shape = 's32[1]{0}', space=sflag, size = 0x4, scoped, tag = 'scoped memory for tpu_custom_call.1']
    #allocation46 [shape = 'u8[1048576]{0}', space=vmem, size = 0x100000, scoped, tag = 'input window, operand 33, single buffered']
    #allocation47 [shape = 'u8[524288]{0}', space=vmem, size = 0x80000, scoped, tag = 'input window, operand 35, single buffered']
    #allocation48 [shape = 's32[1]{0}', space=sflag, size = 0x4, scoped, tag = 'scoped memory for tpu_custom_call.1']
    #allocation49 [shape = 'u8[1048576]{0}', space=vmem, size = 0x100000, scoped, tag = 'input window, operand 37, single buffered']
    #allocation50 [shape = 'u8[1048576]{0}', space=vmem, size = 0x100000, scoped, tag = 'input window, operand 39, single buffered']
    #allocation51 [shape = 's32[1]{0}', space=sflag, size = 0x4, scoped, tag = 'scoped memory for tpu_custom_call.1']
    #allocation52 [shape = 'u8[262144]{0}', space=vmem, size = 0x40000, scoped, tag = 'input window, operand 41, single buffered']
    #allocation53 [shape = 'u8[4096]{0}', space=vmem, size = 0x1000, scoped, tag = 'output window, operand 0, single buffered']
    %92 = vsyncpa [#allocation3], 0
    %93 = vsyncpa [#allocation6], 0
    %94 = vsyncpa [#allocation9], 0
    %95 = vsyncpa [#allocation12], 0
    %96 = vsyncpa [#allocation15], 0
    %97 = vsyncpa [#allocation18], 0
    %98 = vsyncpa [#allocation21], 0
    %99 = vsyncpa [#allocation24], 0
    %100 = vsyncpa [#allocation27], 0
    %101 = vsyncpa [#allocation30], 0
    %102 = vsyncpa [#allocation33], 0
    %103 = vsyncpa [#allocation36], 0
    %104 = vsyncpa [#allocation39], 0
    %105 = vsyncpa [#allocation42], 0
    %106 = vsyncpa [#allocation45], 0
    %107 = vsyncpa [#allocation48], 0
    %108 = vsyncpa [#allocation51], 0
    %109 = vsyncpa [#allocation4], 0
    // Predicated region
    $region2: #{tpu_custom_call.1} parent=1 // pred_check
      _
    $region3: #{tpu_custom_call.1} parent=1 // pred_check_branch
      %111 = sbr.rel (0) target = $region5
    $region4: #{tpu_custom_call.1} parent=1 // pred_region
      %113 = vsyncadd [#allocation3], 0
      %s115 = sshll.u32 %s1, 4
      %s116 = int_to_ptr.hbm [resolvable:$true] %s115
      %s117 = sshll.u32 [#allocation2], 4
      %s118 = int_to_ptr.vmem [resolvable:$true] %s117
      %120 = dma.hbm_to_vmem [thread:$0]  %s116, 128, %s118, [#allocation3]
    $region5: #{tpu_custom_call.1} parent=1 // pred_fallthru
      _
    // Predicated region
    $region6: #{tpu_custom_call.1} parent=1 // pred_check
      _
    $region7: #{tpu_custom_call.1} parent=1 // pred_check_branch
      %122 = sbr.rel (0) target = $region9
    $region8: #{tpu_custom_call.1} parent=1 // pred_region
      %124 = vsyncadd [#allocation6], 0
      %s125 = sshll.u32 %s3, 4
      %s126 = int_to_ptr.hbm [resolvable:$true] %s125
      %s127 = sshll.u32 [#allocation5], 4
      %s128 = int_to_ptr.vmem [resolvable:$true] %s127
      %133 = dma.hbm_to_vmem [thread:$0]  %s126, 2048, %s128, [#allocation6], 128, 128, 8
    $region9: #{tpu_custom_call.1} parent=1 // pred_fallthru
      _
    // Predicated region
    $region10: #{tpu_custom_call.1} parent=1 // pred_check
      _
    $region11: #{tpu_custom_call.1} parent=1 // pred_check_branch
      %135 = sbr.rel (0) target = $region13
    $region12: #{tpu_custom_call.1} parent=1 // pred_region
      %137 = vsyncadd [#allocation6], 0
      %s139 = sshll.u32 %s5, 4
      %s140 = int_to_ptr.hbm [resolvable:$true] %s139
      %s141 = sshll.u32 [#allocation7], 4
      %s142 = int_to_ptr.vmem [resolvable:$true] %s141
      %144 = dma.hbm_to_vmem [thread:$0]  %s140, 16, %s142, [#allocation6]
    $region13: #{tpu_custom_call.1} parent=1 // pred_fallthru
      _
    // Predicated region
    $region14: #{tpu_custom_call.1} parent=1 // pred_check
      _
    $region15: #{tpu_custom_call.1} parent=1 // pred_check_branch
      %146 = sbr.rel (0) target = $region17
    $region16: #{tpu_custom_call.1} parent=1 // pred_region
      %148 = vsyncadd [#allocation9], 0
      %s149 = sshll.u32 %s7, 4
      %s150 = int_to_ptr.hbm [resolvable:$true] %s149
      %s151 = sshll.u32 [#allocation8], 4
      %s152 = int_to_ptr.vmem [resolvable:$true] %s151
      %157 = dma.hbm_to_vmem [thread:$0]  %s150, 2048, %s152, [#allocation9], 128, 128, 8
    $region17: #{tpu_custom_call.1} parent=1 // pred_fallthru
      _
    // Predicated region
    $region18: #{tpu_custom_call.1} parent=1 // pred_check
      _
    $region19: #{tpu_custom_call.1} parent=1 // pred_check_branch
      %159 = sbr.rel (0) target = $region21
    $region20: #{tpu_custom_call.1} parent=1 // pred_region
      %161 = vsyncadd [#allocation9], 0
      %s163 = sshll.u32 %s9, 4
      %s164 = int_to_ptr.hbm [resolvable:$true] %s163
      %s165 = sshll.u32 [#allocation10], 4
      %s166 = int_to_ptr.vmem [resolvable:$true] %s165
      %168 = dma.hbm_to_vmem [thread:$0]  %s164, 16, %s166, [#allocation9]
    $region21: #{tpu_custom_call.1} parent=1 // pred_fallthru
      _
    // Predicated region
    $region22: #{tpu_custom_call.1} parent=1 // pred_check
      _
    $region23: #{tpu_custom_call.1} parent=1 // pred_check_branch
      %170 = sbr.rel (0) target = $region25
    $region24: #{tpu_custom_call.1} parent=1 // pred_region
      %172 = vsyncadd [#allocation12], 0
      %s173 = sshll.u32 %s11, 4
      %s174 = int_to_ptr.hbm [resolvable:$true] %s173
      %s175 = sshll.u32 [#allocation11], 4
      %s176 = int_to_ptr.vmem [resolvable:$true] %s175
      %181 = dma.hbm_to_vmem [thread:$0]  %s174, 2048, %s176, [#allocation12], 128, 128, 8
    $region25: #{tpu_custom_call.1} parent=1 // pred_fallthru
      _
    // Predicated region
    $region26: #{tpu_custom_call.1} parent=1 // pred_check
      _
    $region27: #{tpu_custom_call.1} parent=1 // pred_check_branch
      %183 = sbr.rel (0) target = $region29
    $region28: #{tpu_custom_call.1} parent=1 // pred_region
      %185 = vsyncadd [#allocation12], 0
      %s187 = sshll.u32 %s13, 4
      %s188 = int_to_ptr.hbm [resolvable:$true] %s187
      %s189 = sshll.u32 [#allocation13], 4
      %s190 = int_to_ptr.vmem [resolvable:$true] %s189
      %192 = dma.hbm_to_vmem [thread:$0]  %s188, 16, %s190, [#allocation12]
    $region29: #{tpu_custom_call.1} parent=1 // pred_fallthru
      _
    // Predicated region
    $region30: #{tpu_custom_call.1} parent=1 // pred_check
      _
    $region31: #{tpu_custom_call.1} parent=1 // pred_check_branch
      %194 = sbr.rel (0) target = $region33
    $region32: #{tpu_custom_call.1} parent=1 // pred_region
      %196 = vsyncadd [#allocation15], 0
      %s197 = sshll.u32 %s15, 4
      %s198 = int_to_ptr.hbm [resolvable:$true] %s197
      %s199 = sshll.u32 [#allocation14], 4
      %s200 = int_to_ptr.vmem [resolvable:$true] %s199
      %205 = dma.hbm_to_vmem [thread:$0]  %s198, 2048, %s200, [#allocation15], 128, 128, 8
    $region33: #{tpu_custom_call.1} parent=1 // pred_fallthru
      _
    // Predicated region
    $region34: #{tpu_custom_call.1} parent=1 // pred_check
      _
    $region35: #{tpu_custom_call.1} parent=1 // pred_check_branch
      %207 = sbr.rel (0) target = $region37
    $region36: #{tpu_custom_call.1} parent=1 // pred_region
      %209 = vsyncadd [#allocation15], 0
      %s211 = sshll.u32 %s17, 4
      %s212 = int_to_ptr.hbm [resolvable:$true] %s211
      %s213 = sshll.u32 [#allocation16], 4
      %s214 = int_to_ptr.vmem [resolvable:$true] %s213
      %216 = dma.hbm_to_vmem [thread:$0]  %s212, 16, %s214, [#allocation15]
    $region37: #{tpu_custom_call.1} parent=1 // pred_fallthru
      _
    // Predicated region
    $region38: #{tpu_custom_call.1} parent=1 // pred_check
      _
    $region39: #{tpu_custom_call.1} parent=1 // pred_check_branch
      %218 = sbr.rel (0) target = $region41
    $region40: #{tpu_custom_call.1} parent=1 // pred_region
      %220 = vsyncadd [#allocation18], 0
      %s221 = sshll.u32 %s19, 4
      %s222 = int_to_ptr.hbm [resolvable:$true] %s221
      %s223 = sshll.u32 [#allocation17], 4
      %s224 = int_to_ptr.vmem [resolvable:$true] %s223
      %229 = dma.hbm_to_vmem [thread:$0]  %s222, 2048, %s224, [#allocation18], 128, 128, 8
    $region41: #{tpu_custom_call.1} parent=1 // pred_fallthru
      _
    // Predicated region
    $region42: #{tpu_custom_call.1} parent=1 // pred_check
      _
    $region43: #{tpu_custom_call.1} parent=1 // pred_check_branch
      %231 = sbr.rel (0) target = $region45
    $region44: #{tpu_custom_call.1} parent=1 // pred_region
      %233 = vsyncadd [#allocation18], 0
      %s235 = sshll.u32 %s21, 4
      %s236 = int_to_ptr.hbm [resolvable:$true] %s235
      %s237 = sshll.u32 [#allocation19], 4
      %s238 = int_to_ptr.vmem [resolvable:$true] %s237
      %240 = dma.hbm_to_vmem [thread:$0]  %s236, 16, %s238, [#allocation18]
    $region45: #{tpu_custom_call.1} parent=1 // pred_fallthru
      _
    // Predicated region
    $region46: #{tpu_custom_call.1} parent=1 // pred_check
      _
    $region47: #{tpu_custom_call.1} parent=1 // pred_check_branch
      %242 = sbr.rel (0) target = $region49
    $region48: #{tpu_custom_call.1} parent=1 // pred_region
      %244 = vsyncadd [#allocation21], 0
      %s245 = sshll.u32 %s23, 4
      %s246 = int_to_ptr.hbm [resolvable:$true] %s245
      %s247 = sshll.u32 [#allocation20], 4
      %s248 = int_to_ptr.vmem [resolvable:$true] %s247
      %253 = dma.hbm_to_vmem [thread:$0]  %s246, 2048, %s248, [#allocation21], 128, 128, 8
    $region49: #{tpu_custom_call.1} parent=1 // pred_fallthru
      _
    // Predicated region
    $region50: #{tpu_custom_call.1} parent=1 // pred_check
      _
    $region51: #{tpu_custom_call.1} parent=1 // pred_check_branch
      %255 = sbr.rel (0) target = $region53
    $region52: #{tpu_custom_call.1} parent=1 // pred_region
      %257 = vsyncadd [#allocation21], 0
      %s259 = sshll.u32 %s25, 4
      %s260 = int_to_ptr.hbm [resolvable:$true] %s259
      %s261 = sshll.u32 [#allocation22], 4
      %s262 = int_to_ptr.vmem [resolvable:$true] %s261
      %264 = dma.hbm_to_vmem [thread:$0]  %s260, 16, %s262, [#allocation21]
    $region53: #{tpu_custom_call.1} parent=1 // pred_fallthru
      _
    // Predicated region
    $region54: #{tpu_custom_call.1} parent=1 // pred_check
      _
    $region55: #{tpu_custom_call.1} parent=1 // pred_check_branch
      %266 = sbr.rel (0) target = $region57
    $region56: #{tpu_custom_call.1} parent=1 // pred_region
      %268 = vsyncadd [#allocation24], 0
      %s269 = sshll.u32 %s27, 4
      %s270 = int_to_ptr.hbm [resolvable:$true] %s269
      %s271 = sshll.u32 [#allocation23], 4
      %s272 = int_to_ptr.vmem [resolvable:$true] %s271
      %277 = dma.hbm_to_vmem [thread:$0]  %s270, 2048, %s272, [#allocation24], 128, 128, 8
    $region57: #{tpu_custom_call.1} parent=1 // pred_fallthru
      _
    // Predicated region
    $region58: #{tpu_custom_call.1} parent=1 // pred_check
      _
    $region59: #{tpu_custom_call.1} parent=1 // pred_check_branch
      %279 = sbr.rel (0) target = $region61
    $region60: #{tpu_custom_call.1} parent=1 // pred_region
      %281 = vsyncadd [#allocation24], 0
      %s283 = sshll.u32 %s29, 4
      %s284 = int_to_ptr.hbm [resolvable:$true] %s283
      %s285 = sshll.u32 [#allocation25], 4
      %s286 = int_to_ptr.vmem [resolvable:$true] %s285
      %288 = dma.hbm_to_vmem [thread:$0]  %s284, 16, %s286, [#allocation24]
    $region61: #{tpu_custom_call.1} parent=1 // pred_fallthru
      _
    // Predicated region
    $region62: #{tpu_custom_call.1} parent=1 // pred_check
      _
    $region63: #{tpu_custom_call.1} parent=1 // pred_check_branch
      %290 = sbr.rel (0) target = $region65
    $region64: #{tpu_custom_call.1} parent=1 // pred_region
      %292 = vsyncadd [#allocation27], 0
      %s293 = sshll.u32 %s31, 4
      %s294 = int_to_ptr.hbm [resolvable:$true] %s293
      %s295 = sshll.u32 [#allocation26], 4
      %s296 = int_to_ptr.vmem [resolvable:$true] %s295
      %301 = dma.hbm_to_vmem [thread:$0]  %s294, 2048, %s296, [#allocation27], 128, 128, 8
    $region65: #{tpu_custom_call.1} parent=1 // pred_fallthru
      _
    // Predicated region
    $region66: #{tpu_custom_call.1} parent=1 // pred_check
      _
    $region67: #{tpu_custom_call.1} parent=1 // pred_check_branch
      %303 = sbr.rel (0) target = $region69
    $region68: #{tpu_custom_call.1} parent=1 // pred_region
      %305 = vsyncadd [#allocation27], 0
      %s307 = sshll.u32 %s33, 4
      %s308 = int_to_ptr.hbm [resolvable:$true] %s307
      %s309 = sshll.u32 [#allocation28], 4
      %s310 = int_to_ptr.vmem [resolvable:$true] %s309
      %312 = dma.hbm_to_vmem [thread:$0]  %s308, 16, %s310, [#allocation27]
    $region69: #{tpu_custom_call.1} parent=1 // pred_fallthru
      _
    // Predicated region
    $region70: #{tpu_custom_call.1} parent=1 // pred_check
      _
    $region71: #{tpu_custom_call.1} parent=1 // pred_check_branch
      %314 = sbr.rel (0) target = $region73
    $region72: #{tpu_custom_call.1} parent=1 // pred_region
      %316 = vsyncadd [#allocation30], 0
      %s317 = sshll.u32 %s35, 4
      %s318 = int_to_ptr.hbm [resolvable:$true] %s317
      %s319 = sshll.u32 [#allocation29], 4
      %s320 = int_to_ptr.vmem [resolvable:$true] %s319
      %325 = dma.hbm_to_vmem [thread:$0]  %s318, 2048, %s320, [#allocation30], 128, 128, 8
    $region73: #{tpu_custom_call.1} parent=1 // pred_fallthru
      _
    // Predicated region
    $region74: #{tpu_custom_call.1} parent=1 // pred_check
      _
    $region75: #{tpu_custom_call.1} parent=1 // pred_check_branch
      %327 = sbr.rel (0) target = $region77
    $region76: #{tpu_custom_call.1} parent=1 // pred_region
      %329 = vsyncadd [#allocation30], 0
      %s331 = sshll.u32 %s37, 4
      %s332 = int_to_ptr.hbm [resolvable:$true] %s331
      %s333 = sshll.u32 [#allocation31], 4
      %s334 = int_to_ptr.vmem [resolvable:$true] %s333
      %336 = dma.hbm_to_vmem [thread:$0]  %s332, 16, %s334, [#allocation30]
    $region77: #{tpu_custom_call.1} parent=1 // pred_fallthru
      _
    // Predicated region
    $region78: #{tpu_custom_call.1} parent=1 // pred_check
      _
    $region79: #{tpu_custom_call.1} parent=1 // pred_check_branch
      %338 = sbr.rel (0) target = $region81
    $region80: #{tpu_custom_call.1} parent=1 // pred_region
      %340 = vsyncadd [#allocation33], 0
      %s341 = sshll.u32 %s39, 4
      %s342 = int_to_ptr.hbm [resolvable:$true] %s341
      %s343 = sshll.u32 [#allocation32], 4
      %s344 = int_to_ptr.vmem [resolvable:$true] %s343
      %349 = dma.hbm_to_vmem [thread:$0]  %s342, 2048, %s344, [#allocation33], 128, 128, 8
    $region81: #{tpu_custom_call.1} parent=1 // pred_fallthru
      _
    // Predicated region
    $region82: #{tpu_custom_call.1} parent=1 // pred_check
      _
    $region83: #{tpu_custom_call.1} parent=1 // pred_check_branch
      %351 = sbr.rel (0) target = $region85
    $region84: #{tpu_custom_call.1} parent=1 // pred_region
      %353 = vsyncadd [#allocation33], 0
      %s355 = sshll.u32 %s41, 4
      %s356 = int_to_ptr.hbm [resolvable:$true] %s355
      %s357 = sshll.u32 [#allocation34], 4
      %s358 = int_to_ptr.vmem [resolvable:$true] %s357
      %360 = dma.hbm_to_vmem [thread:$0]  %s356, 16, %s358, [#allocation33]
    $region85: #{tpu_custom_call.1} parent=1 // pred_fallthru
      _
    // Predicated region
    $region86: #{tpu_custom_call.1} parent=1 // pred_check
      _
    $region87: #{tpu_custom_call.1} parent=1 // pred_check_branch
      %362 = sbr.rel (0) target = $region89
    $region88: #{tpu_custom_call.1} parent=1 // pred_region
      %364 = vsyncadd [#allocation36], 0
      %s365 = sshll.u32 %s43, 4
      %s366 = int_to_ptr.hbm [resolvable:$true] %s365
      %s367 = sshll.u32 [#allocation35], 4
      %s368 = int_to_ptr.vmem [resolvable:$true] %s367
      %373 = dma.hbm_to_vmem [thread:$0]  %s366, 4096, %s368, [#allocation36], 256, 256, 16
    $region89: #{tpu_custom_call.1} parent=1 // pred_fallthru
      _
    // Predicated region
    $region90: #{tpu_custom_call.1} parent=1 // pred_check
      _
    $region91: #{tpu_custom_call.1} parent=1 // pred_check_branch
      %375 = sbr.rel (0) target = $region93
    $region92: #{tpu_custom_call.1} parent=1 // pred_region
      %377 = vsyncadd [#allocation36], 0
      %s379 = sshll.u32 %s45, 4
      %s380 = int_to_ptr.hbm [resolvable:$true] %s379
      %s381 = sshll.u32 [#allocation37], 4
      %s382 = int_to_ptr.vmem [resolvable:$true] %s381
      %384 = dma.hbm_to_vmem [thread:$0]  %s380, 32, %s382, [#allocation36]
    $region93: #{tpu_custom_call.1} parent=1 // pred_fallthru
      _
    // Predicated region
    $region94: #{tpu_custom_call.1} parent=1 // pred_check
      _
    $region95: #{tpu_custom_call.1} parent=1 // pred_check_branch
      %386 = sbr.rel (0) target = $region97
    $region96: #{tpu_custom_call.1} parent=1 // pred_region
      %388 = vsyncadd [#allocation39], 0
      %s389 = sshll.u32 %s47, 4
      %s390 = int_to_ptr.hbm [resolvable:$true] %s389
      %s391 = sshll.u32 [#allocation38], 4
      %s392 = int_to_ptr.vmem [resolvable:$true] %s391
      %397 = dma.hbm_to_vmem [thread:$0]  %s390, 8192, %s392, [#allocation39], 256, 256, 16
    $region97: #{tpu_custom_call.1} parent=1 // pred_fallthru
      _
    // Predicated region
    $region98: #{tpu_custom_call.1} parent=1 // pred_check
      _
    $region99: #{tpu_custom_call.1} parent=1 // pred_check_branch
      %399 = sbr.rel (0) target = $region101
    $region100: #{tpu_custom_call.1} parent=1 // pred_region
      _
    $region101: #{tpu_custom_call.1} parent=1 // pred_fallthru
      _
    // Predicated region
    $region102: #{tpu_custom_call.1} parent=1 // pred_check
      _
    $region103: #{tpu_custom_call.1} parent=1 // pred_check_branch
      %401 = sbr.rel (0) target = $region105
    $region104: #{tpu_custom_call.1} parent=1 // pred_region
      %403 = vsyncadd [#allocation39], 0
      %s404 = sshll.u32 %s51, 4
      %s405 = int_to_ptr.hbm [resolvable:$true] %s404
      %s406 = sshll.u32 [#allocation40], 4
      %s407 = int_to_ptr.vmem [resolvable:$true] %s406
      %412 = dma.hbm_to_vmem [thread:$0]  %s405, 4096, %s407, [#allocation39], 256, 256, 16
    $region105: #{tpu_custom_call.1} parent=1 // pred_fallthru
      _
    // Predicated region
    $region106: #{tpu_custom_call.1} parent=1 // pred_check
      _
    $region107: #{tpu_custom_call.1} parent=1 // pred_check_branch
      %414 = sbr.rel (0) target = $region109
    $region108: #{tpu_custom_call.1} parent=1 // pred_region
      _
    $region109: #{tpu_custom_call.1} parent=1 // pred_fallthru
      _
    // Predicated region
    $region110: #{tpu_custom_call.1} parent=1 // pred_check
      _
    $region111: #{tpu_custom_call.1} parent=1 // pred_check_branch
      %416 = sbr.rel (0) target = $region113
    $region112: #{tpu_custom_call.1} parent=1 // pred_region
      %418 = vsyncadd [#allocation42], 0
      %s419 = sshll.u32 %s55, 4
      %s420 = int_to_ptr.hbm [resolvable:$true] %s419
      %s421 = sshll.u32 [#allocation41], 4
      %s422 = int_to_ptr.vmem [resolvable:$true] %s421
      %427 = dma.hbm_to_vmem [thread:$0]  %s420, 8192, %s422, [#allocation42], 256, 256, 16
    $region113: #{tpu_custom_call.1} parent=1 // pred_fallthru
      _
    // Predicated region
    $region114: #{tpu_custom_call.1} parent=1 // pred_check
      _
    $region115: #{tpu_custom_call.1} parent=1 // pred_check_branch
      %429 = sbr.rel (0) target = $region117
    $region116: #{tpu_custom_call.1} parent=1 // pred_region
      _
    $region117: #{tpu_custom_call.1} parent=1 // pred_fallthru
      _
    // Predicated region
    $region118: #{tpu_custom_call.1} parent=1 // pred_check
      _
    $region119: #{tpu_custom_call.1} parent=1 // pred_check_branch
      %431 = sbr.rel (0) target = $region121
    $region120: #{tpu_custom_call.1} parent=1 // pred_region
      %433 = vsyncadd [#allocation42], 0
      %s434 = sshll.u32 %s59, 4
      %s435 = int_to_ptr.hbm [resolvable:$true] %s434
      %s436 = sshll.u32 [#allocation43], 4
      %s437 = int_to_ptr.vmem [resolvable:$true] %s436
      %442 = dma.hbm_to_vmem [thread:$0]  %s435, 8192, %s437, [#allocation42], 256, 256, 16
    $region121: #{tpu_custom_call.1} parent=1 // pred_fallthru
      _
    // Predicated region
    $region122: #{tpu_custom_call.1} parent=1 // pred_check
      _
    $region123: #{tpu_custom_call.1} parent=1 // pred_check_branch
      %444 = sbr.rel (0) target = $region125
    $region124: #{tpu_custom_call.1} parent=1 // pred_region
      _
    $region125: #{tpu_custom_call.1} parent=1 // pred_fallthru
      _
    // Predicated region
    $region126: #{tpu_custom_call.1} parent=1 // pred_check
      _
    $region127: #{tpu_custom_call.1} parent=1 // pred_check_branch
      %446 = sbr.rel (0) target = $region129
    $region128: #{tpu_custom_call.1} parent=1 // pred_region
      %448 = vsyncadd [#allocation45], 0
      %s449 = sshll.u32 %s63, 4
      %s450 = int_to_ptr.hbm [resolvable:$true] %s449
      %s451 = sshll.u32 [#allocation44], 4
      %s452 = int_to_ptr.vmem [resolvable:$true] %s451
      %457 = dma.hbm_to_vmem [thread:$0]  %s450, 16384, %s452, [#allocation45], 512, 512, 32
    $region129: #{tpu_custom_call.1} parent=1 // pred_fallthru
      _
    // Predicated region
    $region130: #{tpu_custom_call.1} parent=1 // pred_check
      _
    $region131: #{tpu_custom_call.1} parent=1 // pred_check_branch
      %459 = sbr.rel (0) target = $region133
    $region132: #{tpu_custom_call.1} parent=1 // pred_region
      _
    $region133: #{tpu_custom_call.1} parent=1 // pred_fallthru
      _
    // Predicated region
    $region134: #{tpu_custom_call.1} parent=1 // pred_check
      _
    $region135: #{tpu_custom_call.1} parent=1 // pred_check_branch
      %461 = sbr.rel (0) target = $region137
    $region136: #{tpu_custom_call.1} parent=1 // pred_region
      %463 = vsyncadd [#allocation45], 0
      %s464 = sshll.u32 %s67, 4
      %s465 = int_to_ptr.hbm [resolvable:$true] %s464
      %s466 = sshll.u32 [#allocation46], 4
      %s467 = int_to_ptr.vmem [resolvable:$true] %s466
      %472 = dma.hbm_to_vmem [thread:$0]  %s465, 32768, %s467, [#allocation45], 512, 512, 32
    $region137: #{tpu_custom_call.1} parent=1 // pred_fallthru
      _
    // Predicated region
    $region138: #{tpu_custom_call.1} parent=1 // pred_check
      _
    $region139: #{tpu_custom_call.1} parent=1 // pred_check_branch
      %474 = sbr.rel (0) target = $region141
    $region140: #{tpu_custom_call.1} parent=1 // pred_region
      _
    $region141: #{tpu_custom_call.1} parent=1 // pred_fallthru
      _
    // Predicated region
    $region142: #{tpu_custom_call.1} parent=1 // pred_check
      _
    $region143: #{tpu_custom_call.1} parent=1 // pred_check_branch
      %476 = sbr.rel (0) target = $region145
    $region144: #{tpu_custom_call.1} parent=1 // pred_region
      %478 = vsyncadd [#allocation48], 0
      %s479 = sshll.u32 %s71, 4
      %s480 = int_to_ptr.hbm [resolvable:$true] %s479
      %s481 = sshll.u32 [#allocation47], 4
      %s482 = int_to_ptr.vmem [resolvable:$true] %s481
      %487 = dma.hbm_to_vmem [thread:$0]  %s480, 16384, %s482, [#allocation48], 512, 512, 32
    $region145: #{tpu_custom_call.1} parent=1 // pred_fallthru
      _
    // Predicated region
    $region146: #{tpu_custom_call.1} parent=1 // pred_check
      _
    $region147: #{tpu_custom_call.1} parent=1 // pred_check_branch
      %489 = sbr.rel (0) target = $region149
    $region148: #{tpu_custom_call.1} parent=1 // pred_region
      _
    $region149: #{tpu_custom_call.1} parent=1 // pred_fallthru
      _
    // Predicated region
    $region150: #{tpu_custom_call.1} parent=1 // pred_check
      _
    $region151: #{tpu_custom_call.1} parent=1 // pred_check_branch
      %491 = sbr.rel (0) target = $region153
    $region152: #{tpu_custom_call.1} parent=1 // pred_region
      %493 = vsyncadd [#allocation48], 0
      %s494 = sshll.u32 %s75, 4
      %s495 = int_to_ptr.hbm [resolvable:$true] %s494
      %s496 = sshll.u32 [#allocation49], 4
      %s497 = int_to_ptr.vmem [resolvable:$true] %s496
      %502 = dma.hbm_to_vmem [thread:$0]  %s495, 32768, %s497, [#allocation48], 512, 512, 32
    $region153: #{tpu_custom_call.1} parent=1 // pred_fallthru
      _
    // Predicated region
    $region154: #{tpu_custom_call.1} parent=1 // pred_check
      _
    $region155: #{tpu_custom_call.1} parent=1 // pred_check_branch
      %504 = sbr.rel (0) target = $region157
    $region156: #{tpu_custom_call.1} parent=1 // pred_region
      _
    $region157: #{tpu_custom_call.1} parent=1 // pred_fallthru
      _
    // Predicated region
    $region158: #{tpu_custom_call.1} parent=1 // pred_check
      _
    $region159: #{tpu_custom_call.1} parent=1 // pred_check_branch
      %506 = sbr.rel (0) target = $region161
    $region160: #{tpu_custom_call.1} parent=1 // pred_region
      %508 = vsyncadd [#allocation51], 0
      %s509 = sshll.u32 %s79, 4
      %s510 = int_to_ptr.hbm [resolvable:$true] %s509
      %s511 = sshll.u32 [#allocation50], 4
      %s512 = int_to_ptr.vmem [resolvable:$true] %s511
      %517 = dma.hbm_to_vmem [thread:$0]  %s510, 32768, %s512, [#allocation51], 512, 512, 32
    $region161: #{tpu_custom_call.1} parent=1 // pred_fallthru
      _
    // Predicated region
    $region162: #{tpu_custom_call.1} parent=1 // pred_check
      _
    $region163: #{tpu_custom_call.1} parent=1 // pred_check_branch
      %519 = sbr.rel (0) target = $region165
    $region164: #{tpu_custom_call.1} parent=1 // pred_region
      _
    $region165: #{tpu_custom_call.1} parent=1 // pred_fallthru
      _
    // Predicated region
    $region166: #{tpu_custom_call.1} parent=1 // pred_check
      _
    $region167: #{tpu_custom_call.1} parent=1 // pred_check_branch
      %521 = sbr.rel (0) target = $region169
    $region168: #{tpu_custom_call.1} parent=1 // pred_region
      %523 = vsyncadd [#allocation51], 0
      %s524 = sshll.u32 %s83, 4
      %s525 = int_to_ptr.hbm [resolvable:$true] %s524
      %s526 = sshll.u32 [#allocation52], 4
      %s527 = int_to_ptr.vmem [resolvable:$true] %s526
      %532 = dma.hbm_to_vmem [thread:$0]  %s525, 8192, %s527, [#allocation51], 128, 128, 8
    $region169: #{tpu_custom_call.1} parent=1 // pred_fallthru
      _
    // Predicated region
    $region170: #{tpu_custom_call.1} parent=1 // pred_check
      _
    $region171: #{tpu_custom_call.1} parent=1 // pred_check_branch
      %534 = sbr.rel (0) target = $region173
    $region172: #{tpu_custom_call.1} parent=1 // pred_region
      _
    $region173: #{tpu_custom_call.1} parent=1 // pred_fallthru
      _
    // Predicated region
    $region174: #{tpu_custom_call.1} parent=1 // pred_check
      _
    $region175: #{tpu_custom_call.1} parent=1 // pred_check_branch
      %536 = sbr.rel (0) target = $region177
    $region176: #{tpu_custom_call.1} parent=1 // pred_region
      %538 = dma.done [#allocation3], 128
    $region177: #{tpu_custom_call.1} parent=1 // pred_fallthru
      _
    // Predicated region
    $region178: #{tpu_custom_call.1} parent=1 // pred_check
      _
    $region179: #{tpu_custom_call.1} parent=1 // pred_check_branch
      %540 = sbr.rel (0) target = $region181
    $region180: #{tpu_custom_call.1} parent=1 // pred_region
      %542 = dma.done [#allocation6], 2048
    $region181: #{tpu_custom_call.1} parent=1 // pred_fallthru
      _
    // Predicated region
    $region182: #{tpu_custom_call.1} parent=1 // pred_check
      _
    $region183: #{tpu_custom_call.1} parent=1 // pred_check_branch
      %544 = sbr.rel (0) target = $region185
    $region184: #{tpu_custom_call.1} parent=1 // pred_region
      %546 = dma.done [#allocation6], 16
    $region185: #{tpu_custom_call.1} parent=1 // pred_fallthru
      _
    // Predicated region
    $region186: #{tpu_custom_call.1} parent=1 // pred_check
      _
    $region187: #{tpu_custom_call.1} parent=1 // pred_check_branch
      %548 = sbr.rel (0) target = $region189
    $region188: #{tpu_custom_call.1} parent=1 // pred_region
      %550 = dma.done [#allocation9], 2048
    $region189: #{tpu_custom_call.1} parent=1 // pred_fallthru
      _
    // Predicated region
    $region190: #{tpu_custom_call.1} parent=1 // pred_check
      _
    $region191: #{tpu_custom_call.1} parent=1 // pred_check_branch
      %552 = sbr.rel (0) target = $region193
    $region192: #{tpu_custom_call.1} parent=1 // pred_region
      %554 = dma.done [#allocation9], 16
    $region193: #{tpu_custom_call.1} parent=1 // pred_fallthru
      _
    // Predicated region
    $region194: #{tpu_custom_call.1} parent=1 // pred_check
      _
    $region195: #{tpu_custom_call.1} parent=1 // pred_check_branch
      %556 = sbr.rel (0) target = $region197
    $region196: #{tpu_custom_call.1} parent=1 // pred_region
      %558 = dma.done [#allocation12], 2048
    $region197: #{tpu_custom_call.1} parent=1 // pred_fallthru
      _
    // Predicated region
    $region198: #{tpu_custom_call.1} parent=1 // pred_check
      _
    $region199: #{tpu_custom_call.1} parent=1 // pred_check_branch
      %560 = sbr.rel (0) target = $region201
    $region200: #{tpu_custom_call.1} parent=1 // pred_region
      %562 = dma.done [#allocation12], 16
    $region201: #{tpu_custom_call.1} parent=1 // pred_fallthru
      _
    // Predicated region
    $region202: #{tpu_custom_call.1} parent=1 // pred_check
      _
    $region203: #{tpu_custom_call.1} parent=1 // pred_check_branch
      %564 = sbr.rel (0) target = $region205
    $region204: #{tpu_custom_call.1} parent=1 // pred_region
      %566 = dma.done [#allocation15], 2048
    $region205: #{tpu_custom_call.1} parent=1 // pred_fallthru
      _
    // Predicated region
    $region206: #{tpu_custom_call.1} parent=1 // pred_check
      _
    $region207: #{tpu_custom_call.1} parent=1 // pred_check_branch
      %568 = sbr.rel (0) target = $region209
    $region208: #{tpu_custom_call.1} parent=1 // pred_region
      %570 = dma.done [#allocation15], 16
    $region209: #{tpu_custom_call.1} parent=1 // pred_fallthru
      _
    // Predicated region
    $region210: #{tpu_custom_call.1} parent=1 // pred_check
      _
    $region211: #{tpu_custom_call.1} parent=1 // pred_check_branch
      %572 = sbr.rel (0) target = $region213
    $region212: #{tpu_custom_call.1} parent=1 // pred_region
      %574 = dma.done [#allocation18], 2048
    $region213: #{tpu_custom_call.1} parent=1 // pred_fallthru
      _
    // Predicated region
    $region214: #{tpu_custom_call.1} parent=1 // pred_check
      _
    $region215: #{tpu_custom_call.1} parent=1 // pred_check_branch
      %576 = sbr.rel (0) target = $region217
    $region216: #{tpu_custom_call.1} parent=1 // pred_region
      %578 = dma.done [#allocation18], 16
    $region217: #{tpu_custom_call.1} parent=1 // pred_fallthru
      _
    // Predicated region
    $region218: #{tpu_custom_call.1} parent=1 // pred_check
      _
    $region219: #{tpu_custom_call.1} parent=1 // pred_check_branch
      %580 = sbr.rel (0) target = $region221
    $region220: #{tpu_custom_call.1} parent=1 // pred_region
      %582 = dma.done [#allocation21], 2048
    $region221: #{tpu_custom_call.1} parent=1 // pred_fallthru
      _
    // Predicated region
    $region222: #{tpu_custom_call.1} parent=1 // pred_check
      _
    $region223: #{tpu_custom_call.1} parent=1 // pred_check_branch
      %584 = sbr.rel (0) target = $region225
    $region224: #{tpu_custom_call.1} parent=1 // pred_region
      %586 = dma.done [#allocation21], 16
    $region225: #{tpu_custom_call.1} parent=1 // pred_fallthru
      _
    // Predicated region
    $region226: #{tpu_custom_call.1} parent=1 // pred_check
      _
    $region227: #{tpu_custom_call.1} parent=1 // pred_check_branch
      %588 = sbr.rel (0) target = $region229
    $region228: #{tpu_custom_call.1} parent=1 // pred_region
      %590 = dma.done [#allocation24], 2048
    $region229: #{tpu_custom_call.1} parent=1 // pred_fallthru
      _
    // Predicated region
    $region230: #{tpu_custom_call.1} parent=1 // pred_check
      _
    $region231: #{tpu_custom_call.1} parent=1 // pred_check_branch
      %592 = sbr.rel (0) target = $region233
    $region232: #{tpu_custom_call.1} parent=1 // pred_region
      %594 = dma.done [#allocation24], 16
    $region233: #{tpu_custom_call.1} parent=1 // pred_fallthru
      _
    // Predicated region
    $region234: #{tpu_custom_call.1} parent=1 // pred_check
      _
    $region235: #{tpu_custom_call.1} parent=1 // pred_check_branch
      %596 = sbr.rel (0) target = $region237
    $region236: #{tpu_custom_call.1} parent=1 // pred_region
      %598 = dma.done [#allocation27], 2048
    $region237: #{tpu_custom_call.1} parent=1 // pred_fallthru
      _
    // Predicated region
    $region238: #{tpu_custom_call.1} parent=1 // pred_check
      _
    $region239: #{tpu_custom_call.1} parent=1 // pred_check_branch
      %600 = sbr.rel (0) target = $region241
    $region240: #{tpu_custom_call.1} parent=1 // pred_region
      %602 = dma.done [#allocation27], 16
    $region241: #{tpu_custom_call.1} parent=1 // pred_fallthru
      _
    // Predicated region
    $region242: #{tpu_custom_call.1} parent=1 // pred_check
      _
    $region243: #{tpu_custom_call.1} parent=1 // pred_check_branch
      %604 = sbr.rel (0) target = $region245
    $region244: #{tpu_custom_call.1} parent=1 // pred_region
      %606 = dma.done [#allocation30], 2048
    $region245: #{tpu_custom_call.1} parent=1 // pred_fallthru
      _
    // Predicated region
    $region246: #{tpu_custom_call.1} parent=1 // pred_check
      _
    $region247: #{tpu_custom_call.1} parent=1 // pred_check_branch
      %608 = sbr.rel (0) target = $region249
    $region248: #{tpu_custom_call.1} parent=1 // pred_region
      %610 = dma.done [#allocation30], 16
    $region249: #{tpu_custom_call.1} parent=1 // pred_fallthru
      _
    // Predicated region
    $region250: #{tpu_custom_call.1} parent=1 // pred_check
      _
    $region251: #{tpu_custom_call.1} parent=1 // pred_check_branch
      %612 = sbr.rel (0) target = $region253
    $region252: #{tpu_custom_call.1} parent=1 // pred_region
      %614 = dma.done [#allocation33], 2048
    $region253: #{tpu_custom_call.1} parent=1 // pred_fallthru
      _
    // Predicated region
    $region254: #{tpu_custom_call.1} parent=1 // pred_check
      _
    $region255: #{tpu_custom_call.1} parent=1 // pred_check_branch
      %616 = sbr.rel (0) target = $region257
    $region256: #{tpu_custom_call.1} parent=1 // pred_region
      %618 = dma.done [#allocation33], 16
    $region257: #{tpu_custom_call.1} parent=1 // pred_fallthru
      _
    // Predicated region
    $region258: #{tpu_custom_call.1} parent=1 // pred_check
      _
    $region259: #{tpu_custom_call.1} parent=1 // pred_check_branch
      %620 = sbr.rel (0) target = $region261
    $region260: #{tpu_custom_call.1} parent=1 // pred_region
      %622 = dma.done [#allocation36], 4096
    $region261: #{tpu_custom_call.1} parent=1 // pred_fallthru
      _
    // Predicated region
    $region262: #{tpu_custom_call.1} parent=1 // pred_check
      _
    $region263: #{tpu_custom_call.1} parent=1 // pred_check_branch
      %624 = sbr.rel (0) target = $region265
    $region264: #{tpu_custom_call.1} parent=1 // pred_region
      %626 = dma.done [#allocation36], 32
    $region265: #{tpu_custom_call.1} parent=1 // pred_fallthru
      _
    // Predicated region
    $region266: #{tpu_custom_call.1} parent=1 // pred_check
      _
    $region267: #{tpu_custom_call.1} parent=1 // pred_check_branch
      %628 = sbr.rel (0) target = $region269
    $region268: #{tpu_custom_call.1} parent=1 // pred_region
      %630 = dma.done [#allocation39], 8192
    $region269: #{tpu_custom_call.1} parent=1 // pred_fallthru
      _
    // Predicated region
    $region270: #{tpu_custom_call.1} parent=1 // pred_check
      _
    $region271: #{tpu_custom_call.1} parent=1 // pred_check_branch
      %632 = sbr.rel (0) target = $region273
    $region272: #{tpu_custom_call.1} parent=1 // pred_region
      %634 = dma.done [#allocation39], 4096
    $region273: #{tpu_custom_call.1} parent=1 // pred_fallthru
      _
    // Predicated region
    $region274: #{tpu_custom_call.1} parent=1 // pred_check
      _
    $region275: #{tpu_custom_call.1} parent=1 // pred_check_branch
      %636 = sbr.rel (0) target = $region277
    $region276: #{tpu_custom_call.1} parent=1 // pred_region
      %638 = dma.done [#allocation42], 8192
    $region277: #{tpu_custom_call.1} parent=1 // pred_fallthru
      _
    // Predicated region
    $region278: #{tpu_custom_call.1} parent=1 // pred_check
      _
    $region279: #{tpu_custom_call.1} parent=1 // pred_check_branch
      %640 = sbr.rel (0) target = $region281
    $region280: #{tpu_custom_call.1} parent=1 // pred_region
      %642 = dma.done [#allocation42], 8192
    $region281: #{tpu_custom_call.1} parent=1 // pred_fallthru
      _
    // Predicated region
    $region282: #{tpu_custom_call.1} parent=1 // pred_check
      _
    $region283: #{tpu_custom_call.1} parent=1 // pred_check_branch
      %644 = sbr.rel (0) target = $region285
    $region284: #{tpu_custom_call.1} parent=1 // pred_region
      %646 = dma.done [#allocation45], 16384
    $region285: #{tpu_custom_call.1} parent=1 // pred_fallthru
      _
    // Predicated region
    $region286: #{tpu_custom_call.1} parent=1 // pred_check
      _
    $region287: #{tpu_custom_call.1} parent=1 // pred_check_branch
      %648 = sbr.rel (0) target = $region289
    $region288: #{tpu_custom_call.1} parent=1 // pred_region
      %650 = dma.done [#allocation45], 32768
    $region289: #{tpu_custom_call.1} parent=1 // pred_fallthru
      _
    // Predicated region
    $region290: #{tpu_custom_call.1} parent=1 // pred_check
      _
    $region291: #{tpu_custom_call.1} parent=1 // pred_check_branch
      %652 = sbr.rel (0) target = $region293
    $region292: #{tpu_custom_call.1} parent=1 // pred_region
      %654 = dma.done [#allocation48], 16384
    $region293: #{tpu_custom_call.1} parent=1 // pred_fallthru
      _
    // Predicated region
    $region294: #{tpu_custom_call.1} parent=1 // pred_check
      _
    $region295: #{tpu_custom_call.1} parent=1 // pred_check_branch
      %656 = sbr.rel (0) target = $region297
    $region296: #{tpu_custom_call.1} parent=1 // pred_region
      %658 = dma.done [#allocation48], 32768
    $region297: #{tpu_custom_call.1} parent=1 // pred_fallthru
      _
    // Predicated region
    $region298: #{tpu_custom_call.1} parent=1 // pred_check
      _
    $region299: #{tpu_custom_call.1} parent=1 // pred_check_branch
      %660 = sbr.rel (0) target = $region301
    $region300: #{tpu_custom_call.1} parent=1 // pred_region
      %662 = dma.done [#allocation51], 32768
    $region301: #{tpu_custom_call.1} parent=1 // pred_fallthru
      _
    // Predicated region
    $region302: #{tpu_custom_call.1} parent=1 // pred_check
      _
    $region303: #{tpu_custom_call.1} parent=1 // pred_check_branch
      %664 = sbr.rel (0) target = $region305
    $region304: #{tpu_custom_call.1} parent=1 // pred_region
      %666 = dma.done [#allocation51], 8192
    $region305: #{tpu_custom_call.1} parent=1 // pred_fallthru
      _
    %v667 = vld [vmem:[#allocation2] sm:$0xff]
    %v668 = vld [vmem:[#allocation5] sm:$0xff]
    %v669 = vld [vmem:[#allocation5 + $0x8] sm:$0xff]
    %v670 = vld [vmem:[#allocation5 + $0x10] sm:$0xff]
    %v671 = vld [vmem:[#allocation5 + $0x18] sm:$0xff]
    %v672 = vld [vmem:[#allocation5 + $0x20] sm:$0xff]
    %v673 = vld [vmem:[#allocation5 + $0x28] sm:$0xff]
    %v674 = vld [vmem:[#allocation5 + $0x30] sm:$0xff]
    %v675 = vld [vmem:[#allocation5 + $0x38] sm:$0xff]
    %v676 = vld [vmem:[#allocation5 + $0x40] sm:$0xff]
    %v677 = vld [vmem:[#allocation5 + $0x48] sm:$0xff]
    %v678 = vld [vmem:[#allocation5 + $0x50] sm:$0xff]
    %v679 = vld [vmem:[#allocation5 + $0x58] sm:$0xff]
    %v680 = vld [vmem:[#allocation5 + $0x60] sm:$0xff]
    %v681 = vld [vmem:[#allocation5 + $0x68] sm:$0xff]
    %v682 = vld [vmem:[#allocation5 + $0x70] sm:$0xff]
    %v683 = vld [vmem:[#allocation5 + $0x78] sm:$0xff]
    %v684 = vld [vmem:[#allocation7] sm:$0x1]
    %v686 = vperm.slane %v684, 0
    %688 = vmatpush.msra.mxu0 %v683
    %689 = vmatpush.msra.mxu0 %v682
    %690 = vmatpush.msra.mxu0 %v681
    %691 = vmatpush.msra.mxu0 %v680
    %692 = vmatpush.msra.mxu0 %v679
    %693 = vmatpush.msra.mxu0 %v678
    %694 = vmatpush.msra.mxu0 %v677
    %695 = vmatpush.msra.mxu0 %v676
    %696 = vmatpush.msra.mxu0 %v675
    %697 = vmatpush.msra.mxu0 %v674
    %698 = vmatpush.msra.mxu0 %v673
    %699 = vmatpush.msra.mxu0 %v672
    %700 = vmatpush.msra.mxu0 %v671
    %701 = vmatpush.msra.mxu0 %v670
    %702 = vmatpush.msra.mxu0 %v669
    %703 = vmatpush.msra.mxu0 %v668
    %704 = vmatmul.f32.gmra.mxu0 %v667
    %v705 = vpop.f32.mrf.mxu0
    %v706 = vadd.f32 %v686, %v705
    %707 = vdwg.mxu0
    %v708 = vmax.f32 %v706, 0.0
    %v709 = vld [vmem:[#allocation8] sm:$0xff]
    %v710 = vld [vmem:[#allocation8 + $0x8] sm:$0xff]
    %v711 = vld [vmem:[#allocation8 + $0x10] sm:$0xff]
    %v712 = vld [vmem:[#allocation8 + $0x18] sm:$0xff]
    %v713 = vld [vmem:[#allocation8 + $0x20] sm:$0xff]
    %v714 = vld [vmem:[#allocation8 + $0x28] sm:$0xff]
    %v715 = vld [vmem:[#allocation8 + $0x30] sm:$0xff]
    %v716 = vld [vmem:[#allocation8 + $0x38] sm:$0xff]
    %v717 = vld [vmem:[#allocation8 + $0x40] sm:$0xff]
    %v718 = vld [vmem:[#allocation8 + $0x48] sm:$0xff]
    %v719 = vld [vmem:[#allocation8 + $0x50] sm:$0xff]
    %v720 = vld [vmem:[#allocation8 + $0x58] sm:$0xff]
    %v721 = vld [vmem:[#allocation8 + $0x60] sm:$0xff]
    %v722 = vld [vmem:[#allocation8 + $0x68] sm:$0xff]
    %v723 = vld [vmem:[#allocation8 + $0x70] sm:$0xff]
    %v724 = vld [vmem:[#allocation8 + $0x78] sm:$0xff]
    %v725 = vld [vmem:[#allocation10] sm:$0x1]
    %v727 = vperm.slane %v725, 0
    %729 = vmatpush.msra.mxu0 %v724
    %730 = vmatpush.msra.mxu0 %v723
    %731 = vmatpush.msra.mxu0 %v722
    %732 = vmatpush.msra.mxu0 %v721
    %733 = vmatpush.msra.mxu0 %v720
    %734 = vmatpush.msra.mxu0 %v719
    %735 = vmatpush.msra.mxu0 %v718
    %736 = vmatpush.msra.mxu0 %v717
    %737 = vmatpush.msra.mxu0 %v716
    %738 = vmatpush.msra.mxu0 %v715
    %739 = vmatpush.msra.mxu0 %v714
    %740 = vmatpush.msra.mxu0 %v713
    %741 = vmatpush.msra.mxu0 %v712
    %742 = vmatpush.msra.mxu0 %v711
    %743 = vmatpush.msra.mxu0 %v710
    %744 = vmatpush.msra.mxu0 %v709
    %745 = vmatmul.f32.gmra.mxu0 %v708
    %v746 = vpop.f32.mrf.mxu0
    %v747 = vadd.f32 %v727, %v746
    %748 = vdwg.mxu0
    %v749 = vmax.f32 %v747, 0.0
    %v750 = vld [vmem:[#allocation11] sm:$0xff]
    %v751 = vld [vmem:[#allocation11 + $0x8] sm:$0xff]
    %v752 = vld [vmem:[#allocation11 + $0x10] sm:$0xff]
    %v753 = vld [vmem:[#allocation11 + $0x18] sm:$0xff]
    %v754 = vld [vmem:[#allocation11 + $0x20] sm:$0xff]
    %v755 = vld [vmem:[#allocation11 + $0x28] sm:$0xff]
    %v756 = vld [vmem:[#allocation11 + $0x30] sm:$0xff]
    %v757 = vld [vmem:[#allocation11 + $0x38] sm:$0xff]
    %v758 = vld [vmem:[#allocation11 + $0x40] sm:$0xff]
    %v759 = vld [vmem:[#allocation11 + $0x48] sm:$0xff]
    %v760 = vld [vmem:[#allocation11 + $0x50] sm:$0xff]
    %v761 = vld [vmem:[#allocation11 + $0x58] sm:$0xff]
    %v762 = vld [vmem:[#allocation11 + $0x60] sm:$0xff]
    %v763 = vld [vmem:[#allocation11 + $0x68] sm:$0xff]
    %v764 = vld [vmem:[#allocation11 + $0x70] sm:$0xff]
    %v765 = vld [vmem:[#allocation11 + $0x78] sm:$0xff]
    %v766 = vld [vmem:[#allocation13] sm:$0x1]
    %v768 = vperm.slane %v766, 0
    %770 = vmatpush.msra.mxu0 %v765
    %771 = vmatpush.msra.mxu0 %v764
    %772 = vmatpush.msra.mxu0 %v763
    %773 = vmatpush.msra.mxu0 %v762
    %774 = vmatpush.msra.mxu0 %v761
    %775 = vmatpush.msra.mxu0 %v760
    %776 = vmatpush.msra.mxu0 %v759
    %777 = vmatpush.msra.mxu0 %v758
    %778 = vmatpush.msra.mxu0 %v757
    %779 = vmatpush.msra.mxu0 %v756
    %780 = vmatpush.msra.mxu0 %v755
    %781 = vmatpush.msra.mxu0 %v754
    %782 = vmatpush.msra.mxu0 %v753
    %783 = vmatpush.msra.mxu0 %v752
    %784 = vmatpush.msra.mxu0 %v751
    %785 = vmatpush.msra.mxu0 %v750
    %786 = vmatmul.f32.gmra.mxu0 %v749
    %v787 = vpop.f32.mrf.mxu0
    %v788 = vadd.f32 %v768, %v787
    %789 = vdwg.mxu0
    %v790 = vadd.f32 %v788, %v708
    %v791 = vmax.f32 %v790, 0.0
    %v792 = vld [vmem:[#allocation14] sm:$0xff]
    %v793 = vld [vmem:[#allocation14 + $0x8] sm:$0xff]
    %v794 = vld [vmem:[#allocation14 + $0x10] sm:$0xff]
    %v795 = vld [vmem:[#allocation14 + $0x18] sm:$0xff]
    %v796 = vld [vmem:[#allocation14 + $0x20] sm:$0xff]
    %v797 = vld [vmem:[#allocation14 + $0x28] sm:$0xff]
    %v798 = vld [vmem:[#allocation14 + $0x30] sm:$0xff]
    %v799 = vld [vmem:[#allocation14 + $0x38] sm:$0xff]
    %v800 = vld [vmem:[#allocation14 + $0x40] sm:$0xff]
    %v801 = vld [vmem:[#allocation14 + $0x48] sm:$0xff]
    %v802 = vld [vmem:[#allocation14 + $0x50] sm:$0xff]
    %v803 = vld [vmem:[#allocation14 + $0x58] sm:$0xff]
    %v804 = vld [vmem:[#allocation14 + $0x60] sm:$0xff]
    %v805 = vld [vmem:[#allocation14 + $0x68] sm:$0xff]
    %v806 = vld [vmem:[#allocation14 + $0x70] sm:$0xff]
    %v807 = vld [vmem:[#allocation14 + $0x78] sm:$0xff]
    %v808 = vld [vmem:[#allocation16] sm:$0x1]
    %v810 = vperm.slane %v808, 0
    %812 = vmatpush.msra.mxu0 %v807
    %813 = vmatpush.msra.mxu0 %v806
    %814 = vmatpush.msra.mxu0 %v805
    %815 = vmatpush.msra.mxu0 %v804
    %816 = vmatpush.msra.mxu0 %v803
    %817 = vmatpush.msra.mxu0 %v802
    %818 = vmatpush.msra.mxu0 %v801
    %819 = vmatpush.msra.mxu0 %v800
    %820 = vmatpush.msra.mxu0 %v799
    %821 = vmatpush.msra.mxu0 %v798
    %822 = vmatpush.msra.mxu0 %v797
    %823 = vmatpush.msra.mxu0 %v796
    %824 = vmatpush.msra.mxu0 %v795
    %825 = vmatpush.msra.mxu0 %v794
    %826 = vmatpush.msra.mxu0 %v793
    %827 = vmatpush.msra.mxu0 %v792
    %828 = vmatmul.f32.gmra.mxu0 %v791
    %v829 = vpop.f32.mrf.mxu0
    %v830 = vadd.f32 %v810, %v829
    %831 = vdwg.mxu0
    %v832 = vmax.f32 %v830, 0.0
    %v833 = vld [vmem:[#allocation17] sm:$0xff]
    %v834 = vld [vmem:[#allocation17 + $0x8] sm:$0xff]
    %v835 = vld [vmem:[#allocation17 + $0x10] sm:$0xff]
    %v836 = vld [vmem:[#allocation17 + $0x18] sm:$0xff]
    %v837 = vld [vmem:[#allocation17 + $0x20] sm:$0xff]
    %v838 = vld [vmem:[#allocation17 + $0x28] sm:$0xff]
    %v839 = vld [vmem:[#allocation17 + $0x30] sm:$0xff]
    %v840 = vld [vmem:[#allocation17 + $0x38] sm:$0xff]
    %v841 = vld [vmem:[#allocation17 + $0x40] sm:$0xff]
    %v842 = vld [vmem:[#allocation17 + $0x48] sm:$0xff]
    %v843 = vld [vmem:[#allocation17 + $0x50] sm:$0xff]
    %v844 = vld [vmem:[#allocation17 + $0x58] sm:$0xff]
    %v845 = vld [vmem:[#allocation17 + $0x60] sm:$0xff]
    %v846 = vld [vmem:[#allocation17 + $0x68] sm:$0xff]
    %v847 = vld [vmem:[#allocation17 + $0x70] sm:$0xff]
    %v848 = vld [vmem:[#allocation17 + $0x78] sm:$0xff]
    %v849 = vld [vmem:[#allocation19] sm:$0x1]
    %v851 = vperm.slane %v849, 0
    %853 = vmatpush.msra.mxu0 %v848
    %854 = vmatpush.msra.mxu0 %v847
    %855 = vmatpush.msra.mxu0 %v846
    %856 = vmatpush.msra.mxu0 %v845
    %857 = vmatpush.msra.mxu0 %v844
    %858 = vmatpush.msra.mxu0 %v843
    %859 = vmatpush.msra.mxu0 %v842
    %860 = vmatpush.msra.mxu0 %v841
    %861 = vmatpush.msra.mxu0 %v840
    %862 = vmatpush.msra.mxu0 %v839
    %863 = vmatpush.msra.mxu0 %v838
    %864 = vmatpush.msra.mxu0 %v837
    %865 = vmatpush.msra.mxu0 %v836
    %866 = vmatpush.msra.mxu0 %v835
    %867 = vmatpush.msra.mxu0 %v834
    %868 = vmatpush.msra.mxu0 %v833
    %869 = vmatmul.f32.gmra.mxu0 %v832
    %v870 = vpop.f32.mrf.mxu0
    %v871 = vadd.f32 %v851, %v870
    %872 = vdwg.mxu0
    %v873 = vadd.f32 %v871, %v791
    %v874 = vmax.f32 %v873, 0.0
    %v875 = vld [vmem:[#allocation20] sm:$0xff]
    %v876 = vld [vmem:[#allocation20 + $0x8] sm:$0xff]
    %v877 = vld [vmem:[#allocation20 + $0x10] sm:$0xff]
    %v878 = vld [vmem:[#allocation20 + $0x18] sm:$0xff]
    %v879 = vld [vmem:[#allocation20 + $0x20] sm:$0xff]
    %v880 = vld [vmem:[#allocation20 + $0x28] sm:$0xff]
    %v881 = vld [vmem:[#allocation20 + $0x30] sm:$0xff]
    %v882 = vld [vmem:[#allocation20 + $0x38] sm:$0xff]
    %v883 = vld [vmem:[#allocation20 + $0x40] sm:$0xff]
    %v884 = vld [vmem:[#allocation20 + $0x48] sm:$0xff]
    %v885 = vld [vmem:[#allocation20 + $0x50] sm:$0xff]
    %v886 = vld [vmem:[#allocation20 + $0x58] sm:$0xff]
    %v887 = vld [vmem:[#allocation20 + $0x60] sm:$0xff]
    %v888 = vld [vmem:[#allocation20 + $0x68] sm:$0xff]
    %v889 = vld [vmem:[#allocation20 + $0x70] sm:$0xff]
    %v890 = vld [vmem:[#allocation20 + $0x78] sm:$0xff]
    %v891 = vld [vmem:[#allocation22] sm:$0x1]
    %v893 = vperm.slane %v891, 0
    %895 = vmatpush.msra.mxu0 %v890
    %896 = vmatpush.msra.mxu0 %v889
    %897 = vmatpush.msra.mxu0 %v888
    %898 = vmatpush.msra.mxu0 %v887
    %899 = vmatpush.msra.mxu0 %v886
    %900 = vmatpush.msra.mxu0 %v885
    %901 = vmatpush.msra.mxu0 %v884
    %902 = vmatpush.msra.mxu0 %v883
    %903 = vmatpush.msra.mxu0 %v882
    %904 = vmatpush.msra.mxu0 %v881
    %905 = vmatpush.msra.mxu0 %v880
    %906 = vmatpush.msra.mxu0 %v879
    %907 = vmatpush.msra.mxu0 %v878
    %908 = vmatpush.msra.mxu0 %v877
    %909 = vmatpush.msra.mxu0 %v876
    %910 = vmatpush.msra.mxu0 %v875
    %911 = vmatmul.f32.gmra.mxu0 %v874
    %v912 = vpop.f32.mrf.mxu0
    %v913 = vadd.f32 %v893, %v912
    %914 = vdwg.mxu0
    %v915 = vmax.f32 %v913, 0.0
    %v916 = vld [vmem:[#allocation23] sm:$0xff]
    %v917 = vld [vmem:[#allocation23 + $0x8] sm:$0xff]
    %v918 = vld [vmem:[#allocation23 + $0x10] sm:$0xff]
    %v919 = vld [vmem:[#allocation23 + $0x18] sm:$0xff]
    %v920 = vld [vmem:[#allocation23 + $0x20] sm:$0xff]
    %v921 = vld [vmem:[#allocation23 + $0x28] sm:$0xff]
    %v922 = vld [vmem:[#allocation23 + $0x30] sm:$0xff]
    %v923 = vld [vmem:[#allocation23 + $0x38] sm:$0xff]
    %v924 = vld [vmem:[#allocation23 + $0x40] sm:$0xff]
    %v925 = vld [vmem:[#allocation23 + $0x48] sm:$0xff]
    %v926 = vld [vmem:[#allocation23 + $0x50] sm:$0xff]
    %v927 = vld [vmem:[#allocation23 + $0x58] sm:$0xff]
    %v928 = vld [vmem:[#allocation23 + $0x60] sm:$0xff]
    %v929 = vld [vmem:[#allocation23 + $0x68] sm:$0xff]
    %v930 = vld [vmem:[#allocation23 + $0x70] sm:$0xff]
    %v931 = vld [vmem:[#allocation23 + $0x78] sm:$0xff]
    %v932 = vld [vmem:[#allocation25] sm:$0x1]
    %v934 = vperm.slane %v932, 0
    %936 = vmatpush.msra.mxu0 %v931
    %937 = vmatpush.msra.mxu0 %v930
    %938 = vmatpush.msra.mxu0 %v929
    %939 = vmatpush.msra.mxu0 %v928
    %940 = vmatpush.msra.mxu0 %v927
    %941 = vmatpush.msra.mxu0 %v926
    %942 = vmatpush.msra.mxu0 %v925
    %943 = vmatpush.msra.mxu0 %v924
    %944 = vmatpush.msra.mxu0 %v923
    %945 = vmatpush.msra.mxu0 %v922
    %946 = vmatpush.msra.mxu0 %v921
    %947 = vmatpush.msra.mxu0 %v920
    %948 = vmatpush.msra.mxu0 %v919
    %949 = vmatpush.msra.mxu0 %v918
    %950 = vmatpush.msra.mxu0 %v917
    %951 = vmatpush.msra.mxu0 %v916
    %952 = vmatmul.f32.gmra.mxu0 %v915
    %v953 = vpop.f32.mrf.mxu0
    %v954 = vadd.f32 %v934, %v953
    %955 = vdwg.mxu0
    %v956 = vld [vmem:[#allocation26] sm:$0xff]
    %v957 = vld [vmem:[#allocation26 + $0x8] sm:$0xff]
    %v958 = vld [vmem:[#allocation26 + $0x10] sm:$0xff]
    %v959 = vld [vmem:[#allocation26 + $0x18] sm:$0xff]
    %v960 = vld [vmem:[#allocation26 + $0x20] sm:$0xff]
    %v961 = vld [vmem:[#allocation26 + $0x28] sm:$0xff]
    %v962 = vld [vmem:[#allocation26 + $0x30] sm:$0xff]
    %v963 = vld [vmem:[#allocation26 + $0x38] sm:$0xff]
    %v964 = vld [vmem:[#allocation26 + $0x40] sm:$0xff]
    %v965 = vld [vmem:[#allocation26 + $0x48] sm:$0xff]
    %v966 = vld [vmem:[#allocation26 + $0x50] sm:$0xff]
    %v967 = vld [vmem:[#allocation26 + $0x58] sm:$0xff]
    %v968 = vld [vmem:[#allocation26 + $0x60] sm:$0xff]
    %v969 = vld [vmem:[#allocation26 + $0x68] sm:$0xff]
    %v970 = vld [vmem:[#allocation26 + $0x70] sm:$0xff]
    %v971 = vld [vmem:[#allocation26 + $0x78] sm:$0xff]
    %v972 = vld [vmem:[#allocation28] sm:$0x1]
    %v974 = vperm.slane %v972, 0
    %976 = vmatpush.msra.mxu0 %v971
    %977 = vmatpush.msra.mxu0 %v970
    %978 = vmatpush.msra.mxu0 %v969
    %979 = vmatpush.msra.mxu0 %v968
    %980 = vmatpush.msra.mxu0 %v967
    %981 = vmatpush.msra.mxu0 %v966
    %982 = vmatpush.msra.mxu0 %v965
    %983 = vmatpush.msra.mxu0 %v964
    %984 = vmatpush.msra.mxu0 %v963
    %985 = vmatpush.msra.mxu0 %v962
    %986 = vmatpush.msra.mxu0 %v961
    %987 = vmatpush.msra.mxu0 %v960
    %988 = vmatpush.msra.mxu0 %v959
    %989 = vmatpush.msra.mxu0 %v958
    %990 = vmatpush.msra.mxu0 %v957
    %991 = vmatpush.msra.mxu0 %v956
    %992 = vmatmul.f32.gmra.mxu0 %v874
    %v993 = vpop.f32.mrf.mxu0
    %v994 = vadd.f32 %v974, %v993
    %995 = vdwg.mxu0
    %v996 = vadd.f32 %v954, %v994
    %v997 = vmax.f32 %v996, 0.0
    %v998 = vld [vmem:[#allocation29] sm:$0xff]
    %v999 = vld [vmem:[#allocation29 + $0x8] sm:$0xff]
    %v1000 = vld [vmem:[#allocation29 + $0x10] sm:$0xff]
    %v1001 = vld [vmem:[#allocation29 + $0x18] sm:$0xff]
    %v1002 = vld [vmem:[#allocation29 + $0x20] sm:$0xff]
    %v1003 = vld [vmem:[#allocation29 + $0x28] sm:$0xff]
    %v1004 = vld [vmem:[#allocation29 + $0x30] sm:$0xff]
    %v1005 = vld [vmem:[#allocation29 + $0x38] sm:$0xff]
    %v1006 = vld [vmem:[#allocation29 + $0x40] sm:$0xff]
    %v1007 = vld [vmem:[#allocation29 + $0x48] sm:$0xff]
    %v1008 = vld [vmem:[#allocation29 + $0x50] sm:$0xff]
    %v1009 = vld [vmem:[#allocation29 + $0x58] sm:$0xff]
    %v1010 = vld [vmem:[#allocation29 + $0x60] sm:$0xff]
    %v1011 = vld [vmem:[#allocation29 + $0x68] sm:$0xff]
    %v1012 = vld [vmem:[#allocation29 + $0x70] sm:$0xff]
    %v1013 = vld [vmem:[#allocation29 + $0x78] sm:$0xff]
    %v1014 = vld [vmem:[#allocation31] sm:$0x1]
    %v1016 = vperm.slane %v1014, 0
    %1018 = vmatpush.msra.mxu0 %v1013
    %1019 = vmatpush.msra.mxu0 %v1012
    %1020 = vmatpush.msra.mxu0 %v1011
    %1021 = vmatpush.msra.mxu0 %v1010
    %1022 = vmatpush.msra.mxu0 %v1009
    %1023 = vmatpush.msra.mxu0 %v1008
    %1024 = vmatpush.msra.mxu0 %v1007
    %1025 = vmatpush.msra.mxu0 %v1006
    %1026 = vmatpush.msra.mxu0 %v1005
    %1027 = vmatpush.msra.mxu0 %v1004
    %1028 = vmatpush.msra.mxu0 %v1003
    %1029 = vmatpush.msra.mxu0 %v1002
    %1030 = vmatpush.msra.mxu0 %v1001
    %1031 = vmatpush.msra.mxu0 %v1000
    %1032 = vmatpush.msra.mxu0 %v999
    %1033 = vmatpush.msra.mxu0 %v998
    %1034 = vmatmul.f32.gmra.mxu0 %v997
    %v1035 = vpop.f32.mrf.mxu0
    %v1036 = vadd.f32 %v1016, %v1035
    %1037 = vdwg.mxu0
    %v1038 = vmax.f32 %v1036, 0.0
    %v1039 = vld [vmem:[#allocation32] sm:$0xff]
    %v1040 = vld [vmem:[#allocation32 + $0x8] sm:$0xff]
    %v1041 = vld [vmem:[#allocation32 + $0x10] sm:$0xff]
    %v1042 = vld [vmem:[#allocation32 + $0x18] sm:$0xff]
    %v1043 = vld [vmem:[#allocation32 + $0x20] sm:$0xff]
    %v1044 = vld [vmem:[#allocation32 + $0x28] sm:$0xff]
    %v1045 = vld [vmem:[#allocation32 + $0x30] sm:$0xff]
    %v1046 = vld [vmem:[#allocation32 + $0x38] sm:$0xff]
    %v1047 = vld [vmem:[#allocation32 + $0x40] sm:$0xff]
    %v1048 = vld [vmem:[#allocation32 + $0x48] sm:$0xff]
    %v1049 = vld [vmem:[#allocation32 + $0x50] sm:$0xff]
    %v1050 = vld [vmem:[#allocation32 + $0x58] sm:$0xff]
    %v1051 = vld [vmem:[#allocation32 + $0x60] sm:$0xff]
    %v1052 = vld [vmem:[#allocation32 + $0x68] sm:$0xff]
    %v1053 = vld [vmem:[#allocation32 + $0x70] sm:$0xff]
    %v1054 = vld [vmem:[#allocation32 + $0x78] sm:$0xff]
    %v1055 = vld [vmem:[#allocation34] sm:$0x1]
    %v1057 = vperm.slane %v1055, 0
    %1059 = vmatpush.msra.mxu0 %v1054
    %1060 = vmatpush.msra.mxu0 %v1053
    %1061 = vmatpush.msra.mxu0 %v1052
    %1062 = vmatpush.msra.mxu0 %v1051
    %1063 = vmatpush.msra.mxu0 %v1050
    %1064 = vmatpush.msra.mxu0 %v1049
    %1065 = vmatpush.msra.mxu0 %v1048
    %1066 = vmatpush.msra.mxu0 %v1047
    %1067 = vmatpush.msra.mxu0 %v1046
    %1068 = vmatpush.msra.mxu0 %v1045
    %1069 = vmatpush.msra.mxu0 %v1044
    %1070 = vmatpush.msra.mxu0 %v1043
    %1071 = vmatpush.msra.mxu0 %v1042
    %1072 = vmatpush.msra.mxu0 %v1041
    %1073 = vmatpush.msra.mxu0 %v1040
    %1074 = vmatpush.msra.mxu0 %v1039
    %1075 = vmatmul.f32.gmra.mxu0 %v1038
    %v1076 = vpop.f32.mrf.mxu0
    %v1077 = vadd.f32 %v1057, %v1076
    %1078 = vdwg.mxu0
    %v1079 = vadd.f32 %v1077, %v997
    %v1080 = vmax.f32 %v1079, 0.0
    %v1081 = vld [vmem:[#allocation35] sm:$0xff]
    %v1082 = vld [vmem:[#allocation35 + $0x8] sm:$0xff]
    %v1083 = vld [vmem:[#allocation35 + $0x10] sm:$0xff]
    %v1084 = vld [vmem:[#allocation35 + $0x18] sm:$0xff]
    %v1085 = vld [vmem:[#allocation35 + $0x20] sm:$0xff]
    %v1086 = vld [vmem:[#allocation35 + $0x28] sm:$0xff]
    %v1087 = vld [vmem:[#allocation35 + $0x30] sm:$0xff]
    %v1088 = vld [vmem:[#allocation35 + $0x38] sm:$0xff]
    %v1089 = vld [vmem:[#allocation35 + $0x40] sm:$0xff]
    %v1090 = vld [vmem:[#allocation35 + $0x48] sm:$0xff]
    %v1091 = vld [vmem:[#allocation35 + $0x50] sm:$0xff]
    %v1092 = vld [vmem:[#allocation35 + $0x58] sm:$0xff]
    %v1093 = vld [vmem:[#allocation35 + $0x60] sm:$0xff]
    %v1094 = vld [vmem:[#allocation35 + $0x68] sm:$0xff]
    %v1095 = vld [vmem:[#allocation35 + $0x70] sm:$0xff]
    %v1096 = vld [vmem:[#allocation35 + $0x78] sm:$0xff]
    %v1097 = vld [vmem:[#allocation35 + $0x80] sm:$0xff]
    %v1098 = vld [vmem:[#allocation35 + $0x88] sm:$0xff]
    %v1099 = vld [vmem:[#allocation35 + $0x90] sm:$0xff]
    %v1100 = vld [vmem:[#allocation35 + $0x98] sm:$0xff]
    %v1101 = vld [vmem:[#allocation35 + $0xa0] sm:$0xff]
    %v1102 = vld [vmem:[#allocation35 + $0xa8] sm:$0xff]
    %v1103 = vld [vmem:[#allocation35 + $0xb0] sm:$0xff]
    %v1104 = vld [vmem:[#allocation35 + $0xb8] sm:$0xff]
    %v1105 = vld [vmem:[#allocation35 + $0xc0] sm:$0xff]
    %v1106 = vld [vmem:[#allocation35 + $0xc8] sm:$0xff]
    %v1107 = vld [vmem:[#allocation35 + $0xd0] sm:$0xff]
    %v1108 = vld [vmem:[#allocation35 + $0xd8] sm:$0xff]
    %v1109 = vld [vmem:[#allocation35 + $0xe0] sm:$0xff]
    %v1110 = vld [vmem:[#allocation35 + $0xe8] sm:$0xff]
    %v1111 = vld [vmem:[#allocation35 + $0xf0] sm:$0xff]
    %v1112 = vld [vmem:[#allocation35 + $0xf8] sm:$0xff]
    %v1113 = vld [vmem:[#allocation37] sm:$0x3]
    %v1115 = vperm.slane %v1113, 0
    %v1116 = vperm.slane %v1113, 1
    %1119 = vmatpush.msra.mxu0 %v1111
    %1120 = vmatpush.msra.mxu0 %v1109
    %1121 = vmatpush.msra.mxu0 %v1107
    %1122 = vmatpush.msra.mxu0 %v1105
    %1123 = vmatpush.msra.mxu0 %v1103
    %1124 = vmatpush.msra.mxu0 %v1101
    %1125 = vmatpush.msra.mxu0 %v1099
    %1126 = vmatpush.msra.mxu0 %v1097
    %1127 = vmatpush.msra.mxu0 %v1095
    %1128 = vmatpush.msra.mxu0 %v1093
    %1129 = vmatpush.msra.mxu0 %v1091
    %1130 = vmatpush.msra.mxu0 %v1089
    %1131 = vmatpush.msra.mxu0 %v1087
    %1132 = vmatpush.msra.mxu0 %v1085
    %1133 = vmatpush.msra.mxu0 %v1083
    %1134 = vmatpush.msra.mxu0 %v1081
    %1135 = vmatmul.f32.gmra.mxu0 %v1080
    %v1136 = vpop.f32.mrf.mxu0
    %v1137 = vadd.f32 %v1115, %v1136
    %1138 = vdwg.mxu0
    %1139 = vmatpush.msra.mxu0 %v1112
    %1140 = vmatpush.msra.mxu0 %v1110
    %1141 = vmatpush.msra.mxu0 %v1108
    %1142 = vmatpush.msra.mxu0 %v1106
    %1143 = vmatpush.msra.mxu0 %v1104
    %1144 = vmatpush.msra.mxu0 %v1102
    %1145 = vmatpush.msra.mxu0 %v1100
    %1146 = vmatpush.msra.mxu0 %v1098
    %1147 = vmatpush.msra.mxu0 %v1096
    %1148 = vmatpush.msra.mxu0 %v1094
    %1149 = vmatpush.msra.mxu0 %v1092
    %1150 = vmatpush.msra.mxu0 %v1090
    %1151 = vmatpush.msra.mxu0 %v1088
    %1152 = vmatpush.msra.mxu0 %v1086
    %1153 = vmatpush.msra.mxu0 %v1084
    %1154 = vmatpush.msra.mxu0 %v1082
    %1155 = vmatmul.f32.gmra.mxu0 %v1080
    %v1156 = vpop.f32.mrf.mxu0
    %v1157 = vadd.f32 %v1116, %v1156
    %1158 = vdwg.mxu0
    %v1159 = vmax.f32 %v1137, 0.0
    %v1160 = vmax.f32 %v1157, 0.0
    %v1161 = vld [vmem:[#allocation38] sm:$0xff]
    %v1162 = vld [vmem:[#allocation38 + $0x8] sm:$0xff]
    %v1163 = vld [vmem:[#allocation38 + $0x10] sm:$0xff]
    %v1164 = vld [vmem:[#allocation38 + $0x18] sm:$0xff]
    %v1165 = vld [vmem:[#allocation38 + $0x20] sm:$0xff]
    %v1166 = vld [vmem:[#allocation38 + $0x28] sm:$0xff]
    %v1167 = vld [vmem:[#allocation38 + $0x30] sm:$0xff]
    %v1168 = vld [vmem:[#allocation38 + $0x38] sm:$0xff]
    %v1169 = vld [vmem:[#allocation38 + $0x40] sm:$0xff]
    %v1170 = vld [vmem:[#allocation38 + $0x48] sm:$0xff]
    %v1171 = vld [vmem:[#allocation38 + $0x50] sm:$0xff]
    %v1172 = vld [vmem:[#allocation38 + $0x58] sm:$0xff]
    %v1173 = vld [vmem:[#allocation38 + $0x60] sm:$0xff]
    %v1174 = vld [vmem:[#allocation38 + $0x68] sm:$0xff]
    %v1175 = vld [vmem:[#allocation38 + $0x70] sm:$0xff]
    %v1176 = vld [vmem:[#allocation38 + $0x78] sm:$0xff]
    %v1177 = vld [vmem:[#allocation38 + $0x80] sm:$0xff]
    %v1178 = vld [vmem:[#allocation38 + $0x88] sm:$0xff]
    %v1179 = vld [vmem:[#allocation38 + $0x90] sm:$0xff]
    %v1180 = vld [vmem:[#allocation38 + $0x98] sm:$0xff]
    %v1181 = vld [vmem:[#allocation38 + $0xa0] sm:$0xff]
    %v1182 = vld [vmem:[#allocation38 + $0xa8] sm:$0xff]
    %v1183 = vld [vmem:[#allocation38 + $0xb0] sm:$0xff]
    %v1184 = vld [vmem:[#allocation38 + $0xb8] sm:$0xff]
    %v1185 = vld [vmem:[#allocation38 + $0xc0] sm:$0xff]
    %v1186 = vld [vmem:[#allocation38 + $0xc8] sm:$0xff]
    %v1187 = vld [vmem:[#allocation38 + $0xd0] sm:$0xff]
    %v1188 = vld [vmem:[#allocation38 + $0xd8] sm:$0xff]
    %v1189 = vld [vmem:[#allocation38 + $0xe0] sm:$0xff]
    %v1190 = vld [vmem:[#allocation38 + $0xe8] sm:$0xff]
    %v1191 = vld [vmem:[#allocation38 + $0xf0] sm:$0xff]
    %v1192 = vld [vmem:[#allocation38 + $0xf8] sm:$0xff]
    %v1193 = vld [vmem:[#allocation38 + $0x100] sm:$0xff]
    %v1194 = vld [vmem:[#allocation38 + $0x108] sm:$0xff]
    %v1195 = vld [vmem:[#allocation38 + $0x110] sm:$0xff]
    %v1196 = vld [vmem:[#allocation38 + $0x118] sm:$0xff]
    %v1197 = vld [vmem:[#allocation38 + $0x120] sm:$0xff]
    %v1198 = vld [vmem:[#allocation38 + $0x128] sm:$0xff]
    %v1199 = vld [vmem:[#allocation38 + $0x130] sm:$0xff]
    %v1200 = vld [vmem:[#allocation38 + $0x138] sm:$0xff]
    %v1201 = vld [vmem:[#allocation38 + $0x140] sm:$0xff]
    %v1202 = vld [vmem:[#allocation38 + $0x148] sm:$0xff]
    %v1203 = vld [vmem:[#allocation38 + $0x150] sm:$0xff]
    %v1204 = vld [vmem:[#allocation38 + $0x158] sm:$0xff]
    %v1205 = vld [vmem:[#allocation38 + $0x160] sm:$0xff]
    %v1206 = vld [vmem:[#allocation38 + $0x168] sm:$0xff]
    %v1207 = vld [vmem:[#allocation38 + $0x170] sm:$0xff]
    %v1208 = vld [vmem:[#allocation38 + $0x178] sm:$0xff]
    %v1209 = vld [vmem:[#allocation38 + $0x180] sm:$0xff]
    %v1210 = vld [vmem:[#allocation38 + $0x188] sm:$0xff]
    %v1211 = vld [vmem:[#allocation38 + $0x190] sm:$0xff]
    %v1212 = vld [vmem:[#allocation38 + $0x198] sm:$0xff]
    %v1213 = vld [vmem:[#allocation38 + $0x1a0] sm:$0xff]
    %v1214 = vld [vmem:[#allocation38 + $0x1a8] sm:$0xff]
    %v1215 = vld [vmem:[#allocation38 + $0x1b0] sm:$0xff]
    %v1216 = vld [vmem:[#allocation38 + $0x1b8] sm:$0xff]
    %v1217 = vld [vmem:[#allocation38 + $0x1c0] sm:$0xff]
    %v1218 = vld [vmem:[#allocation38 + $0x1c8] sm:$0xff]
    %v1219 = vld [vmem:[#allocation38 + $0x1d0] sm:$0xff]
    %v1220 = vld [vmem:[#allocation38 + $0x1d8] sm:$0xff]
    %v1221 = vld [vmem:[#allocation38 + $0x1e0] sm:$0xff]
    %v1222 = vld [vmem:[#allocation38 + $0x1e8] sm:$0xff]
    %v1223 = vld [vmem:[#allocation38 + $0x1f0] sm:$0xff]
    %v1224 = vld [vmem:[#allocation38 + $0x1f8] sm:$0xff]
    %v1225 = vld [vmem:[%s49] sm:$0x3]
    %v1227 = vperm.slane %v1225, 0
    %v1228 = vperm.slane %v1225, 1
    %1231 = vmatpush.msra.mxu0 %v1191
    %1232 = vmatpush.msra.mxu0 %v1189
    %1233 = vmatpush.msra.mxu0 %v1187
    %1234 = vmatpush.msra.mxu0 %v1185
    %1235 = vmatpush.msra.mxu0 %v1183
    %1236 = vmatpush.msra.mxu0 %v1181
    %1237 = vmatpush.msra.mxu0 %v1179
    %1238 = vmatpush.msra.mxu0 %v1177
    %1239 = vmatpush.msra.mxu0 %v1175
    %1240 = vmatpush.msra.mxu0 %v1173
    %1241 = vmatpush.msra.mxu0 %v1171
    %1242 = vmatpush.msra.mxu0 %v1169
    %1243 = vmatpush.msra.mxu0 %v1167
    %1244 = vmatpush.msra.mxu0 %v1165
    %1245 = vmatpush.msra.mxu0 %v1163
    %1246 = vmatpush.msra.mxu0 %v1161
    %1247 = vmatmul.f32.gmra.mxu0 %v1159
    %v1248 = vpop.f32.mrf.mxu0
    %v1249 = vadd.f32 %v1227, %v1248
    %1250 = vdwg.mxu0
    %1251 = vmatpush.msra.mxu0 %v1223
    %1252 = vmatpush.msra.mxu0 %v1221
    %1253 = vmatpush.msra.mxu0 %v1219
    %1254 = vmatpush.msra.mxu0 %v1217
    %1255 = vmatpush.msra.mxu0 %v1215
    %1256 = vmatpush.msra.mxu0 %v1213
    %1257 = vmatpush.msra.mxu0 %v1211
    %1258 = vmatpush.msra.mxu0 %v1209
    %1259 = vmatpush.msra.mxu0 %v1207
    %1260 = vmatpush.msra.mxu0 %v1205
    %1261 = vmatpush.msra.mxu0 %v1203
    %1262 = vmatpush.msra.mxu0 %v1201
    %1263 = vmatpush.msra.mxu0 %v1199
    %1264 = vmatpush.msra.mxu0 %v1197
    %1265 = vmatpush.msra.mxu0 %v1195
    %1266 = vmatpush.msra.mxu0 %v1193
    %1267 = vmatmul.f32.gmra.mxu0 %v1160
    %v1268 = vpop.f32.mrf.mxu0
    %v1269 = vadd.f32 %v1249, %v1268
    %1270 = vdwg.mxu0
    %1271 = vmatpush.msra.mxu0 %v1192
    %1272 = vmatpush.msra.mxu0 %v1190
    %1273 = vmatpush.msra.mxu0 %v1188
    %1274 = vmatpush.msra.mxu0 %v1186
    %1275 = vmatpush.msra.mxu0 %v1184
    %1276 = vmatpush.msra.mxu0 %v1182
    %1277 = vmatpush.msra.mxu0 %v1180
    %1278 = vmatpush.msra.mxu0 %v1178
    %1279 = vmatpush.msra.mxu0 %v1176
    %1280 = vmatpush.msra.mxu0 %v1174
    %1281 = vmatpush.msra.mxu0 %v1172
    %1282 = vmatpush.msra.mxu0 %v1170
    %1283 = vmatpush.msra.mxu0 %v1168
    %1284 = vmatpush.msra.mxu0 %v1166
    %1285 = vmatpush.msra.mxu0 %v1164
    %1286 = vmatpush.msra.mxu0 %v1162
    %1287 = vmatmul.f32.gmra.mxu0 %v1159
    %v1288 = vpop.f32.mrf.mxu0
    %v1289 = vadd.f32 %v1228, %v1288
    %1290 = vdwg.mxu0
    %1291 = vmatpush.msra.mxu0 %v1224
    %1292 = vmatpush.msra.mxu0 %v1222
    %1293 = vmatpush.msra.mxu0 %v1220
    %1294 = vmatpush.msra.mxu0 %v1218
    %1295 = vmatpush.msra.mxu0 %v1216
    %1296 = vmatpush.msra.mxu0 %v1214
    %1297 = vmatpush.msra.mxu0 %v1212
    %1298 = vmatpush.msra.mxu0 %v1210
    %1299 = vmatpush.msra.mxu0 %v1208
    %1300 = vmatpush.msra.mxu0 %v1206
    %1301 = vmatpush.msra.mxu0 %v1204
    %1302 = vmatpush.msra.mxu0 %v1202
    %1303 = vmatpush.msra.mxu0 %v1200
    %1304 = vmatpush.msra.mxu0 %v1198
    %1305 = vmatpush.msra.mxu0 %v1196
    %1306 = vmatpush.msra.mxu0 %v1194
    %1307 = vmatmul.f32.gmra.mxu0 %v1160
    %v1308 = vpop.f32.mrf.mxu0
    %v1309 = vadd.f32 %v1289, %v1308
    %1310 = vdwg.mxu0
    %v1311 = vld [vmem:[#allocation40] sm:$0xff]
    %v1312 = vld [vmem:[#allocation40 + $0x8] sm:$0xff]
    %v1313 = vld [vmem:[#allocation40 + $0x10] sm:$0xff]
    %v1314 = vld [vmem:[#allocation40 + $0x18] sm:$0xff]
    %v1315 = vld [vmem:[#allocation40 + $0x20] sm:$0xff]
    %v1316 = vld [vmem:[#allocation40 + $0x28] sm:$0xff]
    %v1317 = vld [vmem:[#allocation40 + $0x30] sm:$0xff]
    %v1318 = vld [vmem:[#allocation40 + $0x38] sm:$0xff]
    %v1319 = vld [vmem:[#allocation40 + $0x40] sm:$0xff]
    %v1320 = vld [vmem:[#allocation40 + $0x48] sm:$0xff]
    %v1321 = vld [vmem:[#allocation40 + $0x50] sm:$0xff]
    %v1322 = vld [vmem:[#allocation40 + $0x58] sm:$0xff]
    %v1323 = vld [vmem:[#allocation40 + $0x60] sm:$0xff]
    %v1324 = vld [vmem:[#allocation40 + $0x68] sm:$0xff]
    %v1325 = vld [vmem:[#allocation40 + $0x70] sm:$0xff]
    %v1326 = vld [vmem:[#allocation40 + $0x78] sm:$0xff]
    %v1327 = vld [vmem:[#allocation40 + $0x80] sm:$0xff]
    %v1328 = vld [vmem:[#allocation40 + $0x88] sm:$0xff]
    %v1329 = vld [vmem:[#allocation40 + $0x90] sm:$0xff]
    %v1330 = vld [vmem:[#allocation40 + $0x98] sm:$0xff]
    %v1331 = vld [vmem:[#allocation40 + $0xa0] sm:$0xff]
    %v1332 = vld [vmem:[#allocation40 + $0xa8] sm:$0xff]
    %v1333 = vld [vmem:[#allocation40 + $0xb0] sm:$0xff]
    %v1334 = vld [vmem:[#allocation40 + $0xb8] sm:$0xff]
    %v1335 = vld [vmem:[#allocation40 + $0xc0] sm:$0xff]
    %v1336 = vld [vmem:[#allocation40 + $0xc8] sm:$0xff]
    %v1337 = vld [vmem:[#allocation40 + $0xd0] sm:$0xff]
    %v1338 = vld [vmem:[#allocation40 + $0xd8] sm:$0xff]
    %v1339 = vld [vmem:[#allocation40 + $0xe0] sm:$0xff]
    %v1340 = vld [vmem:[#allocation40 + $0xe8] sm:$0xff]
    %v1341 = vld [vmem:[#allocation40 + $0xf0] sm:$0xff]
    %v1342 = vld [vmem:[#allocation40 + $0xf8] sm:$0xff]
    %v1343 = vld [vmem:[%s53] sm:$0x3]
    %v1345 = vperm.slane %v1343, 0
    %v1346 = vperm.slane %v1343, 1
    %1349 = vmatpush.msra.mxu0 %v1341
    %1350 = vmatpush.msra.mxu0 %v1339
    %1351 = vmatpush.msra.mxu0 %v1337
    %1352 = vmatpush.msra.mxu0 %v1335
    %1353 = vmatpush.msra.mxu0 %v1333
    %1354 = vmatpush.msra.mxu0 %v1331
    %1355 = vmatpush.msra.mxu0 %v1329
    %1356 = vmatpush.msra.mxu0 %v1327
    %1357 = vmatpush.msra.mxu0 %v1325
    %1358 = vmatpush.msra.mxu0 %v1323
    %1359 = vmatpush.msra.mxu0 %v1321
    %1360 = vmatpush.msra.mxu0 %v1319
    %1361 = vmatpush.msra.mxu0 %v1317
    %1362 = vmatpush.msra.mxu0 %v1315
    %1363 = vmatpush.msra.mxu0 %v1313
    %1364 = vmatpush.msra.mxu0 %v1311
    %1365 = vmatmul.f32.gmra.mxu0 %v1080
    %v1366 = vpop.f32.mrf.mxu0
    %v1367 = vadd.f32 %v1345, %v1366
    %1368 = vdwg.mxu0
    %1369 = vmatpush.msra.mxu0 %v1342
    %1370 = vmatpush.msra.mxu0 %v1340
    %1371 = vmatpush.msra.mxu0 %v1338
    %1372 = vmatpush.msra.mxu0 %v1336
    %1373 = vmatpush.msra.mxu0 %v1334
    %1374 = vmatpush.msra.mxu0 %v1332
    %1375 = vmatpush.msra.mxu0 %v1330
    %1376 = vmatpush.msra.mxu0 %v1328
    %1377 = vmatpush.msra.mxu0 %v1326
    %1378 = vmatpush.msra.mxu0 %v1324
    %1379 = vmatpush.msra.mxu0 %v1322
    %1380 = vmatpush.msra.mxu0 %v1320
    %1381 = vmatpush.msra.mxu0 %v1318
    %1382 = vmatpush.msra.mxu0 %v1316
    %1383 = vmatpush.msra.mxu0 %v1314
    %1384 = vmatpush.msra.mxu0 %v1312
    %1385 = vmatmul.f32.gmra.mxu0 %v1080
    %v1386 = vpop.f32.mrf.mxu0
    %v1387 = vadd.f32 %v1346, %v1386
    %1388 = vdwg.mxu0
    %v1389 = vadd.f32 %v1269, %v1367
    %v1390 = vadd.f32 %v1309, %v1387
    %v1391 = vmax.f32 %v1389, 0.0
    %v1392 = vmax.f32 %v1390, 0.0
    %v1393 = vld [vmem:[#allocation41] sm:$0xff]
    %v1394 = vld [vmem:[#allocation41 + $0x8] sm:$0xff]
    %v1395 = vld [vmem:[#allocation41 + $0x10] sm:$0xff]
    %v1396 = vld [vmem:[#allocation41 + $0x18] sm:$0xff]
    %v1397 = vld [vmem:[#allocation41 + $0x20] sm:$0xff]
    %v1398 = vld [vmem:[#allocation41 + $0x28] sm:$0xff]
    %v1399 = vld [vmem:[#allocation41 + $0x30] sm:$0xff]
    %v1400 = vld [vmem:[#allocation41 + $0x38] sm:$0xff]
    %v1401 = vld [vmem:[#allocation41 + $0x40] sm:$0xff]
    %v1402 = vld [vmem:[#allocation41 + $0x48] sm:$0xff]
    %v1403 = vld [vmem:[#allocation41 + $0x50] sm:$0xff]
    %v1404 = vld [vmem:[#allocation41 + $0x58] sm:$0xff]
    %v1405 = vld [vmem:[#allocation41 + $0x60] sm:$0xff]
    %v1406 = vld [vmem:[#allocation41 + $0x68] sm:$0xff]
    %v1407 = vld [vmem:[#allocation41 + $0x70] sm:$0xff]
    %v1408 = vld [vmem:[#allocation41 + $0x78] sm:$0xff]
    %v1409 = vld [vmem:[#allocation41 + $0x80] sm:$0xff]
    %v1410 = vld [vmem:[#allocation41 + $0x88] sm:$0xff]
    %v1411 = vld [vmem:[#allocation41 + $0x90] sm:$0xff]
    %v1412 = vld [vmem:[#allocation41 + $0x98] sm:$0xff]
    %v1413 = vld [vmem:[#allocation41 + $0xa0] sm:$0xff]
    %v1414 = vld [vmem:[#allocation41 + $0xa8] sm:$0xff]
    %v1415 = vld [vmem:[#allocation41 + $0xb0] sm:$0xff]
    %v1416 = vld [vmem:[#allocation41 + $0xb8] sm:$0xff]
    %v1417 = vld [vmem:[#allocation41 + $0xc0] sm:$0xff]
    %v1418 = vld [vmem:[#allocation41 + $0xc8] sm:$0xff]
    %v1419 = vld [vmem:[#allocation41 + $0xd0] sm:$0xff]
    %v1420 = vld [vmem:[#allocation41 + $0xd8] sm:$0xff]
    %v1421 = vld [vmem:[#allocation41 + $0xe0] sm:$0xff]
    %v1422 = vld [vmem:[#allocation41 + $0xe8] sm:$0xff]
    %v1423 = vld [vmem:[#allocation41 + $0xf0] sm:$0xff]
    %v1424 = vld [vmem:[#allocation41 + $0xf8] sm:$0xff]
    %v1425 = vld [vmem:[#allocation41 + $0x100] sm:$0xff]
    %v1426 = vld [vmem:[#allocation41 + $0x108] sm:$0xff]
    %v1427 = vld [vmem:[#allocation41 + $0x110] sm:$0xff]
    %v1428 = vld [vmem:[#allocation41 + $0x118] sm:$0xff]
    %v1429 = vld [vmem:[#allocation41 + $0x120] sm:$0xff]
    %v1430 = vld [vmem:[#allocation41 + $0x128] sm:$0xff]
    %v1431 = vld [vmem:[#allocation41 + $0x130] sm:$0xff]
    %v1432 = vld [vmem:[#allocation41 + $0x138] sm:$0xff]
    %v1433 = vld [vmem:[#allocation41 + $0x140] sm:$0xff]
    %v1434 = vld [vmem:[#allocation41 + $0x148] sm:$0xff]
    %v1435 = vld [vmem:[#allocation41 + $0x150] sm:$0xff]
    %v1436 = vld [vmem:[#allocation41 + $0x158] sm:$0xff]
    %v1437 = vld [vmem:[#allocation41 + $0x160] sm:$0xff]
    %v1438 = vld [vmem:[#allocation41 + $0x168] sm:$0xff]
    %v1439 = vld [vmem:[#allocation41 + $0x170] sm:$0xff]
    %v1440 = vld [vmem:[#allocation41 + $0x178] sm:$0xff]
    %v1441 = vld [vmem:[#allocation41 + $0x180] sm:$0xff]
    %v1442 = vld [vmem:[#allocation41 + $0x188] sm:$0xff]
    %v1443 = vld [vmem:[#allocation41 + $0x190] sm:$0xff]
    %v1444 = vld [vmem:[#allocation41 + $0x198] sm:$0xff]
    %v1445 = vld [vmem:[#allocation41 + $0x1a0] sm:$0xff]
    %v1446 = vld [vmem:[#allocation41 + $0x1a8] sm:$0xff]
    %v1447 = vld [vmem:[#allocation41 + $0x1b0] sm:$0xff]
    %v1448 = vld [vmem:[#allocation41 + $0x1b8] sm:$0xff]
    %v1449 = vld [vmem:[#allocation41 + $0x1c0] sm:$0xff]
    %v1450 = vld [vmem:[#allocation41 + $0x1c8] sm:$0xff]
    %v1451 = vld [vmem:[#allocation41 + $0x1d0] sm:$0xff]
    %v1452 = vld [vmem:[#allocation41 + $0x1d8] sm:$0xff]
    %v1453 = vld [vmem:[#allocation41 + $0x1e0] sm:$0xff]
    %v1454 = vld [vmem:[#allocation41 + $0x1e8] sm:$0xff]
    %v1455 = vld [vmem:[#allocation41 + $0x1f0] sm:$0xff]
    %v1456 = vld [vmem:[#allocation41 + $0x1f8] sm:$0xff]
    %v1457 = vld [vmem:[%s57] sm:$0x3]
    %v1459 = vperm.slane %v1457, 0
    %v1460 = vperm.slane %v1457, 1
    %1463 = vmatpush.msra.mxu0 %v1423
    %1464 = vmatpush.msra.mxu0 %v1421
    %1465 = vmatpush.msra.mxu0 %v1419
    %1466 = vmatpush.msra.mxu0 %v1417
    %1467 = vmatpush.msra.mxu0 %v1415
    %1468 = vmatpush.msra.mxu0 %v1413
    %1469 = vmatpush.msra.mxu0 %v1411
    %1470 = vmatpush.msra.mxu0 %v1409
    %1471 = vmatpush.msra.mxu0 %v1407
    %1472 = vmatpush.msra.mxu0 %v1405
    %1473 = vmatpush.msra.mxu0 %v1403
    %1474 = vmatpush.msra.mxu0 %v1401
    %1475 = vmatpush.msra.mxu0 %v1399
    %1476 = vmatpush.msra.mxu0 %v1397
    %1477 = vmatpush.msra.mxu0 %v1395
    %1478 = vmatpush.msra.mxu0 %v1393
    %1479 = vmatmul.f32.gmra.mxu0 %v1391
    %v1480 = vpop.f32.mrf.mxu0
    %v1481 = vadd.f32 %v1459, %v1480
    %1482 = vdwg.mxu0
    %1483 = vmatpush.msra.mxu0 %v1455
    %1484 = vmatpush.msra.mxu0 %v1453
    %1485 = vmatpush.msra.mxu0 %v1451
    %1486 = vmatpush.msra.mxu0 %v1449
    %1487 = vmatpush.msra.mxu0 %v1447
    %1488 = vmatpush.msra.mxu0 %v1445
    %1489 = vmatpush.msra.mxu0 %v1443
    %1490 = vmatpush.msra.mxu0 %v1441
    %1491 = vmatpush.msra.mxu0 %v1439
    %1492 = vmatpush.msra.mxu0 %v1437
    %1493 = vmatpush.msra.mxu0 %v1435
    %1494 = vmatpush.msra.mxu0 %v1433
    %1495 = vmatpush.msra.mxu0 %v1431
    %1496 = vmatpush.msra.mxu0 %v1429
    %1497 = vmatpush.msra.mxu0 %v1427
    %1498 = vmatpush.msra.mxu0 %v1425
    %1499 = vmatmul.f32.gmra.mxu0 %v1392
    %v1500 = vpop.f32.mrf.mxu0
    %v1501 = vadd.f32 %v1481, %v1500
    %1502 = vdwg.mxu0
    %1503 = vmatpush.msra.mxu0 %v1424
    %1504 = vmatpush.msra.mxu0 %v1422
    %1505 = vmatpush.msra.mxu0 %v1420
    %1506 = vmatpush.msra.mxu0 %v1418
    %1507 = vmatpush.msra.mxu0 %v1416
    %1508 = vmatpush.msra.mxu0 %v1414
    %1509 = vmatpush.msra.mxu0 %v1412
    %1510 = vmatpush.msra.mxu0 %v1410
    %1511 = vmatpush.msra.mxu0 %v1408
    %1512 = vmatpush.msra.mxu0 %v1406
    %1513 = vmatpush.msra.mxu0 %v1404
    %1514 = vmatpush.msra.mxu0 %v1402
    %1515 = vmatpush.msra.mxu0 %v1400
    %1516 = vmatpush.msra.mxu0 %v1398
    %1517 = vmatpush.msra.mxu0 %v1396
    %1518 = vmatpush.msra.mxu0 %v1394
    %1519 = vmatmul.f32.gmra.mxu0 %v1391
    %v1520 = vpop.f32.mrf.mxu0
    %v1521 = vadd.f32 %v1460, %v1520
    %1522 = vdwg.mxu0
    %1523 = vmatpush.msra.mxu0 %v1456
    %1524 = vmatpush.msra.mxu0 %v1454
    %1525 = vmatpush.msra.mxu0 %v1452
    %1526 = vmatpush.msra.mxu0 %v1450
    %1527 = vmatpush.msra.mxu0 %v1448
    %1528 = vmatpush.msra.mxu0 %v1446
    %1529 = vmatpush.msra.mxu0 %v1444
    %1530 = vmatpush.msra.mxu0 %v1442
    %1531 = vmatpush.msra.mxu0 %v1440
    %1532 = vmatpush.msra.mxu0 %v1438
    %1533 = vmatpush.msra.mxu0 %v1436
    %1534 = vmatpush.msra.mxu0 %v1434
    %1535 = vmatpush.msra.mxu0 %v1432
    %1536 = vmatpush.msra.mxu0 %v1430
    %1537 = vmatpush.msra.mxu0 %v1428
    %1538 = vmatpush.msra.mxu0 %v1426
    %1539 = vmatmul.f32.gmra.mxu0 %v1392
    %v1540 = vpop.f32.mrf.mxu0
    %v1541 = vadd.f32 %v1521, %v1540
    %1542 = vdwg.mxu0
    %v1543 = vmax.f32 %v1501, 0.0
    %v1544 = vmax.f32 %v1541, 0.0
    %v1545 = vld [vmem:[#allocation43] sm:$0xff]
    %v1546 = vld [vmem:[#allocation43 + $0x8] sm:$0xff]
    %v1547 = vld [vmem:[#allocation43 + $0x10] sm:$0xff]
    %v1548 = vld [vmem:[#allocation43 + $0x18] sm:$0xff]
    %v1549 = vld [vmem:[#allocation43 + $0x20] sm:$0xff]
    %v1550 = vld [vmem:[#allocation43 + $0x28] sm:$0xff]
    %v1551 = vld [vmem:[#allocation43 + $0x30] sm:$0xff]
    %v1552 = vld [vmem:[#allocation43 + $0x38] sm:$0xff]
    %v1553 = vld [vmem:[#allocation43 + $0x40] sm:$0xff]
    %v1554 = vld [vmem:[#allocation43 + $0x48] sm:$0xff]
    %v1555 = vld [vmem:[#allocation43 + $0x50] sm:$0xff]
    %v1556 = vld [vmem:[#allocation43 + $0x58] sm:$0xff]
    %v1557 = vld [vmem:[#allocation43 + $0x60] sm:$0xff]
    %v1558 = vld [vmem:[#allocation43 + $0x68] sm:$0xff]
    %v1559 = vld [vmem:[#allocation43 + $0x70] sm:$0xff]
    %v1560 = vld [vmem:[#allocation43 + $0x78] sm:$0xff]
    %v1561 = vld [vmem:[#allocation43 + $0x80] sm:$0xff]
    %v1562 = vld [vmem:[#allocation43 + $0x88] sm:$0xff]
    %v1563 = vld [vmem:[#allocation43 + $0x90] sm:$0xff]
    %v1564 = vld [vmem:[#allocation43 + $0x98] sm:$0xff]
    %v1565 = vld [vmem:[#allocation43 + $0xa0] sm:$0xff]
    %v1566 = vld [vmem:[#allocation43 + $0xa8] sm:$0xff]
    %v1567 = vld [vmem:[#allocation43 + $0xb0] sm:$0xff]
    %v1568 = vld [vmem:[#allocation43 + $0xb8] sm:$0xff]
    %v1569 = vld [vmem:[#allocation43 + $0xc0] sm:$0xff]
    %v1570 = vld [vmem:[#allocation43 + $0xc8] sm:$0xff]
    %v1571 = vld [vmem:[#allocation43 + $0xd0] sm:$0xff]
    %v1572 = vld [vmem:[#allocation43 + $0xd8] sm:$0xff]
    %v1573 = vld [vmem:[#allocation43 + $0xe0] sm:$0xff]
    %v1574 = vld [vmem:[#allocation43 + $0xe8] sm:$0xff]
    %v1575 = vld [vmem:[#allocation43 + $0xf0] sm:$0xff]
    %v1576 = vld [vmem:[#allocation43 + $0xf8] sm:$0xff]
    %v1577 = vld [vmem:[#allocation43 + $0x100] sm:$0xff]
    %v1578 = vld [vmem:[#allocation43 + $0x108] sm:$0xff]
    %v1579 = vld [vmem:[#allocation43 + $0x110] sm:$0xff]
    %v1580 = vld [vmem:[#allocation43 + $0x118] sm:$0xff]
    %v1581 = vld [vmem:[#allocation43 + $0x120] sm:$0xff]
    %v1582 = vld [vmem:[#allocation43 + $0x128] sm:$0xff]
    %v1583 = vld [vmem:[#allocation43 + $0x130] sm:$0xff]
    %v1584 = vld [vmem:[#allocation43 + $0x138] sm:$0xff]
    %v1585 = vld [vmem:[#allocation43 + $0x140] sm:$0xff]
    %v1586 = vld [vmem:[#allocation43 + $0x148] sm:$0xff]
    %v1587 = vld [vmem:[#allocation43 + $0x150] sm:$0xff]
    %v1588 = vld [vmem:[#allocation43 + $0x158] sm:$0xff]
    %v1589 = vld [vmem:[#allocation43 + $0x160] sm:$0xff]
    %v1590 = vld [vmem:[#allocation43 + $0x168] sm:$0xff]
    %v1591 = vld [vmem:[#allocation43 + $0x170] sm:$0xff]
    %v1592 = vld [vmem:[#allocation43 + $0x178] sm:$0xff]
    %v1593 = vld [vmem:[#allocation43 + $0x180] sm:$0xff]
    %v1594 = vld [vmem:[#allocation43 + $0x188] sm:$0xff]
    %v1595 = vld [vmem:[#allocation43 + $0x190] sm:$0xff]
    %v1596 = vld [vmem:[#allocation43 + $0x198] sm:$0xff]
    %v1597 = vld [vmem:[#allocation43 + $0x1a0] sm:$0xff]
    %v1598 = vld [vmem:[#allocation43 + $0x1a8] sm:$0xff]
    %v1599 = vld [vmem:[#allocation43 + $0x1b0] sm:$0xff]
    %v1600 = vld [vmem:[#allocation43 + $0x1b8] sm:$0xff]
    %v1601 = vld [vmem:[#allocation43 + $0x1c0] sm:$0xff]
    %v1602 = vld [vmem:[#allocation43 + $0x1c8] sm:$0xff]
    %v1603 = vld [vmem:[#allocation43 + $0x1d0] sm:$0xff]
    %v1604 = vld [vmem:[#allocation43 + $0x1d8] sm:$0xff]
    %v1605 = vld [vmem:[#allocation43 + $0x1e0] sm:$0xff]
    %v1606 = vld [vmem:[#allocation43 + $0x1e8] sm:$0xff]
    %v1607 = vld [vmem:[#allocation43 + $0x1f0] sm:$0xff]
    %v1608 = vld [vmem:[#allocation43 + $0x1f8] sm:$0xff]
    %v1609 = vld [vmem:[%s61] sm:$0x3]
    %v1611 = vperm.slane %v1609, 0
    %v1612 = vperm.slane %v1609, 1
    %1615 = vmatpush.msra.mxu0 %v1575
    %1616 = vmatpush.msra.mxu0 %v1573
    %1617 = vmatpush.msra.mxu0 %v1571
    %1618 = vmatpush.msra.mxu0 %v1569
    %1619 = vmatpush.msra.mxu0 %v1567
    %1620 = vmatpush.msra.mxu0 %v1565
    %1621 = vmatpush.msra.mxu0 %v1563
    %1622 = vmatpush.msra.mxu0 %v1561
    %1623 = vmatpush.msra.mxu0 %v1559
    %1624 = vmatpush.msra.mxu0 %v1557
    %1625 = vmatpush.msra.mxu0 %v1555
    %1626 = vmatpush.msra.mxu0 %v1553
    %1627 = vmatpush.msra.mxu0 %v1551
    %1628 = vmatpush.msra.mxu0 %v1549
    %1629 = vmatpush.msra.mxu0 %v1547
    %1630 = vmatpush.msra.mxu0 %v1545
    %1631 = vmatmul.f32.gmra.mxu0 %v1543
    %v1632 = vpop.f32.mrf.mxu0
    %v1633 = vadd.f32 %v1611, %v1632
    %1634 = vdwg.mxu0
    %1635 = vmatpush.msra.mxu0 %v1607
    %1636 = vmatpush.msra.mxu0 %v1605
    %1637 = vmatpush.msra.mxu0 %v1603
    %1638 = vmatpush.msra.mxu0 %v1601
    %1639 = vmatpush.msra.mxu0 %v1599
    %1640 = vmatpush.msra.mxu0 %v1597
    %1641 = vmatpush.msra.mxu0 %v1595
    %1642 = vmatpush.msra.mxu0 %v1593
    %1643 = vmatpush.msra.mxu0 %v1591
    %1644 = vmatpush.msra.mxu0 %v1589
    %1645 = vmatpush.msra.mxu0 %v1587
    %1646 = vmatpush.msra.mxu0 %v1585
    %1647 = vmatpush.msra.mxu0 %v1583
    %1648 = vmatpush.msra.mxu0 %v1581
    %1649 = vmatpush.msra.mxu0 %v1579
    %1650 = vmatpush.msra.mxu0 %v1577
    %1651 = vmatmul.f32.gmra.mxu0 %v1544
    %v1652 = vpop.f32.mrf.mxu0
    %v1653 = vadd.f32 %v1633, %v1652
    %1654 = vdwg.mxu0
    %1655 = vmatpush.msra.mxu0 %v1576
    %1656 = vmatpush.msra.mxu0 %v1574
    %1657 = vmatpush.msra.mxu0 %v1572
    %1658 = vmatpush.msra.mxu0 %v1570
    %1659 = vmatpush.msra.mxu0 %v1568
    %1660 = vmatpush.msra.mxu0 %v1566
    %1661 = vmatpush.msra.mxu0 %v1564
    %1662 = vmatpush.msra.mxu0 %v1562
    %1663 = vmatpush.msra.mxu0 %v1560
    %1664 = vmatpush.msra.mxu0 %v1558
    %1665 = vmatpush.msra.mxu0 %v1556
    %1666 = vmatpush.msra.mxu0 %v1554
    %1667 = vmatpush.msra.mxu0 %v1552
    %1668 = vmatpush.msra.mxu0 %v1550
    %1669 = vmatpush.msra.mxu0 %v1548
    %1670 = vmatpush.msra.mxu0 %v1546
    %1671 = vmatmul.f32.gmra.mxu0 %v1543
    %v1672 = vpop.f32.mrf.mxu0
    %v1673 = vadd.f32 %v1612, %v1672
    %1674 = vdwg.mxu0
    %1675 = vmatpush.msra.mxu0 %v1608
    %1676 = vmatpush.msra.mxu0 %v1606
    %1677 = vmatpush.msra.mxu0 %v1604
    %1678 = vmatpush.msra.mxu0 %v1602
    %1679 = vmatpush.msra.mxu0 %v1600
    %1680 = vmatpush.msra.mxu0 %v1598
    %1681 = vmatpush.msra.mxu0 %v1596
    %1682 = vmatpush.msra.mxu0 %v1594
    %1683 = vmatpush.msra.mxu0 %v1592
    %1684 = vmatpush.msra.mxu0 %v1590
    %1685 = vmatpush.msra.mxu0 %v1588
    %1686 = vmatpush.msra.mxu0 %v1586
    %1687 = vmatpush.msra.mxu0 %v1584
    %1688 = vmatpush.msra.mxu0 %v1582
    %1689 = vmatpush.msra.mxu0 %v1580
    %1690 = vmatpush.msra.mxu0 %v1578
    %1691 = vmatmul.f32.gmra.mxu0 %v1544
    %v1692 = vpop.f32.mrf.mxu0
    %v1693 = vadd.f32 %v1673, %v1692
    %1694 = vdwg.mxu0
    %v1695 = vadd.f32 %v1653, %v1391
    %v1696 = vadd.f32 %v1693, %v1392
    %v1697 = vmax.f32 %v1695, 0.0
    %v1698 = vmax.f32 %v1696, 0.0
    %v1699 = vld [vmem:[#allocation44] sm:$0xff]
    %v1700 = vld [vmem:[#allocation44 + $0x8] sm:$0xff]
    %v1701 = vld [vmem:[#allocation44 + $0x10] sm:$0xff]
    %v1702 = vld [vmem:[#allocation44 + $0x18] sm:$0xff]
    %v1703 = vld [vmem:[#allocation44 + $0x20] sm:$0xff]
    %v1704 = vld [vmem:[#allocation44 + $0x28] sm:$0xff]
    %v1705 = vld [vmem:[#allocation44 + $0x30] sm:$0xff]
    %v1706 = vld [vmem:[#allocation44 + $0x38] sm:$0xff]
    %v1707 = vld [vmem:[#allocation44 + $0x40] sm:$0xff]
    %v1708 = vld [vmem:[#allocation44 + $0x48] sm:$0xff]
    %v1709 = vld [vmem:[#allocation44 + $0x50] sm:$0xff]
    %v1710 = vld [vmem:[#allocation44 + $0x58] sm:$0xff]
    %v1711 = vld [vmem:[#allocation44 + $0x60] sm:$0xff]
    %v1712 = vld [vmem:[#allocation44 + $0x68] sm:$0xff]
    %v1713 = vld [vmem:[#allocation44 + $0x70] sm:$0xff]
    %v1714 = vld [vmem:[#allocation44 + $0x78] sm:$0xff]
    %v1715 = vld [vmem:[#allocation44 + $0x80] sm:$0xff]
    %v1716 = vld [vmem:[#allocation44 + $0x88] sm:$0xff]
    %v1717 = vld [vmem:[#allocation44 + $0x90] sm:$0xff]
    %v1718 = vld [vmem:[#allocation44 + $0x98] sm:$0xff]
    %v1719 = vld [vmem:[#allocation44 + $0xa0] sm:$0xff]
    %v1720 = vld [vmem:[#allocation44 + $0xa8] sm:$0xff]
    %v1721 = vld [vmem:[#allocation44 + $0xb0] sm:$0xff]
    %v1722 = vld [vmem:[#allocation44 + $0xb8] sm:$0xff]
    %v1723 = vld [vmem:[#allocation44 + $0xc0] sm:$0xff]
    %v1724 = vld [vmem:[#allocation44 + $0xc8] sm:$0xff]
    %v1725 = vld [vmem:[#allocation44 + $0xd0] sm:$0xff]
    %v1726 = vld [vmem:[#allocation44 + $0xd8] sm:$0xff]
    %v1727 = vld [vmem:[#allocation44 + $0xe0] sm:$0xff]
    %v1728 = vld [vmem:[#allocation44 + $0xe8] sm:$0xff]
    %v1729 = vld [vmem:[#allocation44 + $0xf0] sm:$0xff]
    %v1730 = vld [vmem:[#allocation44 + $0xf8] sm:$0xff]
    %v1731 = vld [vmem:[#allocation44 + $0x100] sm:$0xff]
    %v1732 = vld [vmem:[#allocation44 + $0x108] sm:$0xff]
    %v1733 = vld [vmem:[#allocation44 + $0x110] sm:$0xff]
    %v1734 = vld [vmem:[#allocation44 + $0x118] sm:$0xff]
    %v1735 = vld [vmem:[#allocation44 + $0x120] sm:$0xff]
    %v1736 = vld [vmem:[#allocation44 + $0x128] sm:$0xff]
    %v1737 = vld [vmem:[#allocation44 + $0x130] sm:$0xff]
    %v1738 = vld [vmem:[#allocation44 + $0x138] sm:$0xff]
    %v1739 = vld [vmem:[#allocation44 + $0x140] sm:$0xff]
    %v1740 = vld [vmem:[#allocation44 + $0x148] sm:$0xff]
    %v1741 = vld [vmem:[#allocation44 + $0x150] sm:$0xff]
    %v1742 = vld [vmem:[#allocation44 + $0x158] sm:$0xff]
    %v1743 = vld [vmem:[#allocation44 + $0x160] sm:$0xff]
    %v1744 = vld [vmem:[#allocation44 + $0x168] sm:$0xff]
    %v1745 = vld [vmem:[#allocation44 + $0x170] sm:$0xff]
    %v1746 = vld [vmem:[#allocation44 + $0x178] sm:$0xff]
    %v1747 = vld [vmem:[#allocation44 + $0x180] sm:$0xff]
    %v1748 = vld [vmem:[#allocation44 + $0x188] sm:$0xff]
    %v1749 = vld [vmem:[#allocation44 + $0x190] sm:$0xff]
    %v1750 = vld [vmem:[#allocation44 + $0x198] sm:$0xff]
    %v1751 = vld [vmem:[#allocation44 + $0x1a0] sm:$0xff]
    %v1752 = vld [vmem:[#allocation44 + $0x1a8] sm:$0xff]
    %v1753 = vld [vmem:[#allocation44 + $0x1b0] sm:$0xff]
    %v1754 = vld [vmem:[#allocation44 + $0x1b8] sm:$0xff]
    %v1755 = vld [vmem:[#allocation44 + $0x1c0] sm:$0xff]
    %v1756 = vld [vmem:[#allocation44 + $0x1c8] sm:$0xff]
    %v1757 = vld [vmem:[#allocation44 + $0x1d0] sm:$0xff]
    %v1758 = vld [vmem:[#allocation44 + $0x1d8] sm:$0xff]
    %v1759 = vld [vmem:[#allocation44 + $0x1e0] sm:$0xff]
    %v1760 = vld [vmem:[#allocation44 + $0x1e8] sm:$0xff]
    %v1761 = vld [vmem:[#allocation44 + $0x1f0] sm:$0xff]
    %v1762 = vld [vmem:[#allocation44 + $0x1f8] sm:$0xff]
    %v1763 = vld [vmem:[#allocation44 + $0x200] sm:$0xff]
    %v1764 = vld [vmem:[#allocation44 + $0x208] sm:$0xff]
    %v1765 = vld [vmem:[#allocation44 + $0x210] sm:$0xff]
    %v1766 = vld [vmem:[#allocation44 + $0x218] sm:$0xff]
    %v1767 = vld [vmem:[#allocation44 + $0x220] sm:$0xff]
    %v1768 = vld [vmem:[#allocation44 + $0x228] sm:$0xff]
    %v1769 = vld [vmem:[#allocation44 + $0x230] sm:$0xff]
    %v1770 = vld [vmem:[#allocation44 + $0x238] sm:$0xff]
    %v1771 = vld [vmem:[#allocation44 + $0x240] sm:$0xff]
    %v1772 = vld [vmem:[#allocation44 + $0x248] sm:$0xff]
    %v1773 = vld [vmem:[#allocation44 + $0x250] sm:$0xff]
    %v1774 = vld [vmem:[#allocation44 + $0x258] sm:$0xff]
    %v1775 = vld [vmem:[#allocation44 + $0x260] sm:$0xff]
    %v1776 = vld [vmem:[#allocation44 + $0x268] sm:$0xff]
    %v1777 = vld [vmem:[#allocation44 + $0x270] sm:$0xff]
    %v1778 = vld [vmem:[#allocation44 + $0x278] sm:$0xff]
    %v1779 = vld [vmem:[#allocation44 + $0x280] sm:$0xff]
    %v1780 = vld [vmem:[#allocation44 + $0x288] sm:$0xff]
    %v1781 = vld [vmem:[#allocation44 + $0x290] sm:$0xff]
    %v1782 = vld [vmem:[#allocation44 + $0x298] sm:$0xff]
    %v1783 = vld [vmem:[#allocation44 + $0x2a0] sm:$0xff]
    %v1784 = vld [vmem:[#allocation44 + $0x2a8] sm:$0xff]
    %v1785 = vld [vmem:[#allocation44 + $0x2b0] sm:$0xff]
    %v1786 = vld [vmem:[#allocation44 + $0x2b8] sm:$0xff]
    %v1787 = vld [vmem:[#allocation44 + $0x2c0] sm:$0xff]
    %v1788 = vld [vmem:[#allocation44 + $0x2c8] sm:$0xff]
    %v1789 = vld [vmem:[#allocation44 + $0x2d0] sm:$0xff]
    %v1790 = vld [vmem:[#allocation44 + $0x2d8] sm:$0xff]
    %v1791 = vld [vmem:[#allocation44 + $0x2e0] sm:$0xff]
    %v1792 = vld [vmem:[#allocation44 + $0x2e8] sm:$0xff]
    %v1793 = vld [vmem:[#allocation44 + $0x2f0] sm:$0xff]
    %v1794 = vld [vmem:[#allocation44 + $0x2f8] sm:$0xff]
    %v1795 = vld [vmem:[#allocation44 + $0x300] sm:$0xff]
    %v1796 = vld [vmem:[#allocation44 + $0x308] sm:$0xff]
    %v1797 = vld [vmem:[#allocation44 + $0x310] sm:$0xff]
    %v1798 = vld [vmem:[#allocation44 + $0x318] sm:$0xff]
    %v1799 = vld [vmem:[#allocation44 + $0x320] sm:$0xff]
    %v1800 = vld [vmem:[#allocation44 + $0x328] sm:$0xff]
    %v1801 = vld [vmem:[#allocation44 + $0x330] sm:$0xff]
    %v1802 = vld [vmem:[#allocation44 + $0x338] sm:$0xff]
    %v1803 = vld [vmem:[#allocation44 + $0x340] sm:$0xff]
    %v1804 = vld [vmem:[#allocation44 + $0x348] sm:$0xff]
    %v1805 = vld [vmem:[#allocation44 + $0x350] sm:$0xff]
    %v1806 = vld [vmem:[#allocation44 + $0x358] sm:$0xff]
    %v1807 = vld [vmem:[#allocation44 + $0x360] sm:$0xff]
    %v1808 = vld [vmem:[#allocation44 + $0x368] sm:$0xff]
    %v1809 = vld [vmem:[#allocation44 + $0x370] sm:$0xff]
    %v1810 = vld [vmem:[#allocation44 + $0x378] sm:$0xff]
    %v1811 = vld [vmem:[#allocation44 + $0x380] sm:$0xff]
    %v1812 = vld [vmem:[#allocation44 + $0x388] sm:$0xff]
    %v1813 = vld [vmem:[#allocation44 + $0x390] sm:$0xff]
    %v1814 = vld [vmem:[#allocation44 + $0x398] sm:$0xff]
    %v1815 = vld [vmem:[#allocation44 + $0x3a0] sm:$0xff]
    %v1816 = vld [vmem:[#allocation44 + $0x3a8] sm:$0xff]
    %v1817 = vld [vmem:[#allocation44 + $0x3b0] sm:$0xff]
    %v1818 = vld [vmem:[#allocation44 + $0x3b8] sm:$0xff]
    %v1819 = vld [vmem:[#allocation44 + $0x3c0] sm:$0xff]
    %v1820 = vld [vmem:[#allocation44 + $0x3c8] sm:$0xff]
    %v1821 = vld [vmem:[#allocation44 + $0x3d0] sm:$0xff]
    %v1822 = vld [vmem:[#allocation44 + $0x3d8] sm:$0xff]
    %v1823 = vld [vmem:[#allocation44 + $0x3e0] sm:$0xff]
    %v1824 = vld [vmem:[#allocation44 + $0x3e8] sm:$0xff]
    %v1825 = vld [vmem:[#allocation44 + $0x3f0] sm:$0xff]
    %v1826 = vld [vmem:[#allocation44 + $0x3f8] sm:$0xff]
    %v1827 = vld [vmem:[%s65] sm:$0xf]
    %v1829 = vperm.slane %v1827, 0
    %v1830 = vperm.slane %v1827, 1
    %v1831 = vperm.slane %v1827, 2
    %v1832 = vperm.slane %v1827, 3
    %1837 = vmatpush.msra.mxu0 %v1759
    %1838 = vmatpush.msra.mxu0 %v1755
    %1839 = vmatpush.msra.mxu0 %v1751
    %1840 = vmatpush.msra.mxu0 %v1747
    %1841 = vmatpush.msra.mxu0 %v1743
    %1842 = vmatpush.msra.mxu0 %v1739
    %1843 = vmatpush.msra.mxu0 %v1735
    %1844 = vmatpush.msra.mxu0 %v1731
    %1845 = vmatpush.msra.mxu0 %v1727
    %1846 = vmatpush.msra.mxu0 %v1723
    %1847 = vmatpush.msra.mxu0 %v1719
    %1848 = vmatpush.msra.mxu0 %v1715
    %1849 = vmatpush.msra.mxu0 %v1711
    %1850 = vmatpush.msra.mxu0 %v1707
    %1851 = vmatpush.msra.mxu0 %v1703
    %1852 = vmatpush.msra.mxu0 %v1699
    %1853 = vmatmul.f32.gmra.mxu0 %v1697
    %v1854 = vpop.f32.mrf.mxu0
    %v1855 = vadd.f32 %v1829, %v1854
    %1856 = vdwg.mxu0
    %1857 = vmatpush.msra.mxu0 %v1823
    %1858 = vmatpush.msra.mxu0 %v1819
    %1859 = vmatpush.msra.mxu0 %v1815
    %1860 = vmatpush.msra.mxu0 %v1811
    %1861 = vmatpush.msra.mxu0 %v1807
    %1862 = vmatpush.msra.mxu0 %v1803
    %1863 = vmatpush.msra.mxu0 %v1799
    %1864 = vmatpush.msra.mxu0 %v1795
    %1865 = vmatpush.msra.mxu0 %v1791
    %1866 = vmatpush.msra.mxu0 %v1787
    %1867 = vmatpush.msra.mxu0 %v1783
    %1868 = vmatpush.msra.mxu0 %v1779
    %1869 = vmatpush.msra.mxu0 %v1775
    %1870 = vmatpush.msra.mxu0 %v1771
    %1871 = vmatpush.msra.mxu0 %v1767
    %1872 = vmatpush.msra.mxu0 %v1763
    %1873 = vmatmul.f32.gmra.mxu0 %v1698
    %v1874 = vpop.f32.mrf.mxu0
    %v1875 = vadd.f32 %v1855, %v1874
    %1876 = vdwg.mxu0
    %1877 = vmatpush.msra.mxu0 %v1760
    %1878 = vmatpush.msra.mxu0 %v1756
    %1879 = vmatpush.msra.mxu0 %v1752
    %1880 = vmatpush.msra.mxu0 %v1748
    %1881 = vmatpush.msra.mxu0 %v1744
    %1882 = vmatpush.msra.mxu0 %v1740
    %1883 = vmatpush.msra.mxu0 %v1736
    %1884 = vmatpush.msra.mxu0 %v1732
    %1885 = vmatpush.msra.mxu0 %v1728
    %1886 = vmatpush.msra.mxu0 %v1724
    %1887 = vmatpush.msra.mxu0 %v1720
    %1888 = vmatpush.msra.mxu0 %v1716
    %1889 = vmatpush.msra.mxu0 %v1712
    %1890 = vmatpush.msra.mxu0 %v1708
    %1891 = vmatpush.msra.mxu0 %v1704
    %1892 = vmatpush.msra.mxu0 %v1700
    %1893 = vmatmul.f32.gmra.mxu0 %v1697
    %v1894 = vpop.f32.mrf.mxu0
    %v1895 = vadd.f32 %v1830, %v1894
    %1896 = vdwg.mxu0
    %1897 = vmatpush.msra.mxu0 %v1824
    %1898 = vmatpush.msra.mxu0 %v1820
    %1899 = vmatpush.msra.mxu0 %v1816
    %1900 = vmatpush.msra.mxu0 %v1812
    %1901 = vmatpush.msra.mxu0 %v1808
    %1902 = vmatpush.msra.mxu0 %v1804
    %1903 = vmatpush.msra.mxu0 %v1800
    %1904 = vmatpush.msra.mxu0 %v1796
    %1905 = vmatpush.msra.mxu0 %v1792
    %1906 = vmatpush.msra.mxu0 %v1788
    %1907 = vmatpush.msra.mxu0 %v1784
    %1908 = vmatpush.msra.mxu0 %v1780
    %1909 = vmatpush.msra.mxu0 %v1776
    %1910 = vmatpush.msra.mxu0 %v1772
    %1911 = vmatpush.msra.mxu0 %v1768
    %1912 = vmatpush.msra.mxu0 %v1764
    %1913 = vmatmul.f32.gmra.mxu0 %v1698
    %v1914 = vpop.f32.mrf.mxu0
    %v1915 = vadd.f32 %v1895, %v1914
    %1916 = vdwg.mxu0
    %1917 = vmatpush.msra.mxu0 %v1761
    %1918 = vmatpush.msra.mxu0 %v1757
    %1919 = vmatpush.msra.mxu0 %v1753
    %1920 = vmatpush.msra.mxu0 %v1749
    %1921 = vmatpush.msra.mxu0 %v1745
    %1922 = vmatpush.msra.mxu0 %v1741
    %1923 = vmatpush.msra.mxu0 %v1737
    %1924 = vmatpush.msra.mxu0 %v1733
    %1925 = vmatpush.msra.mxu0 %v1729
    %1926 = vmatpush.msra.mxu0 %v1725
    %1927 = vmatpush.msra.mxu0 %v1721
    %1928 = vmatpush.msra.mxu0 %v1717
    %1929 = vmatpush.msra.mxu0 %v1713
    %1930 = vmatpush.msra.mxu0 %v1709
    %1931 = vmatpush.msra.mxu0 %v1705
    %1932 = vmatpush.msra.mxu0 %v1701
    %1933 = vmatmul.f32.gmra.mxu0 %v1697
    %v1934 = vpop.f32.mrf.mxu0
    %v1935 = vadd.f32 %v1831, %v1934
    %1936 = vdwg.mxu0
    %1937 = vmatpush.msra.mxu0 %v1825
    %1938 = vmatpush.msra.mxu0 %v1821
    %1939 = vmatpush.msra.mxu0 %v1817
    %1940 = vmatpush.msra.mxu0 %v1813
    %1941 = vmatpush.msra.mxu0 %v1809
    %1942 = vmatpush.msra.mxu0 %v1805
    %1943 = vmatpush.msra.mxu0 %v1801
    %1944 = vmatpush.msra.mxu0 %v1797
    %1945 = vmatpush.msra.mxu0 %v1793
    %1946 = vmatpush.msra.mxu0 %v1789
    %1947 = vmatpush.msra.mxu0 %v1785
    %1948 = vmatpush.msra.mxu0 %v1781
    %1949 = vmatpush.msra.mxu0 %v1777
    %1950 = vmatpush.msra.mxu0 %v1773
    %1951 = vmatpush.msra.mxu0 %v1769
    %1952 = vmatpush.msra.mxu0 %v1765
    %1953 = vmatmul.f32.gmra.mxu0 %v1698
    %v1954 = vpop.f32.mrf.mxu0
    %v1955 = vadd.f32 %v1935, %v1954
    %1956 = vdwg.mxu0
    %1957 = vmatpush.msra.mxu0 %v1762
    %1958 = vmatpush.msra.mxu0 %v1758
    %1959 = vmatpush.msra.mxu0 %v1754
    %1960 = vmatpush.msra.mxu0 %v1750
    %1961 = vmatpush.msra.mxu0 %v1746
    %1962 = vmatpush.msra.mxu0 %v1742
    %1963 = vmatpush.msra.mxu0 %v1738
    %1964 = vmatpush.msra.mxu0 %v1734
    %1965 = vmatpush.msra.mxu0 %v1730
    %1966 = vmatpush.msra.mxu0 %v1726
    %1967 = vmatpush.msra.mxu0 %v1722
    %1968 = vmatpush.msra.mxu0 %v1718
    %1969 = vmatpush.msra.mxu0 %v1714
    %1970 = vmatpush.msra.mxu0 %v1710
    %1971 = vmatpush.msra.mxu0 %v1706
    %1972 = vmatpush.msra.mxu0 %v1702
    %1973 = vmatmul.f32.gmra.mxu0 %v1697
    %v1974 = vpop.f32.mrf.mxu0
    %v1975 = vadd.f32 %v1832, %v1974
    %1976 = vdwg.mxu0
    %1977 = vmatpush.msra.mxu0 %v1826
    %1978 = vmatpush.msra.mxu0 %v1822
    %1979 = vmatpush.msra.mxu0 %v1818
    %1980 = vmatpush.msra.mxu0 %v1814
    %1981 = vmatpush.msra.mxu0 %v1810
    %1982 = vmatpush.msra.mxu0 %v1806
    %1983 = vmatpush.msra.mxu0 %v1802
    %1984 = vmatpush.msra.mxu0 %v1798
    %1985 = vmatpush.msra.mxu0 %v1794
    %1986 = vmatpush.msra.mxu0 %v1790
    %1987 = vmatpush.msra.mxu0 %v1786
    %1988 = vmatpush.msra.mxu0 %v1782
    %1989 = vmatpush.msra.mxu0 %v1778
    %1990 = vmatpush.msra.mxu0 %v1774
    %1991 = vmatpush.msra.mxu0 %v1770
    %1992 = vmatpush.msra.mxu0 %v1766
    %1993 = vmatmul.f32.gmra.mxu0 %v1698
    %v1994 = vpop.f32.mrf.mxu0
    %v1995 = vadd.f32 %v1975, %v1994
    %1996 = vdwg.mxu0
    %v1997 = vmax.f32 %v1875, 0.0
    %v1998 = vmax.f32 %v1915, 0.0
    %v1999 = vmax.f32 %v1955, 0.0
    %v2000 = vmax.f32 %v1995, 0.0
    %v2001 = vld [vmem:[#allocation46] sm:$0xff]
    %v2002 = vld [vmem:[#allocation46 + $0x8] sm:$0xff]
    %v2003 = vld [vmem:[#allocation46 + $0x10] sm:$0xff]
    %v2004 = vld [vmem:[#allocation46 + $0x18] sm:$0xff]
    %v2005 = vld [vmem:[#allocation46 + $0x20] sm:$0xff]
    %v2006 = vld [vmem:[#allocation46 + $0x28] sm:$0xff]
    %v2007 = vld [vmem:[#allocation46 + $0x30] sm:$0xff]
    %v2008 = vld [vmem:[#allocation46 + $0x38] sm:$0xff]
    %v2009 = vld [vmem:[#allocation46 + $0x40] sm:$0xff]
    %v2010 = vld [vmem:[#allocation46 + $0x48] sm:$0xff]
    %v2011 = vld [vmem:[#allocation46 + $0x50] sm:$0xff]
    %v2012 = vld [vmem:[#allocation46 + $0x58] sm:$0xff]
    %v2013 = vld [vmem:[#allocation46 + $0x60] sm:$0xff]
    %v2014 = vld [vmem:[#allocation46 + $0x68] sm:$0xff]
    %v2015 = vld [vmem:[#allocation46 + $0x70] sm:$0xff]
    %v2016 = vld [vmem:[#allocation46 + $0x78] sm:$0xff]
    %v2017 = vld [vmem:[#allocation46 + $0x80] sm:$0xff]
    %v2018 = vld [vmem:[#allocation46 + $0x88] sm:$0xff]
    %v2019 = vld [vmem:[#allocation46 + $0x90] sm:$0xff]
    %v2020 = vld [vmem:[#allocation46 + $0x98] sm:$0xff]
    %v2021 = vld [vmem:[#allocation46 + $0xa0] sm:$0xff]
    %v2022 = vld [vmem:[#allocation46 + $0xa8] sm:$0xff]
    %v2023 = vld [vmem:[#allocation46 + $0xb0] sm:$0xff]
    %v2024 = vld [vmem:[#allocation46 + $0xb8] sm:$0xff]
    %v2025 = vld [vmem:[#allocation46 + $0xc0] sm:$0xff]
    %v2026 = vld [vmem:[#allocation46 + $0xc8] sm:$0xff]
    %v2027 = vld [vmem:[#allocation46 + $0xd0] sm:$0xff]
    %v2028 = vld [vmem:[#allocation46 + $0xd8] sm:$0xff]
    %v2029 = vld [vmem:[#allocation46 + $0xe0] sm:$0xff]
    %v2030 = vld [vmem:[#allocation46 + $0xe8] sm:$0xff]
    %v2031 = vld [vmem:[#allocation46 + $0xf0] sm:$0xff]
    %v2032 = vld [vmem:[#allocation46 + $0xf8] sm:$0xff]
    %v2033 = vld [vmem:[#allocation46 + $0x100] sm:$0xff]
    %v2034 = vld [vmem:[#allocation46 + $0x108] sm:$0xff]
    %v2035 = vld [vmem:[#allocation46 + $0x110] sm:$0xff]
    %v2036 = vld [vmem:[#allocation46 + $0x118] sm:$0xff]
    %v2037 = vld [vmem:[#allocation46 + $0x120] sm:$0xff]
    %v2038 = vld [vmem:[#allocation46 + $0x128] sm:$0xff]
    %v2039 = vld [vmem:[#allocation46 + $0x130] sm:$0xff]
    %v2040 = vld [vmem:[#allocation46 + $0x138] sm:$0xff]
    %v2041 = vld [vmem:[#allocation46 + $0x140] sm:$0xff]
    %v2042 = vld [vmem:[#allocation46 + $0x148] sm:$0xff]
    %v2043 = vld [vmem:[#allocation46 + $0x150] sm:$0xff]
    %v2044 = vld [vmem:[#allocation46 + $0x158] sm:$0xff]
    %v2045 = vld [vmem:[#allocation46 + $0x160] sm:$0xff]
    %v2046 = vld [vmem:[#allocation46 + $0x168] sm:$0xff]
    %v2047 = vld [vmem:[#allocation46 + $0x170] sm:$0xff]
    %v2048 = vld [vmem:[#allocation46 + $0x178] sm:$0xff]
    %v2049 = vld [vmem:[#allocation46 + $0x180] sm:$0xff]
    %v2050 = vld [vmem:[#allocation46 + $0x188] sm:$0xff]
    %v2051 = vld [vmem:[#allocation46 + $0x190] sm:$0xff]
    %v2052 = vld [vmem:[#allocation46 + $0x198] sm:$0xff]
    %v2053 = vld [vmem:[#allocation46 + $0x1a0] sm:$0xff]
    %v2054 = vld [vmem:[#allocation46 + $0x1a8] sm:$0xff]
    %v2055 = vld [vmem:[#allocation46 + $0x1b0] sm:$0xff]
    %v2056 = vld [vmem:[#allocation46 + $0x1b8] sm:$0xff]
    %v2057 = vld [vmem:[#allocation46 + $0x1c0] sm:$0xff]
    %v2058 = vld [vmem:[#allocation46 + $0x1c8] sm:$0xff]
    %v2059 = vld [vmem:[#allocation46 + $0x1d0] sm:$0xff]
    %v2060 = vld [vmem:[#allocation46 + $0x1d8] sm:$0xff]
    %v2061 = vld [vmem:[#allocation46 + $0x1e0] sm:$0xff]
    %v2062 = vld [vmem:[#allocation46 + $0x1e8] sm:$0xff]
    %v2063 = vld [vmem:[#allocation46 + $0x1f0] sm:$0xff]
    %v2064 = vld [vmem:[#allocation46 + $0x1f8] sm:$0xff]
    %v2065 = vld [vmem:[#allocation46 + $0x200] sm:$0xff]
    %v2066 = vld [vmem:[#allocation46 + $0x208] sm:$0xff]
    %v2067 = vld [vmem:[#allocation46 + $0x210] sm:$0xff]
    %v2068 = vld [vmem:[#allocation46 + $0x218] sm:$0xff]
    %v2069 = vld [vmem:[#allocation46 + $0x220] sm:$0xff]
    %v2070 = vld [vmem:[#allocation46 + $0x228] sm:$0xff]
    %v2071 = vld [vmem:[#allocation46 + $0x230] sm:$0xff]
    %v2072 = vld [vmem:[#allocation46 + $0x238] sm:$0xff]
    %v2073 = vld [vmem:[#allocation46 + $0x240] sm:$0xff]
    %v2074 = vld [vmem:[#allocation46 + $0x248] sm:$0xff]
    %v2075 = vld [vmem:[#allocation46 + $0x250] sm:$0xff]
    %v2076 = vld [vmem:[#allocation46 + $0x258] sm:$0xff]
    %v2077 = vld [vmem:[#allocation46 + $0x260] sm:$0xff]
    %v2078 = vld [vmem:[#allocation46 + $0x268] sm:$0xff]
    %v2079 = vld [vmem:[#allocation46 + $0x270] sm:$0xff]
    %v2080 = vld [vmem:[#allocation46 + $0x278] sm:$0xff]
    %v2081 = vld [vmem:[#allocation46 + $0x280] sm:$0xff]
    %v2082 = vld [vmem:[#allocation46 + $0x288] sm:$0xff]
    %v2083 = vld [vmem:[#allocation46 + $0x290] sm:$0xff]
    %v2084 = vld [vmem:[#allocation46 + $0x298] sm:$0xff]
    %v2085 = vld [vmem:[#allocation46 + $0x2a0] sm:$0xff]
    %v2086 = vld [vmem:[#allocation46 + $0x2a8] sm:$0xff]
    %v2087 = vld [vmem:[#allocation46 + $0x2b0] sm:$0xff]
    %v2088 = vld [vmem:[#allocation46 + $0x2b8] sm:$0xff]
    %v2089 = vld [vmem:[#allocation46 + $0x2c0] sm:$0xff]
    %v2090 = vld [vmem:[#allocation46 + $0x2c8] sm:$0xff]
    %v2091 = vld [vmem:[#allocation46 + $0x2d0] sm:$0xff]
    %v2092 = vld [vmem:[#allocation46 + $0x2d8] sm:$0xff]
    %v2093 = vld [vmem:[#allocation46 + $0x2e0] sm:$0xff]
    %v2094 = vld [vmem:[#allocation46 + $0x2e8] sm:$0xff]
    %v2095 = vld [vmem:[#allocation46 + $0x2f0] sm:$0xff]
    %v2096 = vld [vmem:[#allocation46 + $0x2f8] sm:$0xff]
    %v2097 = vld [vmem:[#allocation46 + $0x300] sm:$0xff]
    %v2098 = vld [vmem:[#allocation46 + $0x308] sm:$0xff]
    %v2099 = vld [vmem:[#allocation46 + $0x310] sm:$0xff]
    %v2100 = vld [vmem:[#allocation46 + $0x318] sm:$0xff]
    %v2101 = vld [vmem:[#allocation46 + $0x320] sm:$0xff]
    %v2102 = vld [vmem:[#allocation46 + $0x328] sm:$0xff]
    %v2103 = vld [vmem:[#allocation46 + $0x330] sm:$0xff]
    %v2104 = vld [vmem:[#allocation46 + $0x338] sm:$0xff]
    %v2105 = vld [vmem:[#allocation46 + $0x340] sm:$0xff]
    %v2106 = vld [vmem:[#allocation46 + $0x348] sm:$0xff]
    %v2107 = vld [vmem:[#allocation46 + $0x350] sm:$0xff]
    %v2108 = vld [vmem:[#allocation46 + $0x358] sm:$0xff]
    %v2109 = vld [vmem:[#allocation46 + $0x360] sm:$0xff]
    %v2110 = vld [vmem:[#allocation46 + $0x368] sm:$0xff]
    %v2111 = vld [vmem:[#allocation46 + $0x370] sm:$0xff]
    %v2112 = vld [vmem:[#allocation46 + $0x378] sm:$0xff]
    %v2113 = vld [vmem:[#allocation46 + $0x380] sm:$0xff]
    %v2114 = vld [vmem:[#allocation46 + $0x388] sm:$0xff]
    %v2115 = vld [vmem:[#allocation46 + $0x390] sm:$0xff]
    %v2116 = vld [vmem:[#allocation46 + $0x398] sm:$0xff]
    %v2117 = vld [vmem:[#allocation46 + $0x3a0] sm:$0xff]
    %v2118 = vld [vmem:[#allocation46 + $0x3a8] sm:$0xff]
    %v2119 = vld [vmem:[#allocation46 + $0x3b0] sm:$0xff]
    %v2120 = vld [vmem:[#allocation46 + $0x3b8] sm:$0xff]
    %v2121 = vld [vmem:[#allocation46 + $0x3c0] sm:$0xff]
    %v2122 = vld [vmem:[#allocation46 + $0x3c8] sm:$0xff]
    %v2123 = vld [vmem:[#allocation46 + $0x3d0] sm:$0xff]
    %v2124 = vld [vmem:[#allocation46 + $0x3d8] sm:$0xff]
    %v2125 = vld [vmem:[#allocation46 + $0x3e0] sm:$0xff]
    %v2126 = vld [vmem:[#allocation46 + $0x3e8] sm:$0xff]
    %v2127 = vld [vmem:[#allocation46 + $0x3f0] sm:$0xff]
    %v2128 = vld [vmem:[#allocation46 + $0x3f8] sm:$0xff]
    %v2129 = vld [vmem:[#allocation46 + $0x400] sm:$0xff]
    %v2130 = vld [vmem:[#allocation46 + $0x408] sm:$0xff]
    %v2131 = vld [vmem:[#allocation46 + $0x410] sm:$0xff]
    %v2132 = vld [vmem:[#allocation46 + $0x418] sm:$0xff]
    %v2133 = vld [vmem:[#allocation46 + $0x420] sm:$0xff]
    %v2134 = vld [vmem:[#allocation46 + $0x428] sm:$0xff]
    %v2135 = vld [vmem:[#allocation46 + $0x430] sm:$0xff]
    %v2136 = vld [vmem:[#allocation46 + $0x438] sm:$0xff]
    %v2137 = vld [vmem:[#allocation46 + $0x440] sm:$0xff]
    %v2138 = vld [vmem:[#allocation46 + $0x448] sm:$0xff]
    %v2139 = vld [vmem:[#allocation46 + $0x450] sm:$0xff]
    %v2140 = vld [vmem:[#allocation46 + $0x458] sm:$0xff]
    %v2141 = vld [vmem:[#allocation46 + $0x460] sm:$0xff]
    %v2142 = vld [vmem:[#allocation46 + $0x468] sm:$0xff]
    %v2143 = vld [vmem:[#allocation46 + $0x470] sm:$0xff]
    %v2144 = vld [vmem:[#allocation46 + $0x478] sm:$0xff]
    %v2145 = vld [vmem:[#allocation46 + $0x480] sm:$0xff]
    %v2146 = vld [vmem:[#allocation46 + $0x488] sm:$0xff]
    %v2147 = vld [vmem:[#allocation46 + $0x490] sm:$0xff]
    %v2148 = vld [vmem:[#allocation46 + $0x498] sm:$0xff]
    %v2149 = vld [vmem:[#allocation46 + $0x4a0] sm:$0xff]
    %v2150 = vld [vmem:[#allocation46 + $0x4a8] sm:$0xff]
    %v2151 = vld [vmem:[#allocation46 + $0x4b0] sm:$0xff]
    %v2152 = vld [vmem:[#allocation46 + $0x4b8] sm:$0xff]
    %v2153 = vld [vmem:[#allocation46 + $0x4c0] sm:$0xff]
    %v2154 = vld [vmem:[#allocation46 + $0x4c8] sm:$0xff]
    %v2155 = vld [vmem:[#allocation46 + $0x4d0] sm:$0xff]
    %v2156 = vld [vmem:[#allocation46 + $0x4d8] sm:$0xff]
    %v2157 = vld [vmem:[#allocation46 + $0x4e0] sm:$0xff]
    %v2158 = vld [vmem:[#allocation46 + $0x4e8] sm:$0xff]
    %v2159 = vld [vmem:[#allocation46 + $0x4f0] sm:$0xff]
    %v2160 = vld [vmem:[#allocation46 + $0x4f8] sm:$0xff]
    %v2161 = vld [vmem:[#allocation46 + $0x500] sm:$0xff]
    %v2162 = vld [vmem:[#allocation46 + $0x508] sm:$0xff]
    %v2163 = vld [vmem:[#allocation46 + $0x510] sm:$0xff]
    %v2164 = vld [vmem:[#allocation46 + $0x518] sm:$0xff]
    %v2165 = vld [vmem:[#allocation46 + $0x520] sm:$0xff]
    %v2166 = vld [vmem:[#allocation46 + $0x528] sm:$0xff]
    %v2167 = vld [vmem:[#allocation46 + $0x530] sm:$0xff]
    %v2168 = vld [vmem:[#allocation46 + $0x538] sm:$0xff]
    %v2169 = vld [vmem:[#allocation46 + $0x540] sm:$0xff]
    %v2170 = vld [vmem:[#allocation46 + $0x548] sm:$0xff]
    %v2171 = vld [vmem:[#allocation46 + $0x550] sm:$0xff]
    %v2172 = vld [vmem:[#allocation46 + $0x558] sm:$0xff]
    %v2173 = vld [vmem:[#allocation46 + $0x560] sm:$0xff]
    %v2174 = vld [vmem:[#allocation46 + $0x568] sm:$0xff]
    %v2175 = vld [vmem:[#allocation46 + $0x570] sm:$0xff]
    %v2176 = vld [vmem:[#allocation46 + $0x578] sm:$0xff]
    %v2177 = vld [vmem:[#allocation46 + $0x580] sm:$0xff]
    %v2178 = vld [vmem:[#allocation46 + $0x588] sm:$0xff]
    %v2179 = vld [vmem:[#allocation46 + $0x590] sm:$0xff]
    %v2180 = vld [vmem:[#allocation46 + $0x598] sm:$0xff]
    %v2181 = vld [vmem:[#allocation46 + $0x5a0] sm:$0xff]
    %v2182 = vld [vmem:[#allocation46 + $0x5a8] sm:$0xff]
    %v2183 = vld [vmem:[#allocation46 + $0x5b0] sm:$0xff]
    %v2184 = vld [vmem:[#allocation46 + $0x5b8] sm:$0xff]
    %v2185 = vld [vmem:[#allocation46 + $0x5c0] sm:$0xff]
    %v2186 = vld [vmem:[#allocation46 + $0x5c8] sm:$0xff]
    %v2187 = vld [vmem:[#allocation46 + $0x5d0] sm:$0xff]
    %v2188 = vld [vmem:[#allocation46 + $0x5d8] sm:$0xff]
    %v2189 = vld [vmem:[#allocation46 + $0x5e0] sm:$0xff]
    %v2190 = vld [vmem:[#allocation46 + $0x5e8] sm:$0xff]
    %v2191 = vld [vmem:[#allocation46 + $0x5f0] sm:$0xff]
    %v2192 = vld [vmem:[#allocation46 + $0x5f8] sm:$0xff]
    %v2193 = vld [vmem:[#allocation46 + $0x600] sm:$0xff]
    %v2194 = vld [vmem:[#allocation46 + $0x608] sm:$0xff]
    %v2195 = vld [vmem:[#allocation46 + $0x610] sm:$0xff]
    %v2196 = vld [vmem:[#allocation46 + $0x618] sm:$0xff]
    %v2197 = vld [vmem:[#allocation46 + $0x620] sm:$0xff]
    %v2198 = vld [vmem:[#allocation46 + $0x628] sm:$0xff]
    %v2199 = vld [vmem:[#allocation46 + $0x630] sm:$0xff]
    %v2200 = vld [vmem:[#allocation46 + $0x638] sm:$0xff]
    %v2201 = vld [vmem:[#allocation46 + $0x640] sm:$0xff]
    %v2202 = vld [vmem:[#allocation46 + $0x648] sm:$0xff]
    %v2203 = vld [vmem:[#allocation46 + $0x650] sm:$0xff]
    %v2204 = vld [vmem:[#allocation46 + $0x658] sm:$0xff]
    %v2205 = vld [vmem:[#allocation46 + $0x660] sm:$0xff]
    %v2206 = vld [vmem:[#allocation46 + $0x668] sm:$0xff]
    %v2207 = vld [vmem:[#allocation46 + $0x670] sm:$0xff]
    %v2208 = vld [vmem:[#allocation46 + $0x678] sm:$0xff]
    %v2209 = vld [vmem:[#allocation46 + $0x680] sm:$0xff]
    %v2210 = vld [vmem:[#allocation46 + $0x688] sm:$0xff]
    %v2211 = vld [vmem:[#allocation46 + $0x690] sm:$0xff]
    %v2212 = vld [vmem:[#allocation46 + $0x698] sm:$0xff]
    %v2213 = vld [vmem:[#allocation46 + $0x6a0] sm:$0xff]
    %v2214 = vld [vmem:[#allocation46 + $0x6a8] sm:$0xff]
    %v2215 = vld [vmem:[#allocation46 + $0x6b0] sm:$0xff]
    %v2216 = vld [vmem:[#allocation46 + $0x6b8] sm:$0xff]
    %v2217 = vld [vmem:[#allocation46 + $0x6c0] sm:$0xff]
    %v2218 = vld [vmem:[#allocation46 + $0x6c8] sm:$0xff]
    %v2219 = vld [vmem:[#allocation46 + $0x6d0] sm:$0xff]
    %v2220 = vld [vmem:[#allocation46 + $0x6d8] sm:$0xff]
    %v2221 = vld [vmem:[#allocation46 + $0x6e0] sm:$0xff]
    %v2222 = vld [vmem:[#allocation46 + $0x6e8] sm:$0xff]
    %v2223 = vld [vmem:[#allocation46 + $0x6f0] sm:$0xff]
    %v2224 = vld [vmem:[#allocation46 + $0x6f8] sm:$0xff]
    %v2225 = vld [vmem:[#allocation46 + $0x700] sm:$0xff]
    %v2226 = vld [vmem:[#allocation46 + $0x708] sm:$0xff]
    %v2227 = vld [vmem:[#allocation46 + $0x710] sm:$0xff]
    %v2228 = vld [vmem:[#allocation46 + $0x718] sm:$0xff]
    %v2229 = vld [vmem:[#allocation46 + $0x720] sm:$0xff]
    %v2230 = vld [vmem:[#allocation46 + $0x728] sm:$0xff]
    %v2231 = vld [vmem:[#allocation46 + $0x730] sm:$0xff]
    %v2232 = vld [vmem:[#allocation46 + $0x738] sm:$0xff]
    %v2233 = vld [vmem:[#allocation46 + $0x740] sm:$0xff]
    %v2234 = vld [vmem:[#allocation46 + $0x748] sm:$0xff]
    %v2235 = vld [vmem:[#allocation46 + $0x750] sm:$0xff]
    %v2236 = vld [vmem:[#allocation46 + $0x758] sm:$0xff]
    %v2237 = vld [vmem:[#allocation46 + $0x760] sm:$0xff]
    %v2238 = vld [vmem:[#allocation46 + $0x768] sm:$0xff]
    %v2239 = vld [vmem:[#allocation46 + $0x770] sm:$0xff]
    %v2240 = vld [vmem:[#allocation46 + $0x778] sm:$0xff]
    %v2241 = vld [vmem:[#allocation46 + $0x780] sm:$0xff]
    %v2242 = vld [vmem:[#allocation46 + $0x788] sm:$0xff]
    %v2243 = vld [vmem:[#allocation46 + $0x790] sm:$0xff]
    %v2244 = vld [vmem:[#allocation46 + $0x798] sm:$0xff]
    %v2245 = vld [vmem:[#allocation46 + $0x7a0] sm:$0xff]
    %v2246 = vld [vmem:[#allocation46 + $0x7a8] sm:$0xff]
    %v2247 = vld [vmem:[#allocation46 + $0x7b0] sm:$0xff]
    %v2248 = vld [vmem:[#allocation46 + $0x7b8] sm:$0xff]
    %v2249 = vld [vmem:[#allocation46 + $0x7c0] sm:$0xff]
    %v2250 = vld [vmem:[#allocation46 + $0x7c8] sm:$0xff]
    %v2251 = vld [vmem:[#allocation46 + $0x7d0] sm:$0xff]
    %v2252 = vld [vmem:[#allocation46 + $0x7d8] sm:$0xff]
    %v2253 = vld [vmem:[#allocation46 + $0x7e0] sm:$0xff]
    %v2254 = vld [vmem:[#allocation46 + $0x7e8] sm:$0xff]
    %v2255 = vld [vmem:[#allocation46 + $0x7f0] sm:$0xff]
    %v2256 = vld [vmem:[#allocation46 + $0x7f8] sm:$0xff]
    %v2257 = vld [vmem:[%s69] sm:$0xf]
    %v2259 = vperm.slane %v2257, 0
    %v2260 = vperm.slane %v2257, 1
    %v2261 = vperm.slane %v2257, 2
    %v2262 = vperm.slane %v2257, 3
    %2267 = vmatpush.msra.mxu0 %v2061
    %2268 = vmatpush.msra.mxu0 %v2057
    %2269 = vmatpush.msra.mxu0 %v2053
    %2270 = vmatpush.msra.mxu0 %v2049
    %2271 = vmatpush.msra.mxu0 %v2045
    %2272 = vmatpush.msra.mxu0 %v2041
    %2273 = vmatpush.msra.mxu0 %v2037
    %2274 = vmatpush.msra.mxu0 %v2033
    %2275 = vmatpush.msra.mxu0 %v2029
    %2276 = vmatpush.msra.mxu0 %v2025
    %2277 = vmatpush.msra.mxu0 %v2021
    %2278 = vmatpush.msra.mxu0 %v2017
    %2279 = vmatpush.msra.mxu0 %v2013
    %2280 = vmatpush.msra.mxu0 %v2009
    %2281 = vmatpush.msra.mxu0 %v2005
    %2282 = vmatpush.msra.mxu0 %v2001
    %2283 = vmatmul.f32.gmra.mxu0 %v1997
    %v2284 = vpop.f32.mrf.mxu0
    %v2285 = vadd.f32 %v2259, %v2284
    %2286 = vdwg.mxu0
    %2287 = vmatpush.msra.mxu0 %v2125
    %2288 = vmatpush.msra.mxu0 %v2121
    %2289 = vmatpush.msra.mxu0 %v2117
    %2290 = vmatpush.msra.mxu0 %v2113
    %2291 = vmatpush.msra.mxu0 %v2109
    %2292 = vmatpush.msra.mxu0 %v2105
    %2293 = vmatpush.msra.mxu0 %v2101
    %2294 = vmatpush.msra.mxu0 %v2097
    %2295 = vmatpush.msra.mxu0 %v2093
    %2296 = vmatpush.msra.mxu0 %v2089
    %2297 = vmatpush.msra.mxu0 %v2085
    %2298 = vmatpush.msra.mxu0 %v2081
    %2299 = vmatpush.msra.mxu0 %v2077
    %2300 = vmatpush.msra.mxu0 %v2073
    %2301 = vmatpush.msra.mxu0 %v2069
    %2302 = vmatpush.msra.mxu0 %v2065
    %2303 = vmatmul.f32.gmra.mxu0 %v1998
    %v2304 = vpop.f32.mrf.mxu0
    %v2305 = vadd.f32 %v2285, %v2304
    %2306 = vdwg.mxu0
    %2307 = vmatpush.msra.mxu0 %v2189
    %2308 = vmatpush.msra.mxu0 %v2185
    %2309 = vmatpush.msra.mxu0 %v2181
    %2310 = vmatpush.msra.mxu0 %v2177
    %2311 = vmatpush.msra.mxu0 %v2173
    %2312 = vmatpush.msra.mxu0 %v2169
    %2313 = vmatpush.msra.mxu0 %v2165
    %2314 = vmatpush.msra.mxu0 %v2161
    %2315 = vmatpush.msra.mxu0 %v2157
    %2316 = vmatpush.msra.mxu0 %v2153
    %2317 = vmatpush.msra.mxu0 %v2149
    %2318 = vmatpush.msra.mxu0 %v2145
    %2319 = vmatpush.msra.mxu0 %v2141
    %2320 = vmatpush.msra.mxu0 %v2137
    %2321 = vmatpush.msra.mxu0 %v2133
    %2322 = vmatpush.msra.mxu0 %v2129
    %2323 = vmatmul.f32.gmra.mxu0 %v1999
    %v2324 = vpop.f32.mrf.mxu0
    %v2325 = vadd.f32 %v2305, %v2324
    %2326 = vdwg.mxu0
    %2327 = vmatpush.msra.mxu0 %v2253
    %2328 = vmatpush.msra.mxu0 %v2249
    %2329 = vmatpush.msra.mxu0 %v2245
    %2330 = vmatpush.msra.mxu0 %v2241
    %2331 = vmatpush.msra.mxu0 %v2237
    %2332 = vmatpush.msra.mxu0 %v2233
    %2333 = vmatpush.msra.mxu0 %v2229
    %2334 = vmatpush.msra.mxu0 %v2225
    %2335 = vmatpush.msra.mxu0 %v2221
    %2336 = vmatpush.msra.mxu0 %v2217
    %2337 = vmatpush.msra.mxu0 %v2213
    %2338 = vmatpush.msra.mxu0 %v2209
    %2339 = vmatpush.msra.mxu0 %v2205
    %2340 = vmatpush.msra.mxu0 %v2201
    %2341 = vmatpush.msra.mxu0 %v2197
    %2342 = vmatpush.msra.mxu0 %v2193
    %2343 = vmatmul.f32.gmra.mxu0 %v2000
    %v2344 = vpop.f32.mrf.mxu0
    %v2345 = vadd.f32 %v2325, %v2344
    %2346 = vdwg.mxu0
    %2347 = vmatpush.msra.mxu0 %v2062
    %2348 = vmatpush.msra.mxu0 %v2058
    %2349 = vmatpush.msra.mxu0 %v2054
    %2350 = vmatpush.msra.mxu0 %v2050
    %2351 = vmatpush.msra.mxu0 %v2046
    %2352 = vmatpush.msra.mxu0 %v2042
    %2353 = vmatpush.msra.mxu0 %v2038
    %2354 = vmatpush.msra.mxu0 %v2034
    %2355 = vmatpush.msra.mxu0 %v2030
    %2356 = vmatpush.msra.mxu0 %v2026
    %2357 = vmatpush.msra.mxu0 %v2022
    %2358 = vmatpush.msra.mxu0 %v2018
    %2359 = vmatpush.msra.mxu0 %v2014
    %2360 = vmatpush.msra.mxu0 %v2010
    %2361 = vmatpush.msra.mxu0 %v2006
    %2362 = vmatpush.msra.mxu0 %v2002
    %2363 = vmatmul.f32.gmra.mxu0 %v1997
    %v2364 = vpop.f32.mrf.mxu0
    %v2365 = vadd.f32 %v2260, %v2364
    %2366 = vdwg.mxu0
    %2367 = vmatpush.msra.mxu0 %v2126
    %2368 = vmatpush.msra.mxu0 %v2122
    %2369 = vmatpush.msra.mxu0 %v2118
    %2370 = vmatpush.msra.mxu0 %v2114
    %2371 = vmatpush.msra.mxu0 %v2110
    %2372 = vmatpush.msra.mxu0 %v2106
    %2373 = vmatpush.msra.mxu0 %v2102
    %2374 = vmatpush.msra.mxu0 %v2098
    %2375 = vmatpush.msra.mxu0 %v2094
    %2376 = vmatpush.msra.mxu0 %v2090
    %2377 = vmatpush.msra.mxu0 %v2086
    %2378 = vmatpush.msra.mxu0 %v2082
    %2379 = vmatpush.msra.mxu0 %v2078
    %2380 = vmatpush.msra.mxu0 %v2074
    %2381 = vmatpush.msra.mxu0 %v2070
    %2382 = vmatpush.msra.mxu0 %v2066
    %2383 = vmatmul.f32.gmra.mxu0 %v1998
    %v2384 = vpop.f32.mrf.mxu0
    %v2385 = vadd.f32 %v2365, %v2384
    %2386 = vdwg.mxu0
    %2387 = vmatpush.msra.mxu0 %v2190
    %2388 = vmatpush.msra.mxu0 %v2186
    %2389 = vmatpush.msra.mxu0 %v2182
    %2390 = vmatpush.msra.mxu0 %v2178
    %2391 = vmatpush.msra.mxu0 %v2174
    %2392 = vmatpush.msra.mxu0 %v2170
    %2393 = vmatpush.msra.mxu0 %v2166
    %2394 = vmatpush.msra.mxu0 %v2162
    %2395 = vmatpush.msra.mxu0 %v2158
    %2396 = vmatpush.msra.mxu0 %v2154
    %2397 = vmatpush.msra.mxu0 %v2150
    %2398 = vmatpush.msra.mxu0 %v2146
    %2399 = vmatpush.msra.mxu0 %v2142
    %2400 = vmatpush.msra.mxu0 %v2138
    %2401 = vmatpush.msra.mxu0 %v2134
    %2402 = vmatpush.msra.mxu0 %v2130
    %2403 = vmatmul.f32.gmra.mxu0 %v1999
    %v2404 = vpop.f32.mrf.mxu0
    %v2405 = vadd.f32 %v2385, %v2404
    %2406 = vdwg.mxu0
    %2407 = vmatpush.msra.mxu0 %v2254
    %2408 = vmatpush.msra.mxu0 %v2250
    %2409 = vmatpush.msra.mxu0 %v2246
    %2410 = vmatpush.msra.mxu0 %v2242
    %2411 = vmatpush.msra.mxu0 %v2238
    %2412 = vmatpush.msra.mxu0 %v2234
    %2413 = vmatpush.msra.mxu0 %v2230
    %2414 = vmatpush.msra.mxu0 %v2226
    %2415 = vmatpush.msra.mxu0 %v2222
    %2416 = vmatpush.msra.mxu0 %v2218
    %2417 = vmatpush.msra.mxu0 %v2214
    %2418 = vmatpush.msra.mxu0 %v2210
    %2419 = vmatpush.msra.mxu0 %v2206
    %2420 = vmatpush.msra.mxu0 %v2202
    %2421 = vmatpush.msra.mxu0 %v2198
    %2422 = vmatpush.msra.mxu0 %v2194
    %2423 = vmatmul.f32.gmra.mxu0 %v2000
    %v2424 = vpop.f32.mrf.mxu0
    %v2425 = vadd.f32 %v2405, %v2424
    %2426 = vdwg.mxu0
    %2427 = vmatpush.msra.mxu0 %v2063
    %2428 = vmatpush.msra.mxu0 %v2059
    %2429 = vmatpush.msra.mxu0 %v2055
    %2430 = vmatpush.msra.mxu0 %v2051
    %2431 = vmatpush.msra.mxu0 %v2047
    %2432 = vmatpush.msra.mxu0 %v2043
    %2433 = vmatpush.msra.mxu0 %v2039
    %2434 = vmatpush.msra.mxu0 %v2035
    %2435 = vmatpush.msra.mxu0 %v2031
    %2436 = vmatpush.msra.mxu0 %v2027
    %2437 = vmatpush.msra.mxu0 %v2023
    %2438 = vmatpush.msra.mxu0 %v2019
    %2439 = vmatpush.msra.mxu0 %v2015
    %2440 = vmatpush.msra.mxu0 %v2011
    %2441 = vmatpush.msra.mxu0 %v2007
    %2442 = vmatpush.msra.mxu0 %v2003
    %2443 = vmatmul.f32.gmra.mxu0 %v1997
    %v2444 = vpop.f32.mrf.mxu0
    %v2445 = vadd.f32 %v2261, %v2444
    %2446 = vdwg.mxu0
    %2447 = vmatpush.msra.mxu0 %v2127
    %2448 = vmatpush.msra.mxu0 %v2123
    %2449 = vmatpush.msra.mxu0 %v2119
    %2450 = vmatpush.msra.mxu0 %v2115
    %2451 = vmatpush.msra.mxu0 %v2111
    %2452 = vmatpush.msra.mxu0 %v2107
    %2453 = vmatpush.msra.mxu0 %v2103
    %2454 = vmatpush.msra.mxu0 %v2099
    %2455 = vmatpush.msra.mxu0 %v2095
    %2456 = vmatpush.msra.mxu0 %v2091
    %2457 = vmatpush.msra.mxu0 %v2087
    %2458 = vmatpush.msra.mxu0 %v2083
    %2459 = vmatpush.msra.mxu0 %v2079
    %2460 = vmatpush.msra.mxu0 %v2075
    %2461 = vmatpush.msra.mxu0 %v2071
    %2462 = vmatpush.msra.mxu0 %v2067
    %2463 = vmatmul.f32.gmra.mxu0 %v1998
    %v2464 = vpop.f32.mrf.mxu0
    %v2465 = vadd.f32 %v2445, %v2464
    %2466 = vdwg.mxu0
    %2467 = vmatpush.msra.mxu0 %v2191
    %2468 = vmatpush.msra.mxu0 %v2187
    %2469 = vmatpush.msra.mxu0 %v2183
    %2470 = vmatpush.msra.mxu0 %v2179
    %2471 = vmatpush.msra.mxu0 %v2175
    %2472 = vmatpush.msra.mxu0 %v2171
    %2473 = vmatpush.msra.mxu0 %v2167
    %2474 = vmatpush.msra.mxu0 %v2163
    %2475 = vmatpush.msra.mxu0 %v2159
    %2476 = vmatpush.msra.mxu0 %v2155
    %2477 = vmatpush.msra.mxu0 %v2151
    %2478 = vmatpush.msra.mxu0 %v2147
    %2479 = vmatpush.msra.mxu0 %v2143
    %2480 = vmatpush.msra.mxu0 %v2139
    %2481 = vmatpush.msra.mxu0 %v2135
    %2482 = vmatpush.msra.mxu0 %v2131
    %2483 = vmatmul.f32.gmra.mxu0 %v1999
    %v2484 = vpop.f32.mrf.mxu0
    %v2485 = vadd.f32 %v2465, %v2484
    %2486 = vdwg.mxu0
    %2487 = vmatpush.msra.mxu0 %v2255
    %2488 = vmatpush.msra.mxu0 %v2251
    %2489 = vmatpush.msra.mxu0 %v2247
    %2490 = vmatpush.msra.mxu0 %v2243
    %2491 = vmatpush.msra.mxu0 %v2239
    %2492 = vmatpush.msra.mxu0 %v2235
    %2493 = vmatpush.msra.mxu0 %v2231
    %2494 = vmatpush.msra.mxu0 %v2227
    %2495 = vmatpush.msra.mxu0 %v2223
    %2496 = vmatpush.msra.mxu0 %v2219
    %2497 = vmatpush.msra.mxu0 %v2215
    %2498 = vmatpush.msra.mxu0 %v2211
    %2499 = vmatpush.msra.mxu0 %v2207
    %2500 = vmatpush.msra.mxu0 %v2203
    %2501 = vmatpush.msra.mxu0 %v2199
    %2502 = vmatpush.msra.mxu0 %v2195
    %2503 = vmatmul.f32.gmra.mxu0 %v2000
    %v2504 = vpop.f32.mrf.mxu0
    %v2505 = vadd.f32 %v2485, %v2504
    %2506 = vdwg.mxu0
    %2507 = vmatpush.msra.mxu0 %v2064
    %2508 = vmatpush.msra.mxu0 %v2060
    %2509 = vmatpush.msra.mxu0 %v2056
    %2510 = vmatpush.msra.mxu0 %v2052
    %2511 = vmatpush.msra.mxu0 %v2048
    %2512 = vmatpush.msra.mxu0 %v2044
    %2513 = vmatpush.msra.mxu0 %v2040
    %2514 = vmatpush.msra.mxu0 %v2036
    %2515 = vmatpush.msra.mxu0 %v2032
    %2516 = vmatpush.msra.mxu0 %v2028
    %2517 = vmatpush.msra.mxu0 %v2024
    %2518 = vmatpush.msra.mxu0 %v2020
    %2519 = vmatpush.msra.mxu0 %v2016
    %2520 = vmatpush.msra.mxu0 %v2012
    %2521 = vmatpush.msra.mxu0 %v2008
    %2522 = vmatpush.msra.mxu0 %v2004
    %2523 = vmatmul.f32.gmra.mxu0 %v1997
    %v2524 = vpop.f32.mrf.mxu0
    %v2525 = vadd.f32 %v2262, %v2524
    %2526 = vdwg.mxu0
    %2527 = vmatpush.msra.mxu0 %v2128
    %2528 = vmatpush.msra.mxu0 %v2124
    %2529 = vmatpush.msra.mxu0 %v2120
    %2530 = vmatpush.msra.mxu0 %v2116
    %2531 = vmatpush.msra.mxu0 %v2112
    %2532 = vmatpush.msra.mxu0 %v2108
    %2533 = vmatpush.msra.mxu0 %v2104
    %2534 = vmatpush.msra.mxu0 %v2100
    %2535 = vmatpush.msra.mxu0 %v2096
    %2536 = vmatpush.msra.mxu0 %v2092
    %2537 = vmatpush.msra.mxu0 %v2088
    %2538 = vmatpush.msra.mxu0 %v2084
    %2539 = vmatpush.msra.mxu0 %v2080
    %2540 = vmatpush.msra.mxu0 %v2076
    %2541 = vmatpush.msra.mxu0 %v2072
    %2542 = vmatpush.msra.mxu0 %v2068
    %2543 = vmatmul.f32.gmra.mxu0 %v1998
    %v2544 = vpop.f32.mrf.mxu0
    %v2545 = vadd.f32 %v2525, %v2544
    %2546 = vdwg.mxu0
    %2547 = vmatpush.msra.mxu0 %v2192
    %2548 = vmatpush.msra.mxu0 %v2188
    %2549 = vmatpush.msra.mxu0 %v2184
    %2550 = vmatpush.msra.mxu0 %v2180
    %2551 = vmatpush.msra.mxu0 %v2176
    %2552 = vmatpush.msra.mxu0 %v2172
    %2553 = vmatpush.msra.mxu0 %v2168
    %2554 = vmatpush.msra.mxu0 %v2164
    %2555 = vmatpush.msra.mxu0 %v2160
    %2556 = vmatpush.msra.mxu0 %v2156
    %2557 = vmatpush.msra.mxu0 %v2152
    %2558 = vmatpush.msra.mxu0 %v2148
    %2559 = vmatpush.msra.mxu0 %v2144
    %2560 = vmatpush.msra.mxu0 %v2140
    %2561 = vmatpush.msra.mxu0 %v2136
    %2562 = vmatpush.msra.mxu0 %v2132
    %2563 = vmatmul.f32.gmra.mxu0 %v1999
    %v2564 = vpop.f32.mrf.mxu0
    %v2565 = vadd.f32 %v2545, %v2564
    %2566 = vdwg.mxu0
    %2567 = vmatpush.msra.mxu0 %v2256
    %2568 = vmatpush.msra.mxu0 %v2252
    %2569 = vmatpush.msra.mxu0 %v2248
    %2570 = vmatpush.msra.mxu0 %v2244
    %2571 = vmatpush.msra.mxu0 %v2240
    %2572 = vmatpush.msra.mxu0 %v2236
    %2573 = vmatpush.msra.mxu0 %v2232
    %2574 = vmatpush.msra.mxu0 %v2228
    %2575 = vmatpush.msra.mxu0 %v2224
    %2576 = vmatpush.msra.mxu0 %v2220
    %2577 = vmatpush.msra.mxu0 %v2216
    %2578 = vmatpush.msra.mxu0 %v2212
    %2579 = vmatpush.msra.mxu0 %v2208
    %2580 = vmatpush.msra.mxu0 %v2204
    %2581 = vmatpush.msra.mxu0 %v2200
    %2582 = vmatpush.msra.mxu0 %v2196
    %2583 = vmatmul.f32.gmra.mxu0 %v2000
    %v2584 = vpop.f32.mrf.mxu0
    %v2585 = vadd.f32 %v2565, %v2584
    %2586 = vdwg.mxu0
    %v2587 = vld [vmem:[#allocation47] sm:$0xff]
    %v2588 = vld [vmem:[#allocation47 + $0x8] sm:$0xff]
    %v2589 = vld [vmem:[#allocation47 + $0x10] sm:$0xff]
    %v2590 = vld [vmem:[#allocation47 + $0x18] sm:$0xff]
    %v2591 = vld [vmem:[#allocation47 + $0x20] sm:$0xff]
    %v2592 = vld [vmem:[#allocation47 + $0x28] sm:$0xff]
    %v2593 = vld [vmem:[#allocation47 + $0x30] sm:$0xff]
    %v2594 = vld [vmem:[#allocation47 + $0x38] sm:$0xff]
    %v2595 = vld [vmem:[#allocation47 + $0x40] sm:$0xff]
    %v2596 = vld [vmem:[#allocation47 + $0x48] sm:$0xff]
    %v2597 = vld [vmem:[#allocation47 + $0x50] sm:$0xff]
    %v2598 = vld [vmem:[#allocation47 + $0x58] sm:$0xff]
    %v2599 = vld [vmem:[#allocation47 + $0x60] sm:$0xff]
    %v2600 = vld [vmem:[#allocation47 + $0x68] sm:$0xff]
    %v2601 = vld [vmem:[#allocation47 + $0x70] sm:$0xff]
    %v2602 = vld [vmem:[#allocation47 + $0x78] sm:$0xff]
    %v2603 = vld [vmem:[#allocation47 + $0x80] sm:$0xff]
    %v2604 = vld [vmem:[#allocation47 + $0x88] sm:$0xff]
    %v2605 = vld [vmem:[#allocation47 + $0x90] sm:$0xff]
    %v2606 = vld [vmem:[#allocation47 + $0x98] sm:$0xff]
    %v2607 = vld [vmem:[#allocation47 + $0xa0] sm:$0xff]
    %v2608 = vld [vmem:[#allocation47 + $0xa8] sm:$0xff]
    %v2609 = vld [vmem:[#allocation47 + $0xb0] sm:$0xff]
    %v2610 = vld [vmem:[#allocation47 + $0xb8] sm:$0xff]
    %v2611 = vld [vmem:[#allocation47 + $0xc0] sm:$0xff]
    %v2612 = vld [vmem:[#allocation47 + $0xc8] sm:$0xff]
    %v2613 = vld [vmem:[#allocation47 + $0xd0] sm:$0xff]
    %v2614 = vld [vmem:[#allocation47 + $0xd8] sm:$0xff]
    %v2615 = vld [vmem:[#allocation47 + $0xe0] sm:$0xff]
    %v2616 = vld [vmem:[#allocation47 + $0xe8] sm:$0xff]
    %v2617 = vld [vmem:[#allocation47 + $0xf0] sm:$0xff]
    %v2618 = vld [vmem:[#allocation47 + $0xf8] sm:$0xff]
    %v2619 = vld [vmem:[#allocation47 + $0x100] sm:$0xff]
    %v2620 = vld [vmem:[#allocation47 + $0x108] sm:$0xff]
    %v2621 = vld [vmem:[#allocation47 + $0x110] sm:$0xff]
    %v2622 = vld [vmem:[#allocation47 + $0x118] sm:$0xff]
    %v2623 = vld [vmem:[#allocation47 + $0x120] sm:$0xff]
    %v2624 = vld [vmem:[#allocation47 + $0x128] sm:$0xff]
    %v2625 = vld [vmem:[#allocation47 + $0x130] sm:$0xff]
    %v2626 = vld [vmem:[#allocation47 + $0x138] sm:$0xff]
    %v2627 = vld [vmem:[#allocation47 + $0x140] sm:$0xff]
    %v2628 = vld [vmem:[#allocation47 + $0x148] sm:$0xff]
    %v2629 = vld [vmem:[#allocation47 + $0x150] sm:$0xff]
    %v2630 = vld [vmem:[#allocation47 + $0x158] sm:$0xff]
    %v2631 = vld [vmem:[#allocation47 + $0x160] sm:$0xff]
    %v2632 = vld [vmem:[#allocation47 + $0x168] sm:$0xff]
    %v2633 = vld [vmem:[#allocation47 + $0x170] sm:$0xff]
    %v2634 = vld [vmem:[#allocation47 + $0x178] sm:$0xff]
    %v2635 = vld [vmem:[#allocation47 + $0x180] sm:$0xff]
    %v2636 = vld [vmem:[#allocation47 + $0x188] sm:$0xff]
    %v2637 = vld [vmem:[#allocation47 + $0x190] sm:$0xff]
    %v2638 = vld [vmem:[#allocation47 + $0x198] sm:$0xff]
    %v2639 = vld [vmem:[#allocation47 + $0x1a0] sm:$0xff]
    %v2640 = vld [vmem:[#allocation47 + $0x1a8] sm:$0xff]
    %v2641 = vld [vmem:[#allocation47 + $0x1b0] sm:$0xff]
    %v2642 = vld [vmem:[#allocation47 + $0x1b8] sm:$0xff]
    %v2643 = vld [vmem:[#allocation47 + $0x1c0] sm:$0xff]
    %v2644 = vld [vmem:[#allocation47 + $0x1c8] sm:$0xff]
    %v2645 = vld [vmem:[#allocation47 + $0x1d0] sm:$0xff]
    %v2646 = vld [vmem:[#allocation47 + $0x1d8] sm:$0xff]
    %v2647 = vld [vmem:[#allocation47 + $0x1e0] sm:$0xff]
    %v2648 = vld [vmem:[#allocation47 + $0x1e8] sm:$0xff]
    %v2649 = vld [vmem:[#allocation47 + $0x1f0] sm:$0xff]
    %v2650 = vld [vmem:[#allocation47 + $0x1f8] sm:$0xff]
    %v2651 = vld [vmem:[#allocation47 + $0x200] sm:$0xff]
    %v2652 = vld [vmem:[#allocation47 + $0x208] sm:$0xff]
    %v2653 = vld [vmem:[#allocation47 + $0x210] sm:$0xff]
    %v2654 = vld [vmem:[#allocation47 + $0x218] sm:$0xff]
    %v2655 = vld [vmem:[#allocation47 + $0x220] sm:$0xff]
    %v2656 = vld [vmem:[#allocation47 + $0x228] sm:$0xff]
    %v2657 = vld [vmem:[#allocation47 + $0x230] sm:$0xff]
    %v2658 = vld [vmem:[#allocation47 + $0x238] sm:$0xff]
    %v2659 = vld [vmem:[#allocation47 + $0x240] sm:$0xff]
    %v2660 = vld [vmem:[#allocation47 + $0x248] sm:$0xff]
    %v2661 = vld [vmem:[#allocation47 + $0x250] sm:$0xff]
    %v2662 = vld [vmem:[#allocation47 + $0x258] sm:$0xff]
    %v2663 = vld [vmem:[#allocation47 + $0x260] sm:$0xff]
    %v2664 = vld [vmem:[#allocation47 + $0x268] sm:$0xff]
    %v2665 = vld [vmem:[#allocation47 + $0x270] sm:$0xff]
    %v2666 = vld [vmem:[#allocation47 + $0x278] sm:$0xff]
    %v2667 = vld [vmem:[#allocation47 + $0x280] sm:$0xff]
    %v2668 = vld [vmem:[#allocation47 + $0x288] sm:$0xff]
    %v2669 = vld [vmem:[#allocation47 + $0x290] sm:$0xff]
    %v2670 = vld [vmem:[#allocation47 + $0x298] sm:$0xff]
    %v2671 = vld [vmem:[#allocation47 + $0x2a0] sm:$0xff]
    %v2672 = vld [vmem:[#allocation47 + $0x2a8] sm:$0xff]
    %v2673 = vld [vmem:[#allocation47 + $0x2b0] sm:$0xff]
    %v2674 = vld [vmem:[#allocation47 + $0x2b8] sm:$0xff]
    %v2675 = vld [vmem:[#allocation47 + $0x2c0] sm:$0xff]
    %v2676 = vld [vmem:[#allocation47 + $0x2c8] sm:$0xff]
    %v2677 = vld [vmem:[#allocation47 + $0x2d0] sm:$0xff]
    %v2678 = vld [vmem:[#allocation47 + $0x2d8] sm:$0xff]
    %v2679 = vld [vmem:[#allocation47 + $0x2e0] sm:$0xff]
    %v2680 = vld [vmem:[#allocation47 + $0x2e8] sm:$0xff]
    %v2681 = vld [vmem:[#allocation47 + $0x2f0] sm:$0xff]
    %v2682 = vld [vmem:[#allocation47 + $0x2f8] sm:$0xff]
    %v2683 = vld [vmem:[#allocation47 + $0x300] sm:$0xff]
    %v2684 = vld [vmem:[#allocation47 + $0x308] sm:$0xff]
    %v2685 = vld [vmem:[#allocation47 + $0x310] sm:$0xff]
    %v2686 = vld [vmem:[#allocation47 + $0x318] sm:$0xff]
    %v2687 = vld [vmem:[#allocation47 + $0x320] sm:$0xff]
    %v2688 = vld [vmem:[#allocation47 + $0x328] sm:$0xff]
    %v2689 = vld [vmem:[#allocation47 + $0x330] sm:$0xff]
    %v2690 = vld [vmem:[#allocation47 + $0x338] sm:$0xff]
    %v2691 = vld [vmem:[#allocation47 + $0x340] sm:$0xff]
    %v2692 = vld [vmem:[#allocation47 + $0x348] sm:$0xff]
    %v2693 = vld [vmem:[#allocation47 + $0x350] sm:$0xff]
    %v2694 = vld [vmem:[#allocation47 + $0x358] sm:$0xff]
    %v2695 = vld [vmem:[#allocation47 + $0x360] sm:$0xff]
    %v2696 = vld [vmem:[#allocation47 + $0x368] sm:$0xff]
    %v2697 = vld [vmem:[#allocation47 + $0x370] sm:$0xff]
    %v2698 = vld [vmem:[#allocation47 + $0x378] sm:$0xff]
    %v2699 = vld [vmem:[#allocation47 + $0x380] sm:$0xff]
    %v2700 = vld [vmem:[#allocation47 + $0x388] sm:$0xff]
    %v2701 = vld [vmem:[#allocation47 + $0x390] sm:$0xff]
    %v2702 = vld [vmem:[#allocation47 + $0x398] sm:$0xff]
    %v2703 = vld [vmem:[#allocation47 + $0x3a0] sm:$0xff]
    %v2704 = vld [vmem:[#allocation47 + $0x3a8] sm:$0xff]
    %v2705 = vld [vmem:[#allocation47 + $0x3b0] sm:$0xff]
    %v2706 = vld [vmem:[#allocation47 + $0x3b8] sm:$0xff]
    %v2707 = vld [vmem:[#allocation47 + $0x3c0] sm:$0xff]
    %v2708 = vld [vmem:[#allocation47 + $0x3c8] sm:$0xff]
    %v2709 = vld [vmem:[#allocation47 + $0x3d0] sm:$0xff]
    %v2710 = vld [vmem:[#allocation47 + $0x3d8] sm:$0xff]
    %v2711 = vld [vmem:[#allocation47 + $0x3e0] sm:$0xff]
    %v2712 = vld [vmem:[#allocation47 + $0x3e8] sm:$0xff]
    %v2713 = vld [vmem:[#allocation47 + $0x3f0] sm:$0xff]
    %v2714 = vld [vmem:[#allocation47 + $0x3f8] sm:$0xff]
    %v2715 = vld [vmem:[%s73] sm:$0xf]
    %v2717 = vperm.slane %v2715, 0
    %v2718 = vperm.slane %v2715, 1
    %v2719 = vperm.slane %v2715, 2
    %v2720 = vperm.slane %v2715, 3
    %2725 = vmatpush.msra.mxu0 %v2647
    %2726 = vmatpush.msra.mxu0 %v2643
    %2727 = vmatpush.msra.mxu0 %v2639
    %2728 = vmatpush.msra.mxu0 %v2635
    %2729 = vmatpush.msra.mxu0 %v2631
    %2730 = vmatpush.msra.mxu0 %v2627
    %2731 = vmatpush.msra.mxu0 %v2623
    %2732 = vmatpush.msra.mxu0 %v2619
    %2733 = vmatpush.msra.mxu0 %v2615
    %2734 = vmatpush.msra.mxu0 %v2611
    %2735 = vmatpush.msra.mxu0 %v2607
    %2736 = vmatpush.msra.mxu0 %v2603
    %2737 = vmatpush.msra.mxu0 %v2599
    %2738 = vmatpush.msra.mxu0 %v2595
    %2739 = vmatpush.msra.mxu0 %v2591
    %2740 = vmatpush.msra.mxu0 %v2587
    %2741 = vmatmul.f32.gmra.mxu0 %v1697
    %v2742 = vpop.f32.mrf.mxu0
    %v2743 = vadd.f32 %v2717, %v2742
    %2744 = vdwg.mxu0
    %2745 = vmatpush.msra.mxu0 %v2711
    %2746 = vmatpush.msra.mxu0 %v2707
    %2747 = vmatpush.msra.mxu0 %v2703
    %2748 = vmatpush.msra.mxu0 %v2699
    %2749 = vmatpush.msra.mxu0 %v2695
    %2750 = vmatpush.msra.mxu0 %v2691
    %2751 = vmatpush.msra.mxu0 %v2687
    %2752 = vmatpush.msra.mxu0 %v2683
    %2753 = vmatpush.msra.mxu0 %v2679
    %2754 = vmatpush.msra.mxu0 %v2675
    %2755 = vmatpush.msra.mxu0 %v2671
    %2756 = vmatpush.msra.mxu0 %v2667
    %2757 = vmatpush.msra.mxu0 %v2663
    %2758 = vmatpush.msra.mxu0 %v2659
    %2759 = vmatpush.msra.mxu0 %v2655
    %2760 = vmatpush.msra.mxu0 %v2651
    %2761 = vmatmul.f32.gmra.mxu0 %v1698
    %v2762 = vpop.f32.mrf.mxu0
    %v2763 = vadd.f32 %v2743, %v2762
    %2764 = vdwg.mxu0
    %2765 = vmatpush.msra.mxu0 %v2648
    %2766 = vmatpush.msra.mxu0 %v2644
    %2767 = vmatpush.msra.mxu0 %v2640
    %2768 = vmatpush.msra.mxu0 %v2636
    %2769 = vmatpush.msra.mxu0 %v2632
    %2770 = vmatpush.msra.mxu0 %v2628
    %2771 = vmatpush.msra.mxu0 %v2624
    %2772 = vmatpush.msra.mxu0 %v2620
    %2773 = vmatpush.msra.mxu0 %v2616
    %2774 = vmatpush.msra.mxu0 %v2612
    %2775 = vmatpush.msra.mxu0 %v2608
    %2776 = vmatpush.msra.mxu0 %v2604
    %2777 = vmatpush.msra.mxu0 %v2600
    %2778 = vmatpush.msra.mxu0 %v2596
    %2779 = vmatpush.msra.mxu0 %v2592
    %2780 = vmatpush.msra.mxu0 %v2588
    %2781 = vmatmul.f32.gmra.mxu0 %v1697
    %v2782 = vpop.f32.mrf.mxu0
    %v2783 = vadd.f32 %v2718, %v2782
    %2784 = vdwg.mxu0
    %2785 = vmatpush.msra.mxu0 %v2712
    %2786 = vmatpush.msra.mxu0 %v2708
    %2787 = vmatpush.msra.mxu0 %v2704
    %2788 = vmatpush.msra.mxu0 %v2700
    %2789 = vmatpush.msra.mxu0 %v2696
    %2790 = vmatpush.msra.mxu0 %v2692
    %2791 = vmatpush.msra.mxu0 %v2688
    %2792 = vmatpush.msra.mxu0 %v2684
    %2793 = vmatpush.msra.mxu0 %v2680
    %2794 = vmatpush.msra.mxu0 %v2676
    %2795 = vmatpush.msra.mxu0 %v2672
    %2796 = vmatpush.msra.mxu0 %v2668
    %2797 = vmatpush.msra.mxu0 %v2664
    %2798 = vmatpush.msra.mxu0 %v2660
    %2799 = vmatpush.msra.mxu0 %v2656
    %2800 = vmatpush.msra.mxu0 %v2652
    %2801 = vmatmul.f32.gmra.mxu0 %v1698
    %v2802 = vpop.f32.mrf.mxu0
    %v2803 = vadd.f32 %v2783, %v2802
    %2804 = vdwg.mxu0
    %2805 = vmatpush.msra.mxu0 %v2649
    %2806 = vmatpush.msra.mxu0 %v2645
    %2807 = vmatpush.msra.mxu0 %v2641
    %2808 = vmatpush.msra.mxu0 %v2637
    %2809 = vmatpush.msra.mxu0 %v2633
    %2810 = vmatpush.msra.mxu0 %v2629
    %2811 = vmatpush.msra.mxu0 %v2625
    %2812 = vmatpush.msra.mxu0 %v2621
    %2813 = vmatpush.msra.mxu0 %v2617
    %2814 = vmatpush.msra.mxu0 %v2613
    %2815 = vmatpush.msra.mxu0 %v2609
    %2816 = vmatpush.msra.mxu0 %v2605
    %2817 = vmatpush.msra.mxu0 %v2601
    %2818 = vmatpush.msra.mxu0 %v2597
    %2819 = vmatpush.msra.mxu0 %v2593
    %2820 = vmatpush.msra.mxu0 %v2589
    %2821 = vmatmul.f32.gmra.mxu0 %v1697
    %v2822 = vpop.f32.mrf.mxu0
    %v2823 = vadd.f32 %v2719, %v2822
    %2824 = vdwg.mxu0
    %2825 = vmatpush.msra.mxu0 %v2713
    %2826 = vmatpush.msra.mxu0 %v2709
    %2827 = vmatpush.msra.mxu0 %v2705
    %2828 = vmatpush.msra.mxu0 %v2701
    %2829 = vmatpush.msra.mxu0 %v2697
    %2830 = vmatpush.msra.mxu0 %v2693
    %2831 = vmatpush.msra.mxu0 %v2689
    %2832 = vmatpush.msra.mxu0 %v2685
    %2833 = vmatpush.msra.mxu0 %v2681
    %2834 = vmatpush.msra.mxu0 %v2677
    %2835 = vmatpush.msra.mxu0 %v2673
    %2836 = vmatpush.msra.mxu0 %v2669
    %2837 = vmatpush.msra.mxu0 %v2665
    %2838 = vmatpush.msra.mxu0 %v2661
    %2839 = vmatpush.msra.mxu0 %v2657
    %2840 = vmatpush.msra.mxu0 %v2653
    %2841 = vmatmul.f32.gmra.mxu0 %v1698
    %v2842 = vpop.f32.mrf.mxu0
    %v2843 = vadd.f32 %v2823, %v2842
    %2844 = vdwg.mxu0
    %2845 = vmatpush.msra.mxu0 %v2650
    %2846 = vmatpush.msra.mxu0 %v2646
    %2847 = vmatpush.msra.mxu0 %v2642
    %2848 = vmatpush.msra.mxu0 %v2638
    %2849 = vmatpush.msra.mxu0 %v2634
    %2850 = vmatpush.msra.mxu0 %v2630
    %2851 = vmatpush.msra.mxu0 %v2626
    %2852 = vmatpush.msra.mxu0 %v2622
    %2853 = vmatpush.msra.mxu0 %v2618
    %2854 = vmatpush.msra.mxu0 %v2614
    %2855 = vmatpush.msra.mxu0 %v2610
    %2856 = vmatpush.msra.mxu0 %v2606
    %2857 = vmatpush.msra.mxu0 %v2602
    %2858 = vmatpush.msra.mxu0 %v2598
    %2859 = vmatpush.msra.mxu0 %v2594
    %2860 = vmatpush.msra.mxu0 %v2590
    %2861 = vmatmul.f32.gmra.mxu0 %v1697
    %v2862 = vpop.f32.mrf.mxu0
    %v2863 = vadd.f32 %v2720, %v2862
    %2864 = vdwg.mxu0
    %2865 = vmatpush.msra.mxu0 %v2714
    %2866 = vmatpush.msra.mxu0 %v2710
    %2867 = vmatpush.msra.mxu0 %v2706
    %2868 = vmatpush.msra.mxu0 %v2702
    %2869 = vmatpush.msra.mxu0 %v2698
    %2870 = vmatpush.msra.mxu0 %v2694
    %2871 = vmatpush.msra.mxu0 %v2690
    %2872 = vmatpush.msra.mxu0 %v2686
    %2873 = vmatpush.msra.mxu0 %v2682
    %2874 = vmatpush.msra.mxu0 %v2678
    %2875 = vmatpush.msra.mxu0 %v2674
    %2876 = vmatpush.msra.mxu0 %v2670
    %2877 = vmatpush.msra.mxu0 %v2666
    %2878 = vmatpush.msra.mxu0 %v2662
    %2879 = vmatpush.msra.mxu0 %v2658
    %2880 = vmatpush.msra.mxu0 %v2654
    %2881 = vmatmul.f32.gmra.mxu0 %v1698
    %v2882 = vpop.f32.mrf.mxu0
    %v2883 = vadd.f32 %v2863, %v2882
    %2884 = vdwg.mxu0
    %v2885 = vadd.f32 %v2345, %v2763
    %v2886 = vadd.f32 %v2425, %v2803
    %v2887 = vadd.f32 %v2505, %v2843
    %v2888 = vadd.f32 %v2585, %v2883
    %v2889 = vmax.f32 %v2885, 0.0
    %v2890 = vmax.f32 %v2886, 0.0
    %v2891 = vmax.f32 %v2887, 0.0
    %v2892 = vmax.f32 %v2888, 0.0
    %v2893 = vld [vmem:[#allocation49] sm:$0xff]
    %v2894 = vld [vmem:[#allocation49 + $0x8] sm:$0xff]
    %v2895 = vld [vmem:[#allocation49 + $0x10] sm:$0xff]
    %v2896 = vld [vmem:[#allocation49 + $0x18] sm:$0xff]
    %v2897 = vld [vmem:[#allocation49 + $0x20] sm:$0xff]
    %v2898 = vld [vmem:[#allocation49 + $0x28] sm:$0xff]
    %v2899 = vld [vmem:[#allocation49 + $0x30] sm:$0xff]
    %v2900 = vld [vmem:[#allocation49 + $0x38] sm:$0xff]
    %v2901 = vld [vmem:[#allocation49 + $0x40] sm:$0xff]
    %v2902 = vld [vmem:[#allocation49 + $0x48] sm:$0xff]
    %v2903 = vld [vmem:[#allocation49 + $0x50] sm:$0xff]
    %v2904 = vld [vmem:[#allocation49 + $0x58] sm:$0xff]
    %v2905 = vld [vmem:[#allocation49 + $0x60] sm:$0xff]
    %v2906 = vld [vmem:[#allocation49 + $0x68] sm:$0xff]
    %v2907 = vld [vmem:[#allocation49 + $0x70] sm:$0xff]
    %v2908 = vld [vmem:[#allocation49 + $0x78] sm:$0xff]
    %v2909 = vld [vmem:[#allocation49 + $0x80] sm:$0xff]
    %v2910 = vld [vmem:[#allocation49 + $0x88] sm:$0xff]
    %v2911 = vld [vmem:[#allocation49 + $0x90] sm:$0xff]
    %v2912 = vld [vmem:[#allocation49 + $0x98] sm:$0xff]
    %v2913 = vld [vmem:[#allocation49 + $0xa0] sm:$0xff]
    %v2914 = vld [vmem:[#allocation49 + $0xa8] sm:$0xff]
    %v2915 = vld [vmem:[#allocation49 + $0xb0] sm:$0xff]
    %v2916 = vld [vmem:[#allocation49 + $0xb8] sm:$0xff]
    %v2917 = vld [vmem:[#allocation49 + $0xc0] sm:$0xff]
    %v2918 = vld [vmem:[#allocation49 + $0xc8] sm:$0xff]
    %v2919 = vld [vmem:[#allocation49 + $0xd0] sm:$0xff]
    %v2920 = vld [vmem:[#allocation49 + $0xd8] sm:$0xff]
    %v2921 = vld [vmem:[#allocation49 + $0xe0] sm:$0xff]
    %v2922 = vld [vmem:[#allocation49 + $0xe8] sm:$0xff]
    %v2923 = vld [vmem:[#allocation49 + $0xf0] sm:$0xff]
    %v2924 = vld [vmem:[#allocation49 + $0xf8] sm:$0xff]
    %v2925 = vld [vmem:[#allocation49 + $0x100] sm:$0xff]
    %v2926 = vld [vmem:[#allocation49 + $0x108] sm:$0xff]
    %v2927 = vld [vmem:[#allocation49 + $0x110] sm:$0xff]
    %v2928 = vld [vmem:[#allocation49 + $0x118] sm:$0xff]
    %v2929 = vld [vmem:[#allocation49 + $0x120] sm:$0xff]
    %v2930 = vld [vmem:[#allocation49 + $0x128] sm:$0xff]
    %v2931 = vld [vmem:[#allocation49 + $0x130] sm:$0xff]
    %v2932 = vld [vmem:[#allocation49 + $0x138] sm:$0xff]
    %v2933 = vld [vmem:[#allocation49 + $0x140] sm:$0xff]
    %v2934 = vld [vmem:[#allocation49 + $0x148] sm:$0xff]
    %v2935 = vld [vmem:[#allocation49 + $0x150] sm:$0xff]
    %v2936 = vld [vmem:[#allocation49 + $0x158] sm:$0xff]
    %v2937 = vld [vmem:[#allocation49 + $0x160] sm:$0xff]
    %v2938 = vld [vmem:[#allocation49 + $0x168] sm:$0xff]
    %v2939 = vld [vmem:[#allocation49 + $0x170] sm:$0xff]
    %v2940 = vld [vmem:[#allocation49 + $0x178] sm:$0xff]
    %v2941 = vld [vmem:[#allocation49 + $0x180] sm:$0xff]
    %v2942 = vld [vmem:[#allocation49 + $0x188] sm:$0xff]
    %v2943 = vld [vmem:[#allocation49 + $0x190] sm:$0xff]
    %v2944 = vld [vmem:[#allocation49 + $0x198] sm:$0xff]
    %v2945 = vld [vmem:[#allocation49 + $0x1a0] sm:$0xff]
    %v2946 = vld [vmem:[#allocation49 + $0x1a8] sm:$0xff]
    %v2947 = vld [vmem:[#allocation49 + $0x1b0] sm:$0xff]
    %v2948 = vld [vmem:[#allocation49 + $0x1b8] sm:$0xff]
    %v2949 = vld [vmem:[#allocation49 + $0x1c0] sm:$0xff]
    %v2950 = vld [vmem:[#allocation49 + $0x1c8] sm:$0xff]
    %v2951 = vld [vmem:[#allocation49 + $0x1d0] sm:$0xff]
    %v2952 = vld [vmem:[#allocation49 + $0x1d8] sm:$0xff]
    %v2953 = vld [vmem:[#allocation49 + $0x1e0] sm:$0xff]
    %v2954 = vld [vmem:[#allocation49 + $0x1e8] sm:$0xff]
    %v2955 = vld [vmem:[#allocation49 + $0x1f0] sm:$0xff]
    %v2956 = vld [vmem:[#allocation49 + $0x1f8] sm:$0xff]
    %v2957 = vld [vmem:[#allocation49 + $0x200] sm:$0xff]
    %v2958 = vld [vmem:[#allocation49 + $0x208] sm:$0xff]
    %v2959 = vld [vmem:[#allocation49 + $0x210] sm:$0xff]
    %v2960 = vld [vmem:[#allocation49 + $0x218] sm:$0xff]
    %v2961 = vld [vmem:[#allocation49 + $0x220] sm:$0xff]
    %v2962 = vld [vmem:[#allocation49 + $0x228] sm:$0xff]
    %v2963 = vld [vmem:[#allocation49 + $0x230] sm:$0xff]
    %v2964 = vld [vmem:[#allocation49 + $0x238] sm:$0xff]
    %v2965 = vld [vmem:[#allocation49 + $0x240] sm:$0xff]
    %v2966 = vld [vmem:[#allocation49 + $0x248] sm:$0xff]
    %v2967 = vld [vmem:[#allocation49 + $0x250] sm:$0xff]
    %v2968 = vld [vmem:[#allocation49 + $0x258] sm:$0xff]
    %v2969 = vld [vmem:[#allocation49 + $0x260] sm:$0xff]
    %v2970 = vld [vmem:[#allocation49 + $0x268] sm:$0xff]
    %v2971 = vld [vmem:[#allocation49 + $0x270] sm:$0xff]
    %v2972 = vld [vmem:[#allocation49 + $0x278] sm:$0xff]
    %v2973 = vld [vmem:[#allocation49 + $0x280] sm:$0xff]
    %v2974 = vld [vmem:[#allocation49 + $0x288] sm:$0xff]
    %v2975 = vld [vmem:[#allocation49 + $0x290] sm:$0xff]
    %v2976 = vld [vmem:[#allocation49 + $0x298] sm:$0xff]
    %v2977 = vld [vmem:[#allocation49 + $0x2a0] sm:$0xff]
    %v2978 = vld [vmem:[#allocation49 + $0x2a8] sm:$0xff]
    %v2979 = vld [vmem:[#allocation49 + $0x2b0] sm:$0xff]
    %v2980 = vld [vmem:[#allocation49 + $0x2b8] sm:$0xff]
    %v2981 = vld [vmem:[#allocation49 + $0x2c0] sm:$0xff]
    %v2982 = vld [vmem:[#allocation49 + $0x2c8] sm:$0xff]
    %v2983 = vld [vmem:[#allocation49 + $0x2d0] sm:$0xff]
    %v2984 = vld [vmem:[#allocation49 + $0x2d8] sm:$0xff]
    %v2985 = vld [vmem:[#allocation49 + $0x2e0] sm:$0xff]
    %v2986 = vld [vmem:[#allocation49 + $0x2e8] sm:$0xff]
    %v2987 = vld [vmem:[#allocation49 + $0x2f0] sm:$0xff]
    %v2988 = vld [vmem:[#allocation49 + $0x2f8] sm:$0xff]
    %v2989 = vld [vmem:[#allocation49 + $0x300] sm:$0xff]
    %v2990 = vld [vmem:[#allocation49 + $0x308] sm:$0xff]
    %v2991 = vld [vmem:[#allocation49 + $0x310] sm:$0xff]
    %v2992 = vld [vmem:[#allocation49 + $0x318] sm:$0xff]
    %v2993 = vld [vmem:[#allocation49 + $0x320] sm:$0xff]
    %v2994 = vld [vmem:[#allocation49 + $0x328] sm:$0xff]
    %v2995 = vld [vmem:[#allocation49 + $0x330] sm:$0xff]
    %v2996 = vld [vmem:[#allocation49 + $0x338] sm:$0xff]
    %v2997 = vld [vmem:[#allocation49 + $0x340] sm:$0xff]
    %v2998 = vld [vmem:[#allocation49 + $0x348] sm:$0xff]
    %v2999 = vld [vmem:[#allocation49 + $0x350] sm:$0xff]
    %v3000 = vld [vmem:[#allocation49 + $0x358] sm:$0xff]
    %v3001 = vld [vmem:[#allocation49 + $0x360] sm:$0xff]
    %v3002 = vld [vmem:[#allocation49 + $0x368] sm:$0xff]
    %v3003 = vld [vmem:[#allocation49 + $0x370] sm:$0xff]
    %v3004 = vld [vmem:[#allocation49 + $0x378] sm:$0xff]
    %v3005 = vld [vmem:[#allocation49 + $0x380] sm:$0xff]
    %v3006 = vld [vmem:[#allocation49 + $0x388] sm:$0xff]
    %v3007 = vld [vmem:[#allocation49 + $0x390] sm:$0xff]
    %v3008 = vld [vmem:[#allocation49 + $0x398] sm:$0xff]
    %v3009 = vld [vmem:[#allocation49 + $0x3a0] sm:$0xff]
    %v3010 = vld [vmem:[#allocation49 + $0x3a8] sm:$0xff]
    %v3011 = vld [vmem:[#allocation49 + $0x3b0] sm:$0xff]
    %v3012 = vld [vmem:[#allocation49 + $0x3b8] sm:$0xff]
    %v3013 = vld [vmem:[#allocation49 + $0x3c0] sm:$0xff]
    %v3014 = vld [vmem:[#allocation49 + $0x3c8] sm:$0xff]
    %v3015 = vld [vmem:[#allocation49 + $0x3d0] sm:$0xff]
    %v3016 = vld [vmem:[#allocation49 + $0x3d8] sm:$0xff]
    %v3017 = vld [vmem:[#allocation49 + $0x3e0] sm:$0xff]
    %v3018 = vld [vmem:[#allocation49 + $0x3e8] sm:$0xff]
    %v3019 = vld [vmem:[#allocation49 + $0x3f0] sm:$0xff]
    %v3020 = vld [vmem:[#allocation49 + $0x3f8] sm:$0xff]
    %v3021 = vld [vmem:[#allocation49 + $0x400] sm:$0xff]
    %v3022 = vld [vmem:[#allocation49 + $0x408] sm:$0xff]
    %v3023 = vld [vmem:[#allocation49 + $0x410] sm:$0xff]
    %v3024 = vld [vmem:[#allocation49 + $0x418] sm:$0xff]
    %v3025 = vld [vmem:[#allocation49 + $0x420] sm:$0xff]
    %v3026 = vld [vmem:[#allocation49 + $0x428] sm:$0xff]
    %v3027 = vld [vmem:[#allocation49 + $0x430] sm:$0xff]
    %v3028 = vld [vmem:[#allocation49 + $0x438] sm:$0xff]
    %v3029 = vld [vmem:[#allocation49 + $0x440] sm:$0xff]
    %v3030 = vld [vmem:[#allocation49 + $0x448] sm:$0xff]
    %v3031 = vld [vmem:[#allocation49 + $0x450] sm:$0xff]
    %v3032 = vld [vmem:[#allocation49 + $0x458] sm:$0xff]
    %v3033 = vld [vmem:[#allocation49 + $0x460] sm:$0xff]
    %v3034 = vld [vmem:[#allocation49 + $0x468] sm:$0xff]
    %v3035 = vld [vmem:[#allocation49 + $0x470] sm:$0xff]
    %v3036 = vld [vmem:[#allocation49 + $0x478] sm:$0xff]
    %v3037 = vld [vmem:[#allocation49 + $0x480] sm:$0xff]
    %v3038 = vld [vmem:[#allocation49 + $0x488] sm:$0xff]
    %v3039 = vld [vmem:[#allocation49 + $0x490] sm:$0xff]
    %v3040 = vld [vmem:[#allocation49 + $0x498] sm:$0xff]
    %v3041 = vld [vmem:[#allocation49 + $0x4a0] sm:$0xff]
    %v3042 = vld [vmem:[#allocation49 + $0x4a8] sm:$0xff]
    %v3043 = vld [vmem:[#allocation49 + $0x4b0] sm:$0xff]
    %v3044 = vld [vmem:[#allocation49 + $0x4b8] sm:$0xff]
    %v3045 = vld [vmem:[#allocation49 + $0x4c0] sm:$0xff]
    %v3046 = vld [vmem:[#allocation49 + $0x4c8] sm:$0xff]
    %v3047 = vld [vmem:[#allocation49 + $0x4d0] sm:$0xff]
    %v3048 = vld [vmem:[#allocation49 + $0x4d8] sm:$0xff]
    %v3049 = vld [vmem:[#allocation49 + $0x4e0] sm:$0xff]
    %v3050 = vld [vmem:[#allocation49 + $0x4e8] sm:$0xff]
    %v3051 = vld [vmem:[#allocation49 + $0x4f0] sm:$0xff]
    %v3052 = vld [vmem:[#allocation49 + $0x4f8] sm:$0xff]
    %v3053 = vld [vmem:[#allocation49 + $0x500] sm:$0xff]
    %v3054 = vld [vmem:[#allocation49 + $0x508] sm:$0xff]
    %v3055 = vld [vmem:[#allocation49 + $0x510] sm:$0xff]
    %v3056 = vld [vmem:[#allocation49 + $0x518] sm:$0xff]
    %v3057 = vld [vmem:[#allocation49 + $0x520] sm:$0xff]
    %v3058 = vld [vmem:[#allocation49 + $0x528] sm:$0xff]
    %v3059 = vld [vmem:[#allocation49 + $0x530] sm:$0xff]
    %v3060 = vld [vmem:[#allocation49 + $0x538] sm:$0xff]
    %v3061 = vld [vmem:[#allocation49 + $0x540] sm:$0xff]
    %v3062 = vld [vmem:[#allocation49 + $0x548] sm:$0xff]
    %v3063 = vld [vmem:[#allocation49 + $0x550] sm:$0xff]
    %v3064 = vld [vmem:[#allocation49 + $0x558] sm:$0xff]
    %v3065 = vld [vmem:[#allocation49 + $0x560] sm:$0xff]
    %v3066 = vld [vmem:[#allocation49 + $0x568] sm:$0xff]
    %v3067 = vld [vmem:[#allocation49 + $0x570] sm:$0xff]
    %v3068 = vld [vmem:[#allocation49 + $0x578] sm:$0xff]
    %v3069 = vld [vmem:[#allocation49 + $0x580] sm:$0xff]
    %v3070 = vld [vmem:[#allocation49 + $0x588] sm:$0xff]
    %v3071 = vld [vmem:[#allocation49 + $0x590] sm:$0xff]
    %v3072 = vld [vmem:[#allocation49 + $0x598] sm:$0xff]
    %v3073 = vld [vmem:[#allocation49 + $0x5a0] sm:$0xff]
    %v3074 = vld [vmem:[#allocation49 + $0x5a8] sm:$0xff]
    %v3075 = vld [vmem:[#allocation49 + $0x5b0] sm:$0xff]
    %v3076 = vld [vmem:[#allocation49 + $0x5b8] sm:$0xff]
    %v3077 = vld [vmem:[#allocation49 + $0x5c0] sm:$0xff]
    %v3078 = vld [vmem:[#allocation49 + $0x5c8] sm:$0xff]
    %v3079 = vld [vmem:[#allocation49 + $0x5d0] sm:$0xff]
    %v3080 = vld [vmem:[#allocation49 + $0x5d8] sm:$0xff]
    %v3081 = vld [vmem:[#allocation49 + $0x5e0] sm:$0xff]
    %v3082 = vld [vmem:[#allocation49 + $0x5e8] sm:$0xff]
    %v3083 = vld [vmem:[#allocation49 + $0x5f0] sm:$0xff]
    %v3084 = vld [vmem:[#allocation49 + $0x5f8] sm:$0xff]
    %v3085 = vld [vmem:[#allocation49 + $0x600] sm:$0xff]
    %v3086 = vld [vmem:[#allocation49 + $0x608] sm:$0xff]
    %v3087 = vld [vmem:[#allocation49 + $0x610] sm:$0xff]
    %v3088 = vld [vmem:[#allocation49 + $0x618] sm:$0xff]
    %v3089 = vld [vmem:[#allocation49 + $0x620] sm:$0xff]
    %v3090 = vld [vmem:[#allocation49 + $0x628] sm:$0xff]
    %v3091 = vld [vmem:[#allocation49 + $0x630] sm:$0xff]
    %v3092 = vld [vmem:[#allocation49 + $0x638] sm:$0xff]
    %v3093 = vld [vmem:[#allocation49 + $0x640] sm:$0xff]
    %v3094 = vld [vmem:[#allocation49 + $0x648] sm:$0xff]
    %v3095 = vld [vmem:[#allocation49 + $0x650] sm:$0xff]
    %v3096 = vld [vmem:[#allocation49 + $0x658] sm:$0xff]
    %v3097 = vld [vmem:[#allocation49 + $0x660] sm:$0xff]
    %v3098 = vld [vmem:[#allocation49 + $0x668] sm:$0xff]
    %v3099 = vld [vmem:[#allocation49 + $0x670] sm:$0xff]
    %v3100 = vld [vmem:[#allocation49 + $0x678] sm:$0xff]
    %v3101 = vld [vmem:[#allocation49 + $0x680] sm:$0xff]
    %v3102 = vld [vmem:[#allocation49 + $0x688] sm:$0xff]
    %v3103 = vld [vmem:[#allocation49 + $0x690] sm:$0xff]
    %v3104 = vld [vmem:[#allocation49 + $0x698] sm:$0xff]
    %v3105 = vld [vmem:[#allocation49 + $0x6a0] sm:$0xff]
    %v3106 = vld [vmem:[#allocation49 + $0x6a8] sm:$0xff]
    %v3107 = vld [vmem:[#allocation49 + $0x6b0] sm:$0xff]
    %v3108 = vld [vmem:[#allocation49 + $0x6b8] sm:$0xff]
    %v3109 = vld [vmem:[#allocation49 + $0x6c0] sm:$0xff]
    %v3110 = vld [vmem:[#allocation49 + $0x6c8] sm:$0xff]
    %v3111 = vld [vmem:[#allocation49 + $0x6d0] sm:$0xff]
    %v3112 = vld [vmem:[#allocation49 + $0x6d8] sm:$0xff]
    %v3113 = vld [vmem:[#allocation49 + $0x6e0] sm:$0xff]
    %v3114 = vld [vmem:[#allocation49 + $0x6e8] sm:$0xff]
    %v3115 = vld [vmem:[#allocation49 + $0x6f0] sm:$0xff]
    %v3116 = vld [vmem:[#allocation49 + $0x6f8] sm:$0xff]
    %v3117 = vld [vmem:[#allocation49 + $0x700] sm:$0xff]
    %v3118 = vld [vmem:[#allocation49 + $0x708] sm:$0xff]
    %v3119 = vld [vmem:[#allocation49 + $0x710] sm:$0xff]
    %v3120 = vld [vmem:[#allocation49 + $0x718] sm:$0xff]
    %v3121 = vld [vmem:[#allocation49 + $0x720] sm:$0xff]
    %v3122 = vld [vmem:[#allocation49 + $0x728] sm:$0xff]
    %v3123 = vld [vmem:[#allocation49 + $0x730] sm:$0xff]
    %v3124 = vld [vmem:[#allocation49 + $0x738] sm:$0xff]
    %v3125 = vld [vmem:[#allocation49 + $0x740] sm:$0xff]
    %v3126 = vld [vmem:[#allocation49 + $0x748] sm:$0xff]
    %v3127 = vld [vmem:[#allocation49 + $0x750] sm:$0xff]
    %v3128 = vld [vmem:[#allocation49 + $0x758] sm:$0xff]
    %v3129 = vld [vmem:[#allocation49 + $0x760] sm:$0xff]
    %v3130 = vld [vmem:[#allocation49 + $0x768] sm:$0xff]
    %v3131 = vld [vmem:[#allocation49 + $0x770] sm:$0xff]
    %v3132 = vld [vmem:[#allocation49 + $0x778] sm:$0xff]
    %v3133 = vld [vmem:[#allocation49 + $0x780] sm:$0xff]
    %v3134 = vld [vmem:[#allocation49 + $0x788] sm:$0xff]
    %v3135 = vld [vmem:[#allocation49 + $0x790] sm:$0xff]
    %v3136 = vld [vmem:[#allocation49 + $0x798] sm:$0xff]
    %v3137 = vld [vmem:[#allocation49 + $0x7a0] sm:$0xff]
    %v3138 = vld [vmem:[#allocation49 + $0x7a8] sm:$0xff]
    %v3139 = vld [vmem:[#allocation49 + $0x7b0] sm:$0xff]
    %v3140 = vld [vmem:[#allocation49 + $0x7b8] sm:$0xff]
    %v3141 = vld [vmem:[#allocation49 + $0x7c0] sm:$0xff]
    %v3142 = vld [vmem:[#allocation49 + $0x7c8] sm:$0xff]
    %v3143 = vld [vmem:[#allocation49 + $0x7d0] sm:$0xff]
    %v3144 = vld [vmem:[#allocation49 + $0x7d8] sm:$0xff]
    %v3145 = vld [vmem:[#allocation49 + $0x7e0] sm:$0xff]
    %v3146 = vld [vmem:[#allocation49 + $0x7e8] sm:$0xff]
    %v3147 = vld [vmem:[#allocation49 + $0x7f0] sm:$0xff]
    %v3148 = vld [vmem:[#allocation49 + $0x7f8] sm:$0xff]
    %v3149 = vld [vmem:[%s77] sm:$0xf]
    %v3151 = vperm.slane %v3149, 0
    %v3152 = vperm.slane %v3149, 1
    %v3153 = vperm.slane %v3149, 2
    %v3154 = vperm.slane %v3149, 3
    %3159 = vmatpush.msra.mxu0 %v2953
    %3160 = vmatpush.msra.mxu0 %v2949
    %3161 = vmatpush.msra.mxu0 %v2945
    %3162 = vmatpush.msra.mxu0 %v2941
    %3163 = vmatpush.msra.mxu0 %v2937
    %3164 = vmatpush.msra.mxu0 %v2933
    %3165 = vmatpush.msra.mxu0 %v2929
    %3166 = vmatpush.msra.mxu0 %v2925
    %3167 = vmatpush.msra.mxu0 %v2921
    %3168 = vmatpush.msra.mxu0 %v2917
    %3169 = vmatpush.msra.mxu0 %v2913
    %3170 = vmatpush.msra.mxu0 %v2909
    %3171 = vmatpush.msra.mxu0 %v2905
    %3172 = vmatpush.msra.mxu0 %v2901
    %3173 = vmatpush.msra.mxu0 %v2897
    %3174 = vmatpush.msra.mxu0 %v2893
    %3175 = vmatmul.f32.gmra.mxu0 %v2889
    %v3176 = vpop.f32.mrf.mxu0
    %v3177 = vadd.f32 %v3151, %v3176
    %3178 = vdwg.mxu0
    %3179 = vmatpush.msra.mxu0 %v3017
    %3180 = vmatpush.msra.mxu0 %v3013
    %3181 = vmatpush.msra.mxu0 %v3009
    %3182 = vmatpush.msra.mxu0 %v3005
    %3183 = vmatpush.msra.mxu0 %v3001
    %3184 = vmatpush.msra.mxu0 %v2997
    %3185 = vmatpush.msra.mxu0 %v2993
    %3186 = vmatpush.msra.mxu0 %v2989
    %3187 = vmatpush.msra.mxu0 %v2985
    %3188 = vmatpush.msra.mxu0 %v2981
    %3189 = vmatpush.msra.mxu0 %v2977
    %3190 = vmatpush.msra.mxu0 %v2973
    %3191 = vmatpush.msra.mxu0 %v2969
    %3192 = vmatpush.msra.mxu0 %v2965
    %3193 = vmatpush.msra.mxu0 %v2961
    %3194 = vmatpush.msra.mxu0 %v2957
    %3195 = vmatmul.f32.gmra.mxu0 %v2890
    %v3196 = vpop.f32.mrf.mxu0
    %v3197 = vadd.f32 %v3177, %v3196
    %3198 = vdwg.mxu0
    %3199 = vmatpush.msra.mxu0 %v3081
    %3200 = vmatpush.msra.mxu0 %v3077
    %3201 = vmatpush.msra.mxu0 %v3073
    %3202 = vmatpush.msra.mxu0 %v3069
    %3203 = vmatpush.msra.mxu0 %v3065
    %3204 = vmatpush.msra.mxu0 %v3061
    %3205 = vmatpush.msra.mxu0 %v3057
    %3206 = vmatpush.msra.mxu0 %v3053
    %3207 = vmatpush.msra.mxu0 %v3049
    %3208 = vmatpush.msra.mxu0 %v3045
    %3209 = vmatpush.msra.mxu0 %v3041
    %3210 = vmatpush.msra.mxu0 %v3037
    %3211 = vmatpush.msra.mxu0 %v3033
    %3212 = vmatpush.msra.mxu0 %v3029
    %3213 = vmatpush.msra.mxu0 %v3025
    %3214 = vmatpush.msra.mxu0 %v3021
    %3215 = vmatmul.f32.gmra.mxu0 %v2891
    %v3216 = vpop.f32.mrf.mxu0
    %v3217 = vadd.f32 %v3197, %v3216
    %3218 = vdwg.mxu0
    %3219 = vmatpush.msra.mxu0 %v3145
    %3220 = vmatpush.msra.mxu0 %v3141
    %3221 = vmatpush.msra.mxu0 %v3137
    %3222 = vmatpush.msra.mxu0 %v3133
    %3223 = vmatpush.msra.mxu0 %v3129
    %3224 = vmatpush.msra.mxu0 %v3125
    %3225 = vmatpush.msra.mxu0 %v3121
    %3226 = vmatpush.msra.mxu0 %v3117
    %3227 = vmatpush.msra.mxu0 %v3113
    %3228 = vmatpush.msra.mxu0 %v3109
    %3229 = vmatpush.msra.mxu0 %v3105
    %3230 = vmatpush.msra.mxu0 %v3101
    %3231 = vmatpush.msra.mxu0 %v3097
    %3232 = vmatpush.msra.mxu0 %v3093
    %3233 = vmatpush.msra.mxu0 %v3089
    %3234 = vmatpush.msra.mxu0 %v3085
    %3235 = vmatmul.f32.gmra.mxu0 %v2892
    %v3236 = vpop.f32.mrf.mxu0
    %v3237 = vadd.f32 %v3217, %v3236
    %3238 = vdwg.mxu0
    %3239 = vmatpush.msra.mxu0 %v2954
    %3240 = vmatpush.msra.mxu0 %v2950
    %3241 = vmatpush.msra.mxu0 %v2946
    %3242 = vmatpush.msra.mxu0 %v2942
    %3243 = vmatpush.msra.mxu0 %v2938
    %3244 = vmatpush.msra.mxu0 %v2934
    %3245 = vmatpush.msra.mxu0 %v2930
    %3246 = vmatpush.msra.mxu0 %v2926
    %3247 = vmatpush.msra.mxu0 %v2922
    %3248 = vmatpush.msra.mxu0 %v2918
    %3249 = vmatpush.msra.mxu0 %v2914
    %3250 = vmatpush.msra.mxu0 %v2910
    %3251 = vmatpush.msra.mxu0 %v2906
    %3252 = vmatpush.msra.mxu0 %v2902
    %3253 = vmatpush.msra.mxu0 %v2898
    %3254 = vmatpush.msra.mxu0 %v2894
    %3255 = vmatmul.f32.gmra.mxu0 %v2889
    %v3256 = vpop.f32.mrf.mxu0
    %v3257 = vadd.f32 %v3152, %v3256
    %3258 = vdwg.mxu0
    %3259 = vmatpush.msra.mxu0 %v3018
    %3260 = vmatpush.msra.mxu0 %v3014
    %3261 = vmatpush.msra.mxu0 %v3010
    %3262 = vmatpush.msra.mxu0 %v3006
    %3263 = vmatpush.msra.mxu0 %v3002
    %3264 = vmatpush.msra.mxu0 %v2998
    %3265 = vmatpush.msra.mxu0 %v2994
    %3266 = vmatpush.msra.mxu0 %v2990
    %3267 = vmatpush.msra.mxu0 %v2986
    %3268 = vmatpush.msra.mxu0 %v2982
    %3269 = vmatpush.msra.mxu0 %v2978
    %3270 = vmatpush.msra.mxu0 %v2974
    %3271 = vmatpush.msra.mxu0 %v2970
    %3272 = vmatpush.msra.mxu0 %v2966
    %3273 = vmatpush.msra.mxu0 %v2962
    %3274 = vmatpush.msra.mxu0 %v2958
    %3275 = vmatmul.f32.gmra.mxu0 %v2890
    %v3276 = vpop.f32.mrf.mxu0
    %v3277 = vadd.f32 %v3257, %v3276
    %3278 = vdwg.mxu0
    %3279 = vmatpush.msra.mxu0 %v3082
    %3280 = vmatpush.msra.mxu0 %v3078
    %3281 = vmatpush.msra.mxu0 %v3074
    %3282 = vmatpush.msra.mxu0 %v3070
    %3283 = vmatpush.msra.mxu0 %v3066
    %3284 = vmatpush.msra.mxu0 %v3062
    %3285 = vmatpush.msra.mxu0 %v3058
    %3286 = vmatpush.msra.mxu0 %v3054
    %3287 = vmatpush.msra.mxu0 %v3050
    %3288 = vmatpush.msra.mxu0 %v3046
    %3289 = vmatpush.msra.mxu0 %v3042
    %3290 = vmatpush.msra.mxu0 %v3038
    %3291 = vmatpush.msra.mxu0 %v3034
    %3292 = vmatpush.msra.mxu0 %v3030
    %3293 = vmatpush.msra.mxu0 %v3026
    %3294 = vmatpush.msra.mxu0 %v3022
    %3295 = vmatmul.f32.gmra.mxu0 %v2891
    %v3296 = vpop.f32.mrf.mxu0
    %v3297 = vadd.f32 %v3277, %v3296
    %3298 = vdwg.mxu0
    %3299 = vmatpush.msra.mxu0 %v3146
    %3300 = vmatpush.msra.mxu0 %v3142
    %3301 = vmatpush.msra.mxu0 %v3138
    %3302 = vmatpush.msra.mxu0 %v3134
    %3303 = vmatpush.msra.mxu0 %v3130
    %3304 = vmatpush.msra.mxu0 %v3126
    %3305 = vmatpush.msra.mxu0 %v3122
    %3306 = vmatpush.msra.mxu0 %v3118
    %3307 = vmatpush.msra.mxu0 %v3114
    %3308 = vmatpush.msra.mxu0 %v3110
    %3309 = vmatpush.msra.mxu0 %v3106
    %3310 = vmatpush.msra.mxu0 %v3102
    %3311 = vmatpush.msra.mxu0 %v3098
    %3312 = vmatpush.msra.mxu0 %v3094
    %3313 = vmatpush.msra.mxu0 %v3090
    %3314 = vmatpush.msra.mxu0 %v3086
    %3315 = vmatmul.f32.gmra.mxu0 %v2892
    %v3316 = vpop.f32.mrf.mxu0
    %v3317 = vadd.f32 %v3297, %v3316
    %3318 = vdwg.mxu0
    %3319 = vmatpush.msra.mxu0 %v2955
    %3320 = vmatpush.msra.mxu0 %v2951
    %3321 = vmatpush.msra.mxu0 %v2947
    %3322 = vmatpush.msra.mxu0 %v2943
    %3323 = vmatpush.msra.mxu0 %v2939
    %3324 = vmatpush.msra.mxu0 %v2935
    %3325 = vmatpush.msra.mxu0 %v2931
    %3326 = vmatpush.msra.mxu0 %v2927
    %3327 = vmatpush.msra.mxu0 %v2923
    %3328 = vmatpush.msra.mxu0 %v2919
    %3329 = vmatpush.msra.mxu0 %v2915
    %3330 = vmatpush.msra.mxu0 %v2911
    %3331 = vmatpush.msra.mxu0 %v2907
    %3332 = vmatpush.msra.mxu0 %v2903
    %3333 = vmatpush.msra.mxu0 %v2899
    %3334 = vmatpush.msra.mxu0 %v2895
    %3335 = vmatmul.f32.gmra.mxu0 %v2889
    %v3336 = vpop.f32.mrf.mxu0
    %v3337 = vadd.f32 %v3153, %v3336
    %3338 = vdwg.mxu0
    %3339 = vmatpush.msra.mxu0 %v3019
    %3340 = vmatpush.msra.mxu0 %v3015
    %3341 = vmatpush.msra.mxu0 %v3011
    %3342 = vmatpush.msra.mxu0 %v3007
    %3343 = vmatpush.msra.mxu0 %v3003
    %3344 = vmatpush.msra.mxu0 %v2999
    %3345 = vmatpush.msra.mxu0 %v2995
    %3346 = vmatpush.msra.mxu0 %v2991
    %3347 = vmatpush.msra.mxu0 %v2987
    %3348 = vmatpush.msra.mxu0 %v2983
    %3349 = vmatpush.msra.mxu0 %v2979
    %3350 = vmatpush.msra.mxu0 %v2975
    %3351 = vmatpush.msra.mxu0 %v2971
    %3352 = vmatpush.msra.mxu0 %v2967
    %3353 = vmatpush.msra.mxu0 %v2963
    %3354 = vmatpush.msra.mxu0 %v2959
    %3355 = vmatmul.f32.gmra.mxu0 %v2890
    %v3356 = vpop.f32.mrf.mxu0
    %v3357 = vadd.f32 %v3337, %v3356
    %3358 = vdwg.mxu0
    %3359 = vmatpush.msra.mxu0 %v3083
    %3360 = vmatpush.msra.mxu0 %v3079
    %3361 = vmatpush.msra.mxu0 %v3075
    %3362 = vmatpush.msra.mxu0 %v3071
    %3363 = vmatpush.msra.mxu0 %v3067
    %3364 = vmatpush.msra.mxu0 %v3063
    %3365 = vmatpush.msra.mxu0 %v3059
    %3366 = vmatpush.msra.mxu0 %v3055
    %3367 = vmatpush.msra.mxu0 %v3051
    %3368 = vmatpush.msra.mxu0 %v3047
    %3369 = vmatpush.msra.mxu0 %v3043
    %3370 = vmatpush.msra.mxu0 %v3039
    %3371 = vmatpush.msra.mxu0 %v3035
    %3372 = vmatpush.msra.mxu0 %v3031
    %3373 = vmatpush.msra.mxu0 %v3027
    %3374 = vmatpush.msra.mxu0 %v3023
    %3375 = vmatmul.f32.gmra.mxu0 %v2891
    %v3376 = vpop.f32.mrf.mxu0
    %v3377 = vadd.f32 %v3357, %v3376
    %3378 = vdwg.mxu0
    %3379 = vmatpush.msra.mxu0 %v3147
    %3380 = vmatpush.msra.mxu0 %v3143
    %3381 = vmatpush.msra.mxu0 %v3139
    %3382 = vmatpush.msra.mxu0 %v3135
    %3383 = vmatpush.msra.mxu0 %v3131
    %3384 = vmatpush.msra.mxu0 %v3127
    %3385 = vmatpush.msra.mxu0 %v3123
    %3386 = vmatpush.msra.mxu0 %v3119
    %3387 = vmatpush.msra.mxu0 %v3115
    %3388 = vmatpush.msra.mxu0 %v3111
    %3389 = vmatpush.msra.mxu0 %v3107
    %3390 = vmatpush.msra.mxu0 %v3103
    %3391 = vmatpush.msra.mxu0 %v3099
    %3392 = vmatpush.msra.mxu0 %v3095
    %3393 = vmatpush.msra.mxu0 %v3091
    %3394 = vmatpush.msra.mxu0 %v3087
    %3395 = vmatmul.f32.gmra.mxu0 %v2892
    %v3396 = vpop.f32.mrf.mxu0
    %v3397 = vadd.f32 %v3377, %v3396
    %3398 = vdwg.mxu0
    %3399 = vmatpush.msra.mxu0 %v2956
    %3400 = vmatpush.msra.mxu0 %v2952
    %3401 = vmatpush.msra.mxu0 %v2948
    %3402 = vmatpush.msra.mxu0 %v2944
    %3403 = vmatpush.msra.mxu0 %v2940
    %3404 = vmatpush.msra.mxu0 %v2936
    %3405 = vmatpush.msra.mxu0 %v2932
    %3406 = vmatpush.msra.mxu0 %v2928
    %3407 = vmatpush.msra.mxu0 %v2924
    %3408 = vmatpush.msra.mxu0 %v2920
    %3409 = vmatpush.msra.mxu0 %v2916
    %3410 = vmatpush.msra.mxu0 %v2912
    %3411 = vmatpush.msra.mxu0 %v2908
    %3412 = vmatpush.msra.mxu0 %v2904
    %3413 = vmatpush.msra.mxu0 %v2900
    %3414 = vmatpush.msra.mxu0 %v2896
    %3415 = vmatmul.f32.gmra.mxu0 %v2889
    %v3416 = vpop.f32.mrf.mxu0
    %v3417 = vadd.f32 %v3154, %v3416
    %3418 = vdwg.mxu0
    %3419 = vmatpush.msra.mxu0 %v3020
    %3420 = vmatpush.msra.mxu0 %v3016
    %3421 = vmatpush.msra.mxu0 %v3012
    %3422 = vmatpush.msra.mxu0 %v3008
    %3423 = vmatpush.msra.mxu0 %v3004
    %3424 = vmatpush.msra.mxu0 %v3000
    %3425 = vmatpush.msra.mxu0 %v2996
    %3426 = vmatpush.msra.mxu0 %v2992
    %3427 = vmatpush.msra.mxu0 %v2988
    %3428 = vmatpush.msra.mxu0 %v2984
    %3429 = vmatpush.msra.mxu0 %v2980
    %3430 = vmatpush.msra.mxu0 %v2976
    %3431 = vmatpush.msra.mxu0 %v2972
    %3432 = vmatpush.msra.mxu0 %v2968
    %3433 = vmatpush.msra.mxu0 %v2964
    %3434 = vmatpush.msra.mxu0 %v2960
    %3435 = vmatmul.f32.gmra.mxu0 %v2890
    %v3436 = vpop.f32.mrf.mxu0
    %v3437 = vadd.f32 %v3417, %v3436
    %3438 = vdwg.mxu0
    %3439 = vmatpush.msra.mxu0 %v3084
    %3440 = vmatpush.msra.mxu0 %v3080
    %3441 = vmatpush.msra.mxu0 %v3076
    %3442 = vmatpush.msra.mxu0 %v3072
    %3443 = vmatpush.msra.mxu0 %v3068
    %3444 = vmatpush.msra.mxu0 %v3064
    %3445 = vmatpush.msra.mxu0 %v3060
    %3446 = vmatpush.msra.mxu0 %v3056
    %3447 = vmatpush.msra.mxu0 %v3052
    %3448 = vmatpush.msra.mxu0 %v3048
    %3449 = vmatpush.msra.mxu0 %v3044
    %3450 = vmatpush.msra.mxu0 %v3040
    %3451 = vmatpush.msra.mxu0 %v3036
    %3452 = vmatpush.msra.mxu0 %v3032
    %3453 = vmatpush.msra.mxu0 %v3028
    %3454 = vmatpush.msra.mxu0 %v3024
    %3455 = vmatmul.f32.gmra.mxu0 %v2891
    %v3456 = vpop.f32.mrf.mxu0
    %v3457 = vadd.f32 %v3437, %v3456
    %3458 = vdwg.mxu0
    %3459 = vmatpush.msra.mxu0 %v3148
    %3460 = vmatpush.msra.mxu0 %v3144
    %3461 = vmatpush.msra.mxu0 %v3140
    %3462 = vmatpush.msra.mxu0 %v3136
    %3463 = vmatpush.msra.mxu0 %v3132
    %3464 = vmatpush.msra.mxu0 %v3128
    %3465 = vmatpush.msra.mxu0 %v3124
    %3466 = vmatpush.msra.mxu0 %v3120
    %3467 = vmatpush.msra.mxu0 %v3116
    %3468 = vmatpush.msra.mxu0 %v3112
    %3469 = vmatpush.msra.mxu0 %v3108
    %3470 = vmatpush.msra.mxu0 %v3104
    %3471 = vmatpush.msra.mxu0 %v3100
    %3472 = vmatpush.msra.mxu0 %v3096
    %3473 = vmatpush.msra.mxu0 %v3092
    %3474 = vmatpush.msra.mxu0 %v3088
    %3475 = vmatmul.f32.gmra.mxu0 %v2892
    %v3476 = vpop.f32.mrf.mxu0
    %v3477 = vadd.f32 %v3457, %v3476
    %3478 = vdwg.mxu0
    %v3479 = vmax.f32 %v3237, 0.0
    %v3480 = vmax.f32 %v3317, 0.0
    %v3481 = vmax.f32 %v3397, 0.0
    %v3482 = vmax.f32 %v3477, 0.0
    %v3483 = vld [vmem:[#allocation50] sm:$0xff]
    %v3484 = vld [vmem:[#allocation50 + $0x8] sm:$0xff]
    %v3485 = vld [vmem:[#allocation50 + $0x10] sm:$0xff]
    %v3486 = vld [vmem:[#allocation50 + $0x18] sm:$0xff]
    %v3487 = vld [vmem:[#allocation50 + $0x20] sm:$0xff]
    %v3488 = vld [vmem:[#allocation50 + $0x28] sm:$0xff]
    %v3489 = vld [vmem:[#allocation50 + $0x30] sm:$0xff]
    %v3490 = vld [vmem:[#allocation50 + $0x38] sm:$0xff]
    %v3491 = vld [vmem:[#allocation50 + $0x40] sm:$0xff]
    %v3492 = vld [vmem:[#allocation50 + $0x48] sm:$0xff]
    %v3493 = vld [vmem:[#allocation50 + $0x50] sm:$0xff]
    %v3494 = vld [vmem:[#allocation50 + $0x58] sm:$0xff]
    %v3495 = vld [vmem:[#allocation50 + $0x60] sm:$0xff]
    %v3496 = vld [vmem:[#allocation50 + $0x68] sm:$0xff]
    %v3497 = vld [vmem:[#allocation50 + $0x70] sm:$0xff]
    %v3498 = vld [vmem:[#allocation50 + $0x78] sm:$0xff]
    %v3499 = vld [vmem:[#allocation50 + $0x80] sm:$0xff]
    %v3500 = vld [vmem:[#allocation50 + $0x88] sm:$0xff]
    %v3501 = vld [vmem:[#allocation50 + $0x90] sm:$0xff]
    %v3502 = vld [vmem:[#allocation50 + $0x98] sm:$0xff]
    %v3503 = vld [vmem:[#allocation50 + $0xa0] sm:$0xff]
    %v3504 = vld [vmem:[#allocation50 + $0xa8] sm:$0xff]
    %v3505 = vld [vmem:[#allocation50 + $0xb0] sm:$0xff]
    %v3506 = vld [vmem:[#allocation50 + $0xb8] sm:$0xff]
    %v3507 = vld [vmem:[#allocation50 + $0xc0] sm:$0xff]
    %v3508 = vld [vmem:[#allocation50 + $0xc8] sm:$0xff]
    %v3509 = vld [vmem:[#allocation50 + $0xd0] sm:$0xff]
    %v3510 = vld [vmem:[#allocation50 + $0xd8] sm:$0xff]
    %v3511 = vld [vmem:[#allocation50 + $0xe0] sm:$0xff]
    %v3512 = vld [vmem:[#allocation50 + $0xe8] sm:$0xff]
    %v3513 = vld [vmem:[#allocation50 + $0xf0] sm:$0xff]
    %v3514 = vld [vmem:[#allocation50 + $0xf8] sm:$0xff]
    %v3515 = vld [vmem:[#allocation50 + $0x100] sm:$0xff]
    %v3516 = vld [vmem:[#allocation50 + $0x108] sm:$0xff]
    %v3517 = vld [vmem:[#allocation50 + $0x110] sm:$0xff]
    %v3518 = vld [vmem:[#allocation50 + $0x118] sm:$0xff]
    %v3519 = vld [vmem:[#allocation50 + $0x120] sm:$0xff]
    %v3520 = vld [vmem:[#allocation50 + $0x128] sm:$0xff]
    %v3521 = vld [vmem:[#allocation50 + $0x130] sm:$0xff]
    %v3522 = vld [vmem:[#allocation50 + $0x138] sm:$0xff]
    %v3523 = vld [vmem:[#allocation50 + $0x140] sm:$0xff]
    %v3524 = vld [vmem:[#allocation50 + $0x148] sm:$0xff]
    %v3525 = vld [vmem:[#allocation50 + $0x150] sm:$0xff]
    %v3526 = vld [vmem:[#allocation50 + $0x158] sm:$0xff]
    %v3527 = vld [vmem:[#allocation50 + $0x160] sm:$0xff]
    %v3528 = vld [vmem:[#allocation50 + $0x168] sm:$0xff]
    %v3529 = vld [vmem:[#allocation50 + $0x170] sm:$0xff]
    %v3530 = vld [vmem:[#allocation50 + $0x178] sm:$0xff]
    %v3531 = vld [vmem:[#allocation50 + $0x180] sm:$0xff]
    %v3532 = vld [vmem:[#allocation50 + $0x188] sm:$0xff]
    %v3533 = vld [vmem:[#allocation50 + $0x190] sm:$0xff]
    %v3534 = vld [vmem:[#allocation50 + $0x198] sm:$0xff]
    %v3535 = vld [vmem:[#allocation50 + $0x1a0] sm:$0xff]
    %v3536 = vld [vmem:[#allocation50 + $0x1a8] sm:$0xff]
    %v3537 = vld [vmem:[#allocation50 + $0x1b0] sm:$0xff]
    %v3538 = vld [vmem:[#allocation50 + $0x1b8] sm:$0xff]
    %v3539 = vld [vmem:[#allocation50 + $0x1c0] sm:$0xff]
    %v3540 = vld [vmem:[#allocation50 + $0x1c8] sm:$0xff]
    %v3541 = vld [vmem:[#allocation50 + $0x1d0] sm:$0xff]
    %v3542 = vld [vmem:[#allocation50 + $0x1d8] sm:$0xff]
    %v3543 = vld [vmem:[#allocation50 + $0x1e0] sm:$0xff]
    %v3544 = vld [vmem:[#allocation50 + $0x1e8] sm:$0xff]
    %v3545 = vld [vmem:[#allocation50 + $0x1f0] sm:$0xff]
    %v3546 = vld [vmem:[#allocation50 + $0x1f8] sm:$0xff]
    %v3547 = vld [vmem:[#allocation50 + $0x200] sm:$0xff]
    %v3548 = vld [vmem:[#allocation50 + $0x208] sm:$0xff]
    %v3549 = vld [vmem:[#allocation50 + $0x210] sm:$0xff]
    %v3550 = vld [vmem:[#allocation50 + $0x218] sm:$0xff]
    %v3551 = vld [vmem:[#allocation50 + $0x220] sm:$0xff]
    %v3552 = vld [vmem:[#allocation50 + $0x228] sm:$0xff]
    %v3553 = vld [vmem:[#allocation50 + $0x230] sm:$0xff]
    %v3554 = vld [vmem:[#allocation50 + $0x238] sm:$0xff]
    %v3555 = vld [vmem:[#allocation50 + $0x240] sm:$0xff]
    %v3556 = vld [vmem:[#allocation50 + $0x248] sm:$0xff]
    %v3557 = vld [vmem:[#allocation50 + $0x250] sm:$0xff]
    %v3558 = vld [vmem:[#allocation50 + $0x258] sm:$0xff]
    %v3559 = vld [vmem:[#allocation50 + $0x260] sm:$0xff]
    %v3560 = vld [vmem:[#allocation50 + $0x268] sm:$0xff]
    %v3561 = vld [vmem:[#allocation50 + $0x270] sm:$0xff]
    %v3562 = vld [vmem:[#allocation50 + $0x278] sm:$0xff]
    %v3563 = vld [vmem:[#allocation50 + $0x280] sm:$0xff]
    %v3564 = vld [vmem:[#allocation50 + $0x288] sm:$0xff]
    %v3565 = vld [vmem:[#allocation50 + $0x290] sm:$0xff]
    %v3566 = vld [vmem:[#allocation50 + $0x298] sm:$0xff]
    %v3567 = vld [vmem:[#allocation50 + $0x2a0] sm:$0xff]
    %v3568 = vld [vmem:[#allocation50 + $0x2a8] sm:$0xff]
    %v3569 = vld [vmem:[#allocation50 + $0x2b0] sm:$0xff]
    %v3570 = vld [vmem:[#allocation50 + $0x2b8] sm:$0xff]
    %v3571 = vld [vmem:[#allocation50 + $0x2c0] sm:$0xff]
    %v3572 = vld [vmem:[#allocation50 + $0x2c8] sm:$0xff]
    %v3573 = vld [vmem:[#allocation50 + $0x2d0] sm:$0xff]
    %v3574 = vld [vmem:[#allocation50 + $0x2d8] sm:$0xff]
    %v3575 = vld [vmem:[#allocation50 + $0x2e0] sm:$0xff]
    %v3576 = vld [vmem:[#allocation50 + $0x2e8] sm:$0xff]
    %v3577 = vld [vmem:[#allocation50 + $0x2f0] sm:$0xff]
    %v3578 = vld [vmem:[#allocation50 + $0x2f8] sm:$0xff]
    %v3579 = vld [vmem:[#allocation50 + $0x300] sm:$0xff]
    %v3580 = vld [vmem:[#allocation50 + $0x308] sm:$0xff]
    %v3581 = vld [vmem:[#allocation50 + $0x310] sm:$0xff]
    %v3582 = vld [vmem:[#allocation50 + $0x318] sm:$0xff]
    %v3583 = vld [vmem:[#allocation50 + $0x320] sm:$0xff]
    %v3584 = vld [vmem:[#allocation50 + $0x328] sm:$0xff]
    %v3585 = vld [vmem:[#allocation50 + $0x330] sm:$0xff]
    %v3586 = vld [vmem:[#allocation50 + $0x338] sm:$0xff]
    %v3587 = vld [vmem:[#allocation50 + $0x340] sm:$0xff]
    %v3588 = vld [vmem:[#allocation50 + $0x348] sm:$0xff]
    %v3589 = vld [vmem:[#allocation50 + $0x350] sm:$0xff]
    %v3590 = vld [vmem:[#allocation50 + $0x358] sm:$0xff]
    %v3591 = vld [vmem:[#allocation50 + $0x360] sm:$0xff]
    %v3592 = vld [vmem:[#allocation50 + $0x368] sm:$0xff]
    %v3593 = vld [vmem:[#allocation50 + $0x370] sm:$0xff]
    %v3594 = vld [vmem:[#allocation50 + $0x378] sm:$0xff]
    %v3595 = vld [vmem:[#allocation50 + $0x380] sm:$0xff]
    %v3596 = vld [vmem:[#allocation50 + $0x388] sm:$0xff]
    %v3597 = vld [vmem:[#allocation50 + $0x390] sm:$0xff]
    %v3598 = vld [vmem:[#allocation50 + $0x398] sm:$0xff]
    %v3599 = vld [vmem:[#allocation50 + $0x3a0] sm:$0xff]
    %v3600 = vld [vmem:[#allocation50 + $0x3a8] sm:$0xff]
    %v3601 = vld [vmem:[#allocation50 + $0x3b0] sm:$0xff]
    %v3602 = vld [vmem:[#allocation50 + $0x3b8] sm:$0xff]
    %v3603 = vld [vmem:[#allocation50 + $0x3c0] sm:$0xff]
    %v3604 = vld [vmem:[#allocation50 + $0x3c8] sm:$0xff]
    %v3605 = vld [vmem:[#allocation50 + $0x3d0] sm:$0xff]
    %v3606 = vld [vmem:[#allocation50 + $0x3d8] sm:$0xff]
    %v3607 = vld [vmem:[#allocation50 + $0x3e0] sm:$0xff]
    %v3608 = vld [vmem:[#allocation50 + $0x3e8] sm:$0xff]
    %v3609 = vld [vmem:[#allocation50 + $0x3f0] sm:$0xff]
    %v3610 = vld [vmem:[#allocation50 + $0x3f8] sm:$0xff]
    %v3611 = vld [vmem:[#allocation50 + $0x400] sm:$0xff]
    %v3612 = vld [vmem:[#allocation50 + $0x408] sm:$0xff]
    %v3613 = vld [vmem:[#allocation50 + $0x410] sm:$0xff]
    %v3614 = vld [vmem:[#allocation50 + $0x418] sm:$0xff]
    %v3615 = vld [vmem:[#allocation50 + $0x420] sm:$0xff]
    %v3616 = vld [vmem:[#allocation50 + $0x428] sm:$0xff]
    %v3617 = vld [vmem:[#allocation50 + $0x430] sm:$0xff]
    %v3618 = vld [vmem:[#allocation50 + $0x438] sm:$0xff]
    %v3619 = vld [vmem:[#allocation50 + $0x440] sm:$0xff]
    %v3620 = vld [vmem:[#allocation50 + $0x448] sm:$0xff]
    %v3621 = vld [vmem:[#allocation50 + $0x450] sm:$0xff]
    %v3622 = vld [vmem:[#allocation50 + $0x458] sm:$0xff]
    %v3623 = vld [vmem:[#allocation50 + $0x460] sm:$0xff]
    %v3624 = vld [vmem:[#allocation50 + $0x468] sm:$0xff]
    %v3625 = vld [vmem:[#allocation50 + $0x470] sm:$0xff]
    %v3626 = vld [vmem:[#allocation50 + $0x478] sm:$0xff]
    %v3627 = vld [vmem:[#allocation50 + $0x480] sm:$0xff]
    %v3628 = vld [vmem:[#allocation50 + $0x488] sm:$0xff]
    %v3629 = vld [vmem:[#allocation50 + $0x490] sm:$0xff]
    %v3630 = vld [vmem:[#allocation50 + $0x498] sm:$0xff]
    %v3631 = vld [vmem:[#allocation50 + $0x4a0] sm:$0xff]
    %v3632 = vld [vmem:[#allocation50 + $0x4a8] sm:$0xff]
    %v3633 = vld [vmem:[#allocation50 + $0x4b0] sm:$0xff]
    %v3634 = vld [vmem:[#allocation50 + $0x4b8] sm:$0xff]
    %v3635 = vld [vmem:[#allocation50 + $0x4c0] sm:$0xff]
    %v3636 = vld [vmem:[#allocation50 + $0x4c8] sm:$0xff]
    %v3637 = vld [vmem:[#allocation50 + $0x4d0] sm:$0xff]
    %v3638 = vld [vmem:[#allocation50 + $0x4d8] sm:$0xff]
    %v3639 = vld [vmem:[#allocation50 + $0x4e0] sm:$0xff]
    %v3640 = vld [vmem:[#allocation50 + $0x4e8] sm:$0xff]
    %v3641 = vld [vmem:[#allocation50 + $0x4f0] sm:$0xff]
    %v3642 = vld [vmem:[#allocation50 + $0x4f8] sm:$0xff]
    %v3643 = vld [vmem:[#allocation50 + $0x500] sm:$0xff]
    %v3644 = vld [vmem:[#allocation50 + $0x508] sm:$0xff]
    %v3645 = vld [vmem:[#allocation50 + $0x510] sm:$0xff]
    %v3646 = vld [vmem:[#allocation50 + $0x518] sm:$0xff]
    %v3647 = vld [vmem:[#allocation50 + $0x520] sm:$0xff]
    %v3648 = vld [vmem:[#allocation50 + $0x528] sm:$0xff]
    %v3649 = vld [vmem:[#allocation50 + $0x530] sm:$0xff]
    %v3650 = vld [vmem:[#allocation50 + $0x538] sm:$0xff]
    %v3651 = vld [vmem:[#allocation50 + $0x540] sm:$0xff]
    %v3652 = vld [vmem:[#allocation50 + $0x548] sm:$0xff]
    %v3653 = vld [vmem:[#allocation50 + $0x550] sm:$0xff]
    %v3654 = vld [vmem:[#allocation50 + $0x558] sm:$0xff]
    %v3655 = vld [vmem:[#allocation50 + $0x560] sm:$0xff]
    %v3656 = vld [vmem:[#allocation50 + $0x568] sm:$0xff]
    %v3657 = vld [vmem:[#allocation50 + $0x570] sm:$0xff]
    %v3658 = vld [vmem:[#allocation50 + $0x578] sm:$0xff]
    %v3659 = vld [vmem:[#allocation50 + $0x580] sm:$0xff]
    %v3660 = vld [vmem:[#allocation50 + $0x588] sm:$0xff]
    %v3661 = vld [vmem:[#allocation50 + $0x590] sm:$0xff]
    %v3662 = vld [vmem:[#allocation50 + $0x598] sm:$0xff]
    %v3663 = vld [vmem:[#allocation50 + $0x5a0] sm:$0xff]
    %v3664 = vld [vmem:[#allocation50 + $0x5a8] sm:$0xff]
    %v3665 = vld [vmem:[#allocation50 + $0x5b0] sm:$0xff]
    %v3666 = vld [vmem:[#allocation50 + $0x5b8] sm:$0xff]
    %v3667 = vld [vmem:[#allocation50 + $0x5c0] sm:$0xff]
    %v3668 = vld [vmem:[#allocation50 + $0x5c8] sm:$0xff]
    %v3669 = vld [vmem:[#allocation50 + $0x5d0] sm:$0xff]
    %v3670 = vld [vmem:[#allocation50 + $0x5d8] sm:$0xff]
    %v3671 = vld [vmem:[#allocation50 + $0x5e0] sm:$0xff]
    %v3672 = vld [vmem:[#allocation50 + $0x5e8] sm:$0xff]
    %v3673 = vld [vmem:[#allocation50 + $0x5f0] sm:$0xff]
    %v3674 = vld [vmem:[#allocation50 + $0x5f8] sm:$0xff]
    %v3675 = vld [vmem:[#allocation50 + $0x600] sm:$0xff]
    %v3676 = vld [vmem:[#allocation50 + $0x608] sm:$0xff]
    %v3677 = vld [vmem:[#allocation50 + $0x610] sm:$0xff]
    %v3678 = vld [vmem:[#allocation50 + $0x618] sm:$0xff]
    %v3679 = vld [vmem:[#allocation50 + $0x620] sm:$0xff]
    %v3680 = vld [vmem:[#allocation50 + $0x628] sm:$0xff]
    %v3681 = vld [vmem:[#allocation50 + $0x630] sm:$0xff]
    %v3682 = vld [vmem:[#allocation50 + $0x638] sm:$0xff]
    %v3683 = vld [vmem:[#allocation50 + $0x640] sm:$0xff]
    %v3684 = vld [vmem:[#allocation50 + $0x648] sm:$0xff]
    %v3685 = vld [vmem:[#allocation50 + $0x650] sm:$0xff]
    %v3686 = vld [vmem:[#allocation50 + $0x658] sm:$0xff]
    %v3687 = vld [vmem:[#allocation50 + $0x660] sm:$0xff]
    %v3688 = vld [vmem:[#allocation50 + $0x668] sm:$0xff]
    %v3689 = vld [vmem:[#allocation50 + $0x670] sm:$0xff]
    %v3690 = vld [vmem:[#allocation50 + $0x678] sm:$0xff]
    %v3691 = vld [vmem:[#allocation50 + $0x680] sm:$0xff]
    %v3692 = vld [vmem:[#allocation50 + $0x688] sm:$0xff]
    %v3693 = vld [vmem:[#allocation50 + $0x690] sm:$0xff]
    %v3694 = vld [vmem:[#allocation50 + $0x698] sm:$0xff]
    %v3695 = vld [vmem:[#allocation50 + $0x6a0] sm:$0xff]
    %v3696 = vld [vmem:[#allocation50 + $0x6a8] sm:$0xff]
    %v3697 = vld [vmem:[#allocation50 + $0x6b0] sm:$0xff]
    %v3698 = vld [vmem:[#allocation50 + $0x6b8] sm:$0xff]
    %v3699 = vld [vmem:[#allocation50 + $0x6c0] sm:$0xff]
    %v3700 = vld [vmem:[#allocation50 + $0x6c8] sm:$0xff]
    %v3701 = vld [vmem:[#allocation50 + $0x6d0] sm:$0xff]
    %v3702 = vld [vmem:[#allocation50 + $0x6d8] sm:$0xff]
    %v3703 = vld [vmem:[#allocation50 + $0x6e0] sm:$0xff]
    %v3704 = vld [vmem:[#allocation50 + $0x6e8] sm:$0xff]
    %v3705 = vld [vmem:[#allocation50 + $0x6f0] sm:$0xff]
    %v3706 = vld [vmem:[#allocation50 + $0x6f8] sm:$0xff]
    %v3707 = vld [vmem:[#allocation50 + $0x700] sm:$0xff]
    %v3708 = vld [vmem:[#allocation50 + $0x708] sm:$0xff]
    %v3709 = vld [vmem:[#allocation50 + $0x710] sm:$0xff]
    %v3710 = vld [vmem:[#allocation50 + $0x718] sm:$0xff]
    %v3711 = vld [vmem:[#allocation50 + $0x720] sm:$0xff]
    %v3712 = vld [vmem:[#allocation50 + $0x728] sm:$0xff]
    %v3713 = vld [vmem:[#allocation50 + $0x730] sm:$0xff]
    %v3714 = vld [vmem:[#allocation50 + $0x738] sm:$0xff]
    %v3715 = vld [vmem:[#allocation50 + $0x740] sm:$0xff]
    %v3716 = vld [vmem:[#allocation50 + $0x748] sm:$0xff]
    %v3717 = vld [vmem:[#allocation50 + $0x750] sm:$0xff]
    %v3718 = vld [vmem:[#allocation50 + $0x758] sm:$0xff]
    %v3719 = vld [vmem:[#allocation50 + $0x760] sm:$0xff]
    %v3720 = vld [vmem:[#allocation50 + $0x768] sm:$0xff]
    %v3721 = vld [vmem:[#allocation50 + $0x770] sm:$0xff]
    %v3722 = vld [vmem:[#allocation50 + $0x778] sm:$0xff]
    %v3723 = vld [vmem:[#allocation50 + $0x780] sm:$0xff]
    %v3724 = vld [vmem:[#allocation50 + $0x788] sm:$0xff]
    %v3725 = vld [vmem:[#allocation50 + $0x790] sm:$0xff]
    %v3726 = vld [vmem:[#allocation50 + $0x798] sm:$0xff]
    %v3727 = vld [vmem:[#allocation50 + $0x7a0] sm:$0xff]
    %v3728 = vld [vmem:[#allocation50 + $0x7a8] sm:$0xff]
    %v3729 = vld [vmem:[#allocation50 + $0x7b0] sm:$0xff]
    %v3730 = vld [vmem:[#allocation50 + $0x7b8] sm:$0xff]
    %v3731 = vld [vmem:[#allocation50 + $0x7c0] sm:$0xff]
    %v3732 = vld [vmem:[#allocation50 + $0x7c8] sm:$0xff]
    %v3733 = vld [vmem:[#allocation50 + $0x7d0] sm:$0xff]
    %v3734 = vld [vmem:[#allocation50 + $0x7d8] sm:$0xff]
    %v3735 = vld [vmem:[#allocation50 + $0x7e0] sm:$0xff]
    %v3736 = vld [vmem:[#allocation50 + $0x7e8] sm:$0xff]
    %v3737 = vld [vmem:[#allocation50 + $0x7f0] sm:$0xff]
    %v3738 = vld [vmem:[#allocation50 + $0x7f8] sm:$0xff]
    %v3739 = vld [vmem:[%s81] sm:$0xf]
    %v3741 = vperm.slane %v3739, 0
    %v3742 = vperm.slane %v3739, 1
    %v3743 = vperm.slane %v3739, 2
    %v3744 = vperm.slane %v3739, 3
    %3749 = vmatpush.msra.mxu0 %v3543
    %3750 = vmatpush.msra.mxu0 %v3539
    %3751 = vmatpush.msra.mxu0 %v3535
    %3752 = vmatpush.msra.mxu0 %v3531
    %3753 = vmatpush.msra.mxu0 %v3527
    %3754 = vmatpush.msra.mxu0 %v3523
    %3755 = vmatpush.msra.mxu0 %v3519
    %3756 = vmatpush.msra.mxu0 %v3515
    %3757 = vmatpush.msra.mxu0 %v3511
    %3758 = vmatpush.msra.mxu0 %v3507
    %3759 = vmatpush.msra.mxu0 %v3503
    %3760 = vmatpush.msra.mxu0 %v3499
    %3761 = vmatpush.msra.mxu0 %v3495
    %3762 = vmatpush.msra.mxu0 %v3491
    %3763 = vmatpush.msra.mxu0 %v3487
    %3764 = vmatpush.msra.mxu0 %v3483
    %3765 = vmatmul.f32.gmra.mxu0 %v3479
    %v3766 = vpop.f32.mrf.mxu0
    %v3767 = vadd.f32 %v3741, %v3766
    %3768 = vdwg.mxu0
    %3769 = vmatpush.msra.mxu0 %v3607
    %3770 = vmatpush.msra.mxu0 %v3603
    %3771 = vmatpush.msra.mxu0 %v3599
    %3772 = vmatpush.msra.mxu0 %v3595
    %3773 = vmatpush.msra.mxu0 %v3591
    %3774 = vmatpush.msra.mxu0 %v3587
    %3775 = vmatpush.msra.mxu0 %v3583
    %3776 = vmatpush.msra.mxu0 %v3579
    %3777 = vmatpush.msra.mxu0 %v3575
    %3778 = vmatpush.msra.mxu0 %v3571
    %3779 = vmatpush.msra.mxu0 %v3567
    %3780 = vmatpush.msra.mxu0 %v3563
    %3781 = vmatpush.msra.mxu0 %v3559
    %3782 = vmatpush.msra.mxu0 %v3555
    %3783 = vmatpush.msra.mxu0 %v3551
    %3784 = vmatpush.msra.mxu0 %v3547
    %3785 = vmatmul.f32.gmra.mxu0 %v3480
    %v3786 = vpop.f32.mrf.mxu0
    %v3787 = vadd.f32 %v3767, %v3786
    %3788 = vdwg.mxu0
    %3789 = vmatpush.msra.mxu0 %v3671
    %3790 = vmatpush.msra.mxu0 %v3667
    %3791 = vmatpush.msra.mxu0 %v3663
    %3792 = vmatpush.msra.mxu0 %v3659
    %3793 = vmatpush.msra.mxu0 %v3655
    %3794 = vmatpush.msra.mxu0 %v3651
    %3795 = vmatpush.msra.mxu0 %v3647
    %3796 = vmatpush.msra.mxu0 %v3643
    %3797 = vmatpush.msra.mxu0 %v3639
    %3798 = vmatpush.msra.mxu0 %v3635
    %3799 = vmatpush.msra.mxu0 %v3631
    %3800 = vmatpush.msra.mxu0 %v3627
    %3801 = vmatpush.msra.mxu0 %v3623
    %3802 = vmatpush.msra.mxu0 %v3619
    %3803 = vmatpush.msra.mxu0 %v3615
    %3804 = vmatpush.msra.mxu0 %v3611
    %3805 = vmatmul.f32.gmra.mxu0 %v3481
    %v3806 = vpop.f32.mrf.mxu0
    %v3807 = vadd.f32 %v3787, %v3806
    %3808 = vdwg.mxu0
    %3809 = vmatpush.msra.mxu0 %v3735
    %3810 = vmatpush.msra.mxu0 %v3731
    %3811 = vmatpush.msra.mxu0 %v3727
    %3812 = vmatpush.msra.mxu0 %v3723
    %3813 = vmatpush.msra.mxu0 %v3719
    %3814 = vmatpush.msra.mxu0 %v3715
    %3815 = vmatpush.msra.mxu0 %v3711
    %3816 = vmatpush.msra.mxu0 %v3707
    %3817 = vmatpush.msra.mxu0 %v3703
    %3818 = vmatpush.msra.mxu0 %v3699
    %3819 = vmatpush.msra.mxu0 %v3695
    %3820 = vmatpush.msra.mxu0 %v3691
    %3821 = vmatpush.msra.mxu0 %v3687
    %3822 = vmatpush.msra.mxu0 %v3683
    %3823 = vmatpush.msra.mxu0 %v3679
    %3824 = vmatpush.msra.mxu0 %v3675
    %3825 = vmatmul.f32.gmra.mxu0 %v3482
    %v3826 = vpop.f32.mrf.mxu0
    %v3827 = vadd.f32 %v3807, %v3826
    %3828 = vdwg.mxu0
    %3829 = vmatpush.msra.mxu0 %v3544
    %3830 = vmatpush.msra.mxu0 %v3540
    %3831 = vmatpush.msra.mxu0 %v3536
    %3832 = vmatpush.msra.mxu0 %v3532
    %3833 = vmatpush.msra.mxu0 %v3528
    %3834 = vmatpush.msra.mxu0 %v3524
    %3835 = vmatpush.msra.mxu0 %v3520
    %3836 = vmatpush.msra.mxu0 %v3516
    %3837 = vmatpush.msra.mxu0 %v3512
    %3838 = vmatpush.msra.mxu0 %v3508
    %3839 = vmatpush.msra.mxu0 %v3504
    %3840 = vmatpush.msra.mxu0 %v3500
    %3841 = vmatpush.msra.mxu0 %v3496
    %3842 = vmatpush.msra.mxu0 %v3492
    %3843 = vmatpush.msra.mxu0 %v3488
    %3844 = vmatpush.msra.mxu0 %v3484
    %3845 = vmatmul.f32.gmra.mxu0 %v3479
    %v3846 = vpop.f32.mrf.mxu0
    %v3847 = vadd.f32 %v3742, %v3846
    %3848 = vdwg.mxu0
    %3849 = vmatpush.msra.mxu0 %v3608
    %3850 = vmatpush.msra.mxu0 %v3604
    %3851 = vmatpush.msra.mxu0 %v3600
    %3852 = vmatpush.msra.mxu0 %v3596
    %3853 = vmatpush.msra.mxu0 %v3592
    %3854 = vmatpush.msra.mxu0 %v3588
    %3855 = vmatpush.msra.mxu0 %v3584
    %3856 = vmatpush.msra.mxu0 %v3580
    %3857 = vmatpush.msra.mxu0 %v3576
    %3858 = vmatpush.msra.mxu0 %v3572
    %3859 = vmatpush.msra.mxu0 %v3568
    %3860 = vmatpush.msra.mxu0 %v3564
    %3861 = vmatpush.msra.mxu0 %v3560
    %3862 = vmatpush.msra.mxu0 %v3556
    %3863 = vmatpush.msra.mxu0 %v3552
    %3864 = vmatpush.msra.mxu0 %v3548
    %3865 = vmatmul.f32.gmra.mxu0 %v3480
    %v3866 = vpop.f32.mrf.mxu0
    %v3867 = vadd.f32 %v3847, %v3866
    %3868 = vdwg.mxu0
    %3869 = vmatpush.msra.mxu0 %v3672
    %3870 = vmatpush.msra.mxu0 %v3668
    %3871 = vmatpush.msra.mxu0 %v3664
    %3872 = vmatpush.msra.mxu0 %v3660
    %3873 = vmatpush.msra.mxu0 %v3656
    %3874 = vmatpush.msra.mxu0 %v3652
    %3875 = vmatpush.msra.mxu0 %v3648
    %3876 = vmatpush.msra.mxu0 %v3644
    %3877 = vmatpush.msra.mxu0 %v3640
    %3878 = vmatpush.msra.mxu0 %v3636
    %3879 = vmatpush.msra.mxu0 %v3632
    %3880 = vmatpush.msra.mxu0 %v3628
    %3881 = vmatpush.msra.mxu0 %v3624
    %3882 = vmatpush.msra.mxu0 %v3620
    %3883 = vmatpush.msra.mxu0 %v3616
    %3884 = vmatpush.msra.mxu0 %v3612
    %3885 = vmatmul.f32.gmra.mxu0 %v3481
    %v3886 = vpop.f32.mrf.mxu0
    %v3887 = vadd.f32 %v3867, %v3886
    %3888 = vdwg.mxu0
    %3889 = vmatpush.msra.mxu0 %v3736
    %3890 = vmatpush.msra.mxu0 %v3732
    %3891 = vmatpush.msra.mxu0 %v3728
    %3892 = vmatpush.msra.mxu0 %v3724
    %3893 = vmatpush.msra.mxu0 %v3720
    %3894 = vmatpush.msra.mxu0 %v3716
    %3895 = vmatpush.msra.mxu0 %v3712
    %3896 = vmatpush.msra.mxu0 %v3708
    %3897 = vmatpush.msra.mxu0 %v3704
    %3898 = vmatpush.msra.mxu0 %v3700
    %3899 = vmatpush.msra.mxu0 %v3696
    %3900 = vmatpush.msra.mxu0 %v3692
    %3901 = vmatpush.msra.mxu0 %v3688
    %3902 = vmatpush.msra.mxu0 %v3684
    %3903 = vmatpush.msra.mxu0 %v3680
    %3904 = vmatpush.msra.mxu0 %v3676
    %3905 = vmatmul.f32.gmra.mxu0 %v3482
    %v3906 = vpop.f32.mrf.mxu0
    %v3907 = vadd.f32 %v3887, %v3906
    %3908 = vdwg.mxu0
    %3909 = vmatpush.msra.mxu0 %v3545
    %3910 = vmatpush.msra.mxu0 %v3541
    %3911 = vmatpush.msra.mxu0 %v3537
    %3912 = vmatpush.msra.mxu0 %v3533
    %3913 = vmatpush.msra.mxu0 %v3529
    %3914 = vmatpush.msra.mxu0 %v3525
    %3915 = vmatpush.msra.mxu0 %v3521
    %3916 = vmatpush.msra.mxu0 %v3517
    %3917 = vmatpush.msra.mxu0 %v3513
    %3918 = vmatpush.msra.mxu0 %v3509
    %3919 = vmatpush.msra.mxu0 %v3505
    %3920 = vmatpush.msra.mxu0 %v3501
    %3921 = vmatpush.msra.mxu0 %v3497
    %3922 = vmatpush.msra.mxu0 %v3493
    %3923 = vmatpush.msra.mxu0 %v3489
    %3924 = vmatpush.msra.mxu0 %v3485
    %3925 = vmatmul.f32.gmra.mxu0 %v3479
    %v3926 = vpop.f32.mrf.mxu0
    %v3927 = vadd.f32 %v3743, %v3926
    %3928 = vdwg.mxu0
    %3929 = vmatpush.msra.mxu0 %v3609
    %3930 = vmatpush.msra.mxu0 %v3605
    %3931 = vmatpush.msra.mxu0 %v3601
    %3932 = vmatpush.msra.mxu0 %v3597
    %3933 = vmatpush.msra.mxu0 %v3593
    %3934 = vmatpush.msra.mxu0 %v3589
    %3935 = vmatpush.msra.mxu0 %v3585
    %3936 = vmatpush.msra.mxu0 %v3581
    %3937 = vmatpush.msra.mxu0 %v3577
    %3938 = vmatpush.msra.mxu0 %v3573
    %3939 = vmatpush.msra.mxu0 %v3569
    %3940 = vmatpush.msra.mxu0 %v3565
    %3941 = vmatpush.msra.mxu0 %v3561
    %3942 = vmatpush.msra.mxu0 %v3557
    %3943 = vmatpush.msra.mxu0 %v3553
    %3944 = vmatpush.msra.mxu0 %v3549
    %3945 = vmatmul.f32.gmra.mxu0 %v3480
    %v3946 = vpop.f32.mrf.mxu0
    %v3947 = vadd.f32 %v3927, %v3946
    %3948 = vdwg.mxu0
    %3949 = vmatpush.msra.mxu0 %v3673
    %3950 = vmatpush.msra.mxu0 %v3669
    %3951 = vmatpush.msra.mxu0 %v3665
    %3952 = vmatpush.msra.mxu0 %v3661
    %3953 = vmatpush.msra.mxu0 %v3657
    %3954 = vmatpush.msra.mxu0 %v3653
    %3955 = vmatpush.msra.mxu0 %v3649
    %3956 = vmatpush.msra.mxu0 %v3645
    %3957 = vmatpush.msra.mxu0 %v3641
    %3958 = vmatpush.msra.mxu0 %v3637
    %3959 = vmatpush.msra.mxu0 %v3633
    %3960 = vmatpush.msra.mxu0 %v3629
    %3961 = vmatpush.msra.mxu0 %v3625
    %3962 = vmatpush.msra.mxu0 %v3621
    %3963 = vmatpush.msra.mxu0 %v3617
    %3964 = vmatpush.msra.mxu0 %v3613
    %3965 = vmatmul.f32.gmra.mxu0 %v3481
    %v3966 = vpop.f32.mrf.mxu0
    %v3967 = vadd.f32 %v3947, %v3966
    %3968 = vdwg.mxu0
    %3969 = vmatpush.msra.mxu0 %v3737
    %3970 = vmatpush.msra.mxu0 %v3733
    %3971 = vmatpush.msra.mxu0 %v3729
    %3972 = vmatpush.msra.mxu0 %v3725
    %3973 = vmatpush.msra.mxu0 %v3721
    %3974 = vmatpush.msra.mxu0 %v3717
    %3975 = vmatpush.msra.mxu0 %v3713
    %3976 = vmatpush.msra.mxu0 %v3709
    %3977 = vmatpush.msra.mxu0 %v3705
    %3978 = vmatpush.msra.mxu0 %v3701
    %3979 = vmatpush.msra.mxu0 %v3697
    %3980 = vmatpush.msra.mxu0 %v3693
    %3981 = vmatpush.msra.mxu0 %v3689
    %3982 = vmatpush.msra.mxu0 %v3685
    %3983 = vmatpush.msra.mxu0 %v3681
    %3984 = vmatpush.msra.mxu0 %v3677
    %3985 = vmatmul.f32.gmra.mxu0 %v3482
    %v3986 = vpop.f32.mrf.mxu0
    %v3987 = vadd.f32 %v3967, %v3986
    %3988 = vdwg.mxu0
    %3989 = vmatpush.msra.mxu0 %v3546
    %3990 = vmatpush.msra.mxu0 %v3542
    %3991 = vmatpush.msra.mxu0 %v3538
    %3992 = vmatpush.msra.mxu0 %v3534
    %3993 = vmatpush.msra.mxu0 %v3530
    %3994 = vmatpush.msra.mxu0 %v3526
    %3995 = vmatpush.msra.mxu0 %v3522
    %3996 = vmatpush.msra.mxu0 %v3518
    %3997 = vmatpush.msra.mxu0 %v3514
    %3998 = vmatpush.msra.mxu0 %v3510
    %3999 = vmatpush.msra.mxu0 %v3506
    %4000 = vmatpush.msra.mxu0 %v3502
    %4001 = vmatpush.msra.mxu0 %v3498
    %4002 = vmatpush.msra.mxu0 %v3494
    %4003 = vmatpush.msra.mxu0 %v3490
    %4004 = vmatpush.msra.mxu0 %v3486
    %4005 = vmatmul.f32.gmra.mxu0 %v3479
    %v4006 = vpop.f32.mrf.mxu0
    %v4007 = vadd.f32 %v3744, %v4006
    %4008 = vdwg.mxu0
    %4009 = vmatpush.msra.mxu0 %v3610
    %4010 = vmatpush.msra.mxu0 %v3606
    %4011 = vmatpush.msra.mxu0 %v3602
    %4012 = vmatpush.msra.mxu0 %v3598
    %4013 = vmatpush.msra.mxu0 %v3594
    %4014 = vmatpush.msra.mxu0 %v3590
    %4015 = vmatpush.msra.mxu0 %v3586
    %4016 = vmatpush.msra.mxu0 %v3582
    %4017 = vmatpush.msra.mxu0 %v3578
    %4018 = vmatpush.msra.mxu0 %v3574
    %4019 = vmatpush.msra.mxu0 %v3570
    %4020 = vmatpush.msra.mxu0 %v3566
    %4021 = vmatpush.msra.mxu0 %v3562
    %4022 = vmatpush.msra.mxu0 %v3558
    %4023 = vmatpush.msra.mxu0 %v3554
    %4024 = vmatpush.msra.mxu0 %v3550
    %4025 = vmatmul.f32.gmra.mxu0 %v3480
    %v4026 = vpop.f32.mrf.mxu0
    %v4027 = vadd.f32 %v4007, %v4026
    %4028 = vdwg.mxu0
    %4029 = vmatpush.msra.mxu0 %v3674
    %4030 = vmatpush.msra.mxu0 %v3670
    %4031 = vmatpush.msra.mxu0 %v3666
    %4032 = vmatpush.msra.mxu0 %v3662
    %4033 = vmatpush.msra.mxu0 %v3658
    %4034 = vmatpush.msra.mxu0 %v3654
    %4035 = vmatpush.msra.mxu0 %v3650
    %4036 = vmatpush.msra.mxu0 %v3646
    %4037 = vmatpush.msra.mxu0 %v3642
    %4038 = vmatpush.msra.mxu0 %v3638
    %4039 = vmatpush.msra.mxu0 %v3634
    %4040 = vmatpush.msra.mxu0 %v3630
    %4041 = vmatpush.msra.mxu0 %v3626
    %4042 = vmatpush.msra.mxu0 %v3622
    %4043 = vmatpush.msra.mxu0 %v3618
    %4044 = vmatpush.msra.mxu0 %v3614
    %4045 = vmatmul.f32.gmra.mxu0 %v3481
    %v4046 = vpop.f32.mrf.mxu0
    %v4047 = vadd.f32 %v4027, %v4046
    %4048 = vdwg.mxu0
    %4049 = vmatpush.msra.mxu0 %v3738
    %4050 = vmatpush.msra.mxu0 %v3734
    %4051 = vmatpush.msra.mxu0 %v3730
    %4052 = vmatpush.msra.mxu0 %v3726
    %4053 = vmatpush.msra.mxu0 %v3722
    %4054 = vmatpush.msra.mxu0 %v3718
    %4055 = vmatpush.msra.mxu0 %v3714
    %4056 = vmatpush.msra.mxu0 %v3710
    %4057 = vmatpush.msra.mxu0 %v3706
    %4058 = vmatpush.msra.mxu0 %v3702
    %4059 = vmatpush.msra.mxu0 %v3698
    %4060 = vmatpush.msra.mxu0 %v3694
    %4061 = vmatpush.msra.mxu0 %v3690
    %4062 = vmatpush.msra.mxu0 %v3686
    %4063 = vmatpush.msra.mxu0 %v3682
    %4064 = vmatpush.msra.mxu0 %v3678
    %4065 = vmatmul.f32.gmra.mxu0 %v3482
    %v4066 = vpop.f32.mrf.mxu0
    %v4067 = vadd.f32 %v4047, %v4066
    %4068 = vdwg.mxu0
    %v4069 = vadd.f32 %v3827, %v2889
    %v4070 = vadd.f32 %v3907, %v2890
    %v4071 = vadd.f32 %v3987, %v2891
    %v4072 = vadd.f32 %v4067, %v2892
    %v4073 = vmax.f32 %v4069, 0.0
    %v4074 = vmax.f32 %v4070, 0.0
    %v4075 = vmax.f32 %v4071, 0.0
    %v4076 = vmax.f32 %v4072, 0.0
    %v4077 = vld [vmem:[#allocation52] sm:$0xff]
    %v4078 = vld [vmem:[#allocation52 + $0x8] sm:$0xff]
    %v4079 = vld [vmem:[#allocation52 + $0x10] sm:$0xff]
    %v4080 = vld [vmem:[#allocation52 + $0x18] sm:$0xff]
    %v4081 = vld [vmem:[#allocation52 + $0x20] sm:$0xff]
    %v4082 = vld [vmem:[#allocation52 + $0x28] sm:$0xff]
    %v4083 = vld [vmem:[#allocation52 + $0x30] sm:$0xff]
    %v4084 = vld [vmem:[#allocation52 + $0x38] sm:$0xff]
    %v4085 = vld [vmem:[#allocation52 + $0x40] sm:$0xff]
    %v4086 = vld [vmem:[#allocation52 + $0x48] sm:$0xff]
    %v4087 = vld [vmem:[#allocation52 + $0x50] sm:$0xff]
    %v4088 = vld [vmem:[#allocation52 + $0x58] sm:$0xff]
    %v4089 = vld [vmem:[#allocation52 + $0x60] sm:$0xff]
    %v4090 = vld [vmem:[#allocation52 + $0x68] sm:$0xff]
    %v4091 = vld [vmem:[#allocation52 + $0x70] sm:$0xff]
    %v4092 = vld [vmem:[#allocation52 + $0x78] sm:$0xff]
    %v4093 = vld [vmem:[#allocation52 + $0x80] sm:$0xff]
    %v4094 = vld [vmem:[#allocation52 + $0x88] sm:$0xff]
    %v4095 = vld [vmem:[#allocation52 + $0x90] sm:$0xff]
    %v4096 = vld [vmem:[#allocation52 + $0x98] sm:$0xff]
    %v4097 = vld [vmem:[#allocation52 + $0xa0] sm:$0xff]
    %v4098 = vld [vmem:[#allocation52 + $0xa8] sm:$0xff]
    %v4099 = vld [vmem:[#allocation52 + $0xb0] sm:$0xff]
    %v4100 = vld [vmem:[#allocation52 + $0xb8] sm:$0xff]
    %v4101 = vld [vmem:[#allocation52 + $0xc0] sm:$0xff]
    %v4102 = vld [vmem:[#allocation52 + $0xc8] sm:$0xff]
    %v4103 = vld [vmem:[#allocation52 + $0xd0] sm:$0xff]
    %v4104 = vld [vmem:[#allocation52 + $0xd8] sm:$0xff]
    %v4105 = vld [vmem:[#allocation52 + $0xe0] sm:$0xff]
    %v4106 = vld [vmem:[#allocation52 + $0xe8] sm:$0xff]
    %v4107 = vld [vmem:[#allocation52 + $0xf0] sm:$0xff]
    %v4108 = vld [vmem:[#allocation52 + $0xf8] sm:$0xff]
    %v4109 = vld [vmem:[#allocation52 + $0x100] sm:$0xff]
    %v4110 = vld [vmem:[#allocation52 + $0x108] sm:$0xff]
    %v4111 = vld [vmem:[#allocation52 + $0x110] sm:$0xff]
    %v4112 = vld [vmem:[#allocation52 + $0x118] sm:$0xff]
    %v4113 = vld [vmem:[#allocation52 + $0x120] sm:$0xff]
    %v4114 = vld [vmem:[#allocation52 + $0x128] sm:$0xff]
    %v4115 = vld [vmem:[#allocation52 + $0x130] sm:$0xff]
    %v4116 = vld [vmem:[#allocation52 + $0x138] sm:$0xff]
    %v4117 = vld [vmem:[#allocation52 + $0x140] sm:$0xff]
    %v4118 = vld [vmem:[#allocation52 + $0x148] sm:$0xff]
    %v4119 = vld [vmem:[#allocation52 + $0x150] sm:$0xff]
    %v4120 = vld [vmem:[#allocation52 + $0x158] sm:$0xff]
    %v4121 = vld [vmem:[#allocation52 + $0x160] sm:$0xff]
    %v4122 = vld [vmem:[#allocation52 + $0x168] sm:$0xff]
    %v4123 = vld [vmem:[#allocation52 + $0x170] sm:$0xff]
    %v4124 = vld [vmem:[#allocation52 + $0x178] sm:$0xff]
    %v4125 = vld [vmem:[#allocation52 + $0x180] sm:$0xff]
    %v4126 = vld [vmem:[#allocation52 + $0x188] sm:$0xff]
    %v4127 = vld [vmem:[#allocation52 + $0x190] sm:$0xff]
    %v4128 = vld [vmem:[#allocation52 + $0x198] sm:$0xff]
    %v4129 = vld [vmem:[#allocation52 + $0x1a0] sm:$0xff]
    %v4130 = vld [vmem:[#allocation52 + $0x1a8] sm:$0xff]
    %v4131 = vld [vmem:[#allocation52 + $0x1b0] sm:$0xff]
    %v4132 = vld [vmem:[#allocation52 + $0x1b8] sm:$0xff]
    %v4133 = vld [vmem:[#allocation52 + $0x1c0] sm:$0xff]
    %v4134 = vld [vmem:[#allocation52 + $0x1c8] sm:$0xff]
    %v4135 = vld [vmem:[#allocation52 + $0x1d0] sm:$0xff]
    %v4136 = vld [vmem:[#allocation52 + $0x1d8] sm:$0xff]
    %v4137 = vld [vmem:[#allocation52 + $0x1e0] sm:$0xff]
    %v4138 = vld [vmem:[#allocation52 + $0x1e8] sm:$0xff]
    %v4139 = vld [vmem:[#allocation52 + $0x1f0] sm:$0xff]
    %v4140 = vld [vmem:[#allocation52 + $0x1f8] sm:$0xff]
    %v4141 = vld [vmem:[%s85] sm:$0x1]
    %v4143 = vperm.slane %v4141, 0
    %4145 = vmatpush.msra.mxu0 %v4092
    %4146 = vmatpush.msra.mxu0 %v4091
    %4147 = vmatpush.msra.mxu0 %v4090
    %4148 = vmatpush.msra.mxu0 %v4089
    %4149 = vmatpush.msra.mxu0 %v4088
    %4150 = vmatpush.msra.mxu0 %v4087
    %4151 = vmatpush.msra.mxu0 %v4086
    %4152 = vmatpush.msra.mxu0 %v4085
    %4153 = vmatpush.msra.mxu0 %v4084
    %4154 = vmatpush.msra.mxu0 %v4083
    %4155 = vmatpush.msra.mxu0 %v4082
    %4156 = vmatpush.msra.mxu0 %v4081
    %4157 = vmatpush.msra.mxu0 %v4080
    %4158 = vmatpush.msra.mxu0 %v4079
    %4159 = vmatpush.msra.mxu0 %v4078
    %4160 = vmatpush.msra.mxu0 %v4077
    %4161 = vmatmul.f32.gmra.mxu0 %v4073
    %v4162 = vpop.f32.mrf.mxu0
    %v4163 = vadd.f32 %v4143, %v4162
    %4164 = vdwg.mxu0
    %4165 = vmatpush.msra.mxu0 %v4108
    %4166 = vmatpush.msra.mxu0 %v4107
    %4167 = vmatpush.msra.mxu0 %v4106
    %4168 = vmatpush.msra.mxu0 %v4105
    %4169 = vmatpush.msra.mxu0 %v4104
    %4170 = vmatpush.msra.mxu0 %v4103
    %4171 = vmatpush.msra.mxu0 %v4102
    %4172 = vmatpush.msra.mxu0 %v4101
    %4173 = vmatpush.msra.mxu0 %v4100
    %4174 = vmatpush.msra.mxu0 %v4099
    %4175 = vmatpush.msra.mxu0 %v4098
    %4176 = vmatpush.msra.mxu0 %v4097
    %4177 = vmatpush.msra.mxu0 %v4096
    %4178 = vmatpush.msra.mxu0 %v4095
    %4179 = vmatpush.msra.mxu0 %v4094
    %4180 = vmatpush.msra.mxu0 %v4093
    %4181 = vmatmul.f32.gmra.mxu0 %v4074
    %v4182 = vpop.f32.mrf.mxu0
    %v4183 = vadd.f32 %v4163, %v4182
    %4184 = vdwg.mxu0
    %4185 = vmatpush.msra.mxu0 %v4124
    %4186 = vmatpush.msra.mxu0 %v4123
    %4187 = vmatpush.msra.mxu0 %v4122
    %4188 = vmatpush.msra.mxu0 %v4121
    %4189 = vmatpush.msra.mxu0 %v4120
    %4190 = vmatpush.msra.mxu0 %v4119
    %4191 = vmatpush.msra.mxu0 %v4118
    %4192 = vmatpush.msra.mxu0 %v4117
    %4193 = vmatpush.msra.mxu0 %v4116
    %4194 = vmatpush.msra.mxu0 %v4115
    %4195 = vmatpush.msra.mxu0 %v4114
    %4196 = vmatpush.msra.mxu0 %v4113
    %4197 = vmatpush.msra.mxu0 %v4112
    %4198 = vmatpush.msra.mxu0 %v4111
    %4199 = vmatpush.msra.mxu0 %v4110
    %4200 = vmatpush.msra.mxu0 %v4109
    %4201 = vmatmul.f32.gmra.mxu0 %v4075
    %v4202 = vpop.f32.mrf.mxu0
    %v4203 = vadd.f32 %v4183, %v4202
    %4204 = vdwg.mxu0
    %4205 = vmatpush.msra.mxu0 %v4140
    %4206 = vmatpush.msra.mxu0 %v4139
    %4207 = vmatpush.msra.mxu0 %v4138
    %4208 = vmatpush.msra.mxu0 %v4137
    %4209 = vmatpush.msra.mxu0 %v4136
    %4210 = vmatpush.msra.mxu0 %v4135
    %4211 = vmatpush.msra.mxu0 %v4134
    %4212 = vmatpush.msra.mxu0 %v4133
    %4213 = vmatpush.msra.mxu0 %v4132
    %4214 = vmatpush.msra.mxu0 %v4131
    %4215 = vmatpush.msra.mxu0 %v4130
    %4216 = vmatpush.msra.mxu0 %v4129
    %4217 = vmatpush.msra.mxu0 %v4128
    %4218 = vmatpush.msra.mxu0 %v4127
    %4219 = vmatpush.msra.mxu0 %v4126
    %4220 = vmatpush.msra.mxu0 %v4125
    %4221 = vmatmul.f32.gmra.mxu0 %v4076
    %v4222 = vpop.f32.mrf.mxu0
    %v4223 = vadd.f32 %v4203, %v4222
    %4224 = vdwg.mxu0
    %4225 = vst [vmem:[#allocation53] sm:$0xff] %v4223
    // Predicated region
    $region306: #{tpu_custom_call.1} parent=1 // pred_check
      _
    $region307: #{tpu_custom_call.1} parent=1 // pred_check_branch
      %4227 = sbr.rel (0) target = $region309
    $region308: #{tpu_custom_call.1} parent=1 // pred_region
      %4229 = vsyncadd [#allocation4], 0
      %s4231 = sshll.u32 [#allocation53], 4
      %s4232 = int_to_ptr.vmem [resolvable:$true] %s4231
      %s4233 = sshll.u32 %s87, 4
      %s4234 = int_to_ptr.hbm [resolvable:$true] %s4233
      %4236 = dma.vmem_to_hbm [thread:$0]  %s4232, 128, %s4234, [#allocation4]
    $region309: #{tpu_custom_call.1} parent=1 // pred_fallthru
      _
    // Predicated region
    $region310: #{tpu_custom_call.1} parent=1 // pred_check
      _
    $region311: #{tpu_custom_call.1} parent=1 // pred_check_branch
      %4238 = sbr.rel (0) target = $region313
    $region312: #{tpu_custom_call.1} parent=1 // pred_region
      %4240 = dma.done [#allocation4], 128
    $region313: #{tpu_custom_call.1} parent=1 // pred_fallthru
      _
    %4241 = vsyncpa [#allocation3], 1
    %4242 = vsyncpa [#allocation6], 1
    %4243 = vsyncpa [#allocation9], 1
    %4244 = vsyncpa [#allocation12], 1
    %4245 = vsyncpa [#allocation15], 1
    %4246 = vsyncpa [#allocation18], 1
    %4247 = vsyncpa [#allocation21], 1
    %4248 = vsyncpa [#allocation24], 1
    %4249 = vsyncpa [#allocation27], 1
    %4250 = vsyncpa [#allocation30], 1
    %4251 = vsyncpa [#allocation33], 1
    %4252 = vsyncpa [#allocation36], 1
    %4253 = vsyncpa [#allocation39], 1
    %4254 = vsyncpa [#allocation42], 1
    %4255 = vsyncpa [#allocation45], 1
    %4256 = vsyncpa [#allocation48], 1
    %4257 = vsyncpa [#allocation51], 1
    %4258 = vsyncpa [#allocation4], 1

</llo_original>
